<compile_context>
chip_gen: v5e
topology: v5e:2x2
jax: 0.10.0
libtpu: 0.0.40
codegen_flags: <defaults>
</compile_context>

<pallas_src>
import jax
import jax.numpy as jnp
from jax.experimental import pallas as pl
from jax.experimental.pallas import tpu as pltpu


def _im2col_3x3(pad_ref, patch_ref, H, W, C):
    """Scatter the 9 shifted taps of a zero-padded (H+2, W+2, C) f32 scratch into
    patch_ref[:, :9*C] (bf16), giving the (H*W, 9*C) im2col matrix."""
    padded = pad_ref[...]                                       # (H+2, W+2, C) f32
    for kh in range(3):
        for kw in range(3):
            j = kh * 3 + kw
            tap = jax.lax.slice(padded, (kh, kw, 0), (kh + H, kw + W, C))
            patch_ref[:, j * C:(j + 1) * C] = (
                tap.reshape(H * W, C).astype(patch_ref.dtype))


def basic_block_kernel(x_ref, w1_ref, w2_ref, b1_ref, b2_ref, out_ref,
                       xpad_ref, midpad_ref, p1_ref, p2_ref):
    H, W, Cin = x_ref.shape[1], x_ref.shape[2], x_ref.shape[3]
    Cmid = w1_ref.shape[1]
    Cout = out_ref.shape[1]

    # Zero the padded scratches once: only the 1-pixel halo has to stay zero, and the
    # interiors are fully overwritten on every grid step (VMEM scratch persists).
    @pl.when(pl.program_id(0) == 0)
    def _():
        xpad_ref[...] = jnp.zeros_like(xpad_ref)
        midpad_ref[...] = jnp.zeros_like(midpad_ref)

    x = x_ref[0]                                                # (H, W, Cin) bf16
    # f32 scratch for the halo buffers: keeps the offset (sublane-masked) stores in
    # an unpacked dtype; MXU operands are cast to bf16 when the patches are built.
    xpad_ref[1:H + 1, 1:W + 1, :] = x.astype(jnp.float32)

    # ---- conv1 (BN1 scale folded into w1) + bias + ReLU ------------------------
    _im2col_3x3(xpad_ref, p1_ref, H, W, Cin)
    h1 = jnp.dot(p1_ref[...], w1_ref[...],
                 preferred_element_type=jnp.float32)            # (H*W, Cmid) f32
    h1 = jnp.maximum(h1 + b1_ref[...], 0.0)
    midpad_ref[1:H + 1, 1:W + 1, :] = h1.reshape(H, W, Cmid)

    # ---- conv2 (BN2 scale folded) + bias + identity residual + ReLU ------------
    _im2col_3x3(midpad_ref, p2_ref, H, W, Cmid)
    # Residual: last Cin patch columns are x itself; w2 has a matching identity block.
    p2_ref[:, 9 * Cmid:9 * Cmid + Cin] = x.reshape(H * W, Cin)
    # (Cout, K) x (H*W, K) contracting K  ->  (Cout, H*W): lane-dense NCHW-flat output.
    h2 = jax.lax.dot_general(w2_ref[...], p2_ref[...],
                             (((1,), (1,)), ((), ())),
                             preferred_element_type=jnp.float32)
    out = jnp.maximum(h2 + b2_ref[...], 0.0)
    out_ref[0] = out.astype(out_ref.dtype)


def _fold_bn(gamma, beta, mean, var, eps=1e-5):
    scale = gamma / jnp.sqrt(var + eps)
    bias = beta - mean * scale
    return scale, bias


def _prepare_params(params):
    """Fold BN scale into conv weights (bias stays a separate f32 add), reshape to the
    im2col K-major layout, cast to bf16, and append the residual identity block to w2."""
    w1, w2 = params["w1"], params["w2"]
    Cin, Cmid = w1.shape[2], w1.shape[3]
    Cout = w2.shape[3]
    s1, b1 = _fold_bn(params["gamma1"], params["beta1"], params["mean1"], params["var1"])
    s2, b2 = _fold_bn(params["gamma2"], params["beta2"], params["mean2"], params["var2"])
    w1f = (w1 * s1).reshape(9 * Cin, Cmid).astype(jnp.bfloat16)         # (9*Cin, Cmid)
    w2f = (w2 * s2).reshape(9 * Cmid, Cout).astype(jnp.bfloat16)        # (9*Cmid, Cout)
    w2aug = jnp.concatenate(
        [w2f.T, jnp.eye(Cout, Cin, dtype=jnp.bfloat16)], axis=1)        # (Cout, 9*Cmid+Cin)
    b1 = b1.reshape(1, Cmid).astype(jnp.float32)
    b2 = b2.reshape(Cout, 1).astype(jnp.float32)
    return w1f, w2aug, b1, b2


def basic_block_forward(x_nchw, params):
    """BasicBlock forward. x_nchw: (N, Cin, H, W) float32. Returns (N, Cout, H, W)."""
    N, Cin, H, W = x_nchw.shape
    w1f, w2aug, b1, b2 = _prepare_params(params)
    Cmid = w1f.shape[1]
    Cout = w2aug.shape[0]
    assert Cin == Cout, "identity residual path requires Cin == Cout (stride=1)"

    # bf16 activations at the kernel boundary; f32 accumulation/epilogue in-kernel.
    x_nhwc = jnp.transpose(x_nchw.astype(jnp.bfloat16), (0, 2, 3, 1))   # (N,H,W,Cin)

    kcols = 9 * Cmid + Cin
    flops = 2 * N * H * W * (9 * Cin * Cmid + kcols * Cout)
    bytes_accessed = (x_nhwc.size * 2 + w1f.size * 2 + w2aug.size * 2
                      + b1.size * 4 + b2.size * 4 + N * Cout * H * W * 4)

    out = pl.pallas_call(
        basic_block_kernel,
        out_shape=jax.ShapeDtypeStruct((N, Cout, H * W), jnp.float32),
        grid=(N,),
        in_specs=[
            pl.BlockSpec((1, H, W, Cin), lambda n: (n, 0, 0, 0)),       # x tile
            pl.BlockSpec((9 * Cin, Cmid), lambda n: (0, 0)),            # w1 (resident)
            pl.BlockSpec((Cout, kcols), lambda n: (0, 0)),              # w2+identity
            pl.BlockSpec((1, Cmid), lambda n: (0, 0)),                  # bias1
            pl.BlockSpec((Cout, 1), lambda n: (0, 0)),                  # bias2
        ],
        out_specs=pl.BlockSpec((1, Cout, H * W), lambda n: (n, 0, 0)),  # lane-dense
        scratch_shapes=[
            pltpu.VMEM((H + 2, W + 2, Cin), jnp.float32),    # zero-padded x
            pltpu.VMEM((H + 2, W + 2, Cmid), jnp.float32),   # zero-padded relu(bn1(conv1))
            pltpu.VMEM((H * W, 9 * Cin), jnp.bfloat16),      # conv1 im2col patches
            pltpu.VMEM((H * W, kcols), jnp.bfloat16),        # conv2 patches + residual cols
        ],
        compiler_params=pltpu.CompilerParams(
            dimension_semantics=("parallel",),
            vmem_limit_bytes=32 * 1024 * 1024,               # safe on v5e/v6e/v7x
        ),
        cost_estimate=pl.CostEstimate(
            flops=flops, transcendentals=0, bytes_accessed=bytes_accessed),
    )(x_nhwc, w1f, w2aug, b1, b2)

    return out.reshape(N, Cout, H, W)                        # already NCHW; free reshape


def _reference_forward(x_nchw, params):
    """Pure-JAX reference (lax.conv), mirroring the kernel's bf16 casts exactly."""
    s1, b1 = _fold_bn(params["gamma1"], params["beta1"], params["mean1"], params["var1"])
    s2, b2 = _fold_bn(params["gamma2"], params["beta2"], params["mean2"], params["var2"])
    w1f = (params["w1"] * s1).astype(jnp.bfloat16).astype(jnp.float32)
    w2f = (params["w2"] * s2).astype(jnp.bfloat16).astype(jnp.float32)
    x = jnp.transpose(x_nchw, (0, 2, 3, 1)).astype(jnp.bfloat16).astype(jnp.float32)
    dn = ("NHWC", "HWIO", "NHWC")

    def conv(v, w):
        return jax.lax.conv_general_dilated(v, w, (1, 1), ((1, 1), (1, 1)),
                                            dimension_numbers=dn)

    h = jnp.maximum(conv(x, w1f) + b1, 0.0)
    h = h.astype(jnp.bfloat16).astype(jnp.float32)   # kernel feeds conv2 bf16 patches
    out = jnp.maximum(conv(h, w2f) + b2 + x, 0.0)
    return jnp.transpose(out, (0, 3, 1, 2))


if __name__ == "__main__":
    key = jax.random.PRNGKey(0)
    N, C, H, W = 2, 4, 16, 16   # inplanes = planes = 4, expansion = 1, stride = 1
    planes = 4

    ks = jax.random.split(key, 8)
    x = jax.random.normal(ks[0], (N, C, H, W), jnp.float32)
    params = {
        # HWIO weight layout (3, 3, Cin, Cout)
        "w1": jax.random.normal(ks[1], (3, 3, C, planes), jnp.float32) * 0.1,
        "w2": jax.random.normal(ks[2], (3, 3, planes, planes), jnp.float32) * 0.1,
        "gamma1": jax.random.uniform(ks[3], (planes,), jnp.float32, 0.5, 1.5),
        "beta1": jax.random.normal(ks[4], (planes,), jnp.float32) * 0.1,
        "mean1": jax.random.normal(ks[5], (planes,), jnp.float32) * 0.1,
        "var1": jax.random.uniform(ks[6], (planes,), jnp.float32, 0.5, 1.5),
        "gamma2": jax.random.uniform(ks[7], (planes,), jnp.float32, 0.5, 1.5),
        "beta2": jnp.zeros((planes,), jnp.float32),
        "mean2": jnp.zeros((planes,), jnp.float32),
        "var2": jnp.ones((planes,), jnp.float32),
    }

    out = jax.block_until_ready(jax.jit(basic_block_forward)(x, params))
    ref = jax.block_until_ready(_reference_forward(x, params))
    assert out.shape == (N, planes, H, W)
    assert jnp.allclose(out, ref, atol=1e-2, rtol=1e-2), \
        float(jnp.max(jnp.abs(out - ref)))
    print("KERNEL_OK")
</pallas_src>

<mosaic_0001>
module attributes {stable_mosaic.version = 11 : i64} {
  func.func @basic_block_kernel(%arg0: i32, %arg1: memref<1x16x16x4xbf16, #tpu.memory_space<vmem>>, %arg2: memref<36x4xbf16, #tpu.memory_space<vmem>>, %arg3: memref<4x40xbf16, #tpu.memory_space<vmem>>, %arg4: memref<1x4xf32, #tpu.memory_space<vmem>>, %arg5: memref<4x1xf32, #tpu.memory_space<vmem>>, %arg6: memref<1x4x256xf32, #tpu.memory_space<vmem>>, %arg7: memref<18x18x4xf32, #tpu.memory_space<vmem>>, %arg8: memref<18x18x4xf32, #tpu.memory_space<vmem>>, %arg9: memref<256x36xbf16, #tpu.memory_space<vmem>>, %arg10: memref<256x40xbf16, #tpu.memory_space<vmem>>) attributes {dimension_semantics = [#tpu.dimension_semantics<parallel>], iteration_bounds = array<i64: 2>, scalar_prefetch = 0 : i64, scratch_operands = 4 : i64, tpu.core_type = #tpu.core_type<tc>, window_params = [{transform_indices = @transform_0, window_bounds = array<i64: 1, 16, 16, 4>}, {pipeline_mode = #tpu.pipeline_mode<synchronous>, transform_indices = @transform_1, window_bounds = array<i64: 36, 4>}, {pipeline_mode = #tpu.pipeline_mode<synchronous>, transform_indices = @transform_2, window_bounds = array<i64: 4, 40>}, {pipeline_mode = #tpu.pipeline_mode<synchronous>, transform_indices = @transform_3, window_bounds = array<i64: 1, 4>}, {pipeline_mode = #tpu.pipeline_mode<synchronous>, transform_indices = @transform_4, window_bounds = array<i64: 4, 1>}, {transform_indices = @transform_5, window_bounds = array<i64: 1, 4, 256>}]} {
    %c0_i32 = arith.constant 0 : i32
    %0 = arith.cmpi eq, %arg0, %c0_i32 : i32
    %1 = arith.extui %0 : i1 to i32
    %c0_i32_0 = arith.constant 0 : i32
    %2 = arith.cmpi ne, %1, %c0_i32_0 : i32
    scf.if %2 {
      %cst_62 = arith.constant 0.000000e+00 : f32
      %104 = vector.broadcast %cst_62 : f32 to vector<18x18x4xf32>
      %c0_63 = arith.constant 0 : index
      %c0_64 = arith.constant 0 : index
      %c0_65 = arith.constant 0 : index
      %105 = vector.load %arg7[%c0_63, %c0_64, %c0_65] : memref<18x18x4xf32, #tpu.memory_space<vmem>>, vector<18x18x4xf32>
      tpu.vector_store %arg7[%c0_63, %c0_64, %c0_65], %104 {strides = array<i32>} : memref<18x18x4xf32, #tpu.memory_space<vmem>>, vector<18x18x4xf32>,
      %cst_66 = arith.constant 0.000000e+00 : f32
      %106 = vector.broadcast %cst_66 : f32 to vector<18x18x4xf32>
      %c0_67 = arith.constant 0 : index
      %c0_68 = arith.constant 0 : index
      %c0_69 = arith.constant 0 : index
      %107 = vector.load %arg8[%c0_67, %c0_68, %c0_69] : memref<18x18x4xf32, #tpu.memory_space<vmem>>, vector<18x18x4xf32>
      tpu.vector_store %arg8[%c0_67, %c0_68, %c0_69], %106 {strides = array<i32>} : memref<18x18x4xf32, #tpu.memory_space<vmem>>, vector<18x18x4xf32>,
    } else {
    }
    %c0 = arith.constant 0 : index
    %c0_1 = arith.constant 0 : index
    %c0_2 = arith.constant 0 : index
    %c0_3 = arith.constant 0 : index
    %3 = vector.load %arg1[%c0, %c0_1, %c0_2, %c0_3] : memref<1x16x16x4xbf16, #tpu.memory_space<vmem>>, vector<1x16x16x4xbf16>
    %4 = vector.shape_cast %3 : vector<1x16x16x4xbf16> to vector<16x16x4xbf16>
    %5 = arith.extf %4 : vector<16x16x4xbf16> to vector<16x16x4xf32>
    %c1 = arith.constant 1 : index
    %c1_4 = arith.constant 1 : index
    %c0_5 = arith.constant 0 : index
    %6 = vector.load %arg7[%c1, %c1_4, %c0_5] : memref<18x18x4xf32, #tpu.memory_space<vmem>>, vector<16x16x4xf32>
    tpu.vector_store %arg7[%c1, %c1_4, %c0_5], %5 {strides = array<i32>} : memref<18x18x4xf32, #tpu.memory_space<vmem>>, vector<16x16x4xf32>,
    %c0_6 = arith.constant 0 : index
    %c0_7 = arith.constant 0 : index
    %c0_8 = arith.constant 0 : index
    %7 = vector.load %arg7[%c0_6, %c0_7, %c0_8] : memref<18x18x4xf32, #tpu.memory_space<vmem>>, vector<18x18x4xf32>
    %8 = vector.extract_strided_slice %7 {offsets = [0, 0, 0], sizes = [16, 16, 4], strides = [1, 1, 1]} : vector<18x18x4xf32> to vector<16x16x4xf32>
    %9 = vector.shape_cast %8 : vector<16x16x4xf32> to vector<256x4xf32>
    %10 = arith.truncf %9 : vector<256x4xf32> to vector<256x4xbf16>
    %c0_9 = arith.constant 0 : index
    %c0_10 = arith.constant 0 : index
    %11 = vector.load %arg9[%c0_9, %c0_10] : memref<256x36xbf16, #tpu.memory_space<vmem>>, vector<256x4xbf16>
    tpu.vector_store %arg9[%c0_9, %c0_10], %10 {strides = array<i32>} : memref<256x36xbf16, #tpu.memory_space<vmem>>, vector<256x4xbf16>,
    %12 = vector.extract_strided_slice %7 {offsets = [0, 1, 0], sizes = [16, 16, 4], strides = [1, 1, 1]} : vector<18x18x4xf32> to vector<16x16x4xf32>
    %13 = vector.shape_cast %12 : vector<16x16x4xf32> to vector<256x4xf32>
    %14 = arith.truncf %13 : vector<256x4xf32> to vector<256x4xbf16>
    %c0_11 = arith.constant 0 : index
    %c4 = arith.constant 4 : index
    %15 = vector.load %arg9[%c0_11, %c4] : memref<256x36xbf16, #tpu.memory_space<vmem>>, vector<256x4xbf16>
    tpu.vector_store %arg9[%c0_11, %c4], %14 {strides = array<i32>} : memref<256x36xbf16, #tpu.memory_space<vmem>>, vector<256x4xbf16>,
    %16 = vector.extract_strided_slice %7 {offsets = [0, 2, 0], sizes = [16, 16, 4], strides = [1, 1, 1]} : vector<18x18x4xf32> to vector<16x16x4xf32>
    %17 = vector.shape_cast %16 : vector<16x16x4xf32> to vector<256x4xf32>
    %18 = arith.truncf %17 : vector<256x4xf32> to vector<256x4xbf16>
    %c0_12 = arith.constant 0 : index
    %c8 = arith.constant 8 : index
    %19 = vector.load %arg9[%c0_12, %c8] : memref<256x36xbf16, #tpu.memory_space<vmem>>, vector<256x4xbf16>
    tpu.vector_store %arg9[%c0_12, %c8], %18 {strides = array<i32>} : memref<256x36xbf16, #tpu.memory_space<vmem>>, vector<256x4xbf16>,
    %20 = vector.extract_strided_slice %7 {offsets = [1, 0, 0], sizes = [16, 16, 4], strides = [1, 1, 1]} : vector<18x18x4xf32> to vector<16x16x4xf32>
    %21 = vector.shape_cast %20 : vector<16x16x4xf32> to vector<256x4xf32>
    %22 = arith.truncf %21 : vector<256x4xf32> to vector<256x4xbf16>
    %c0_13 = arith.constant 0 : index
    %c12 = arith.constant 12 : index
    %23 = vector.load %arg9[%c0_13, %c12] : memref<256x36xbf16, #tpu.memory_space<vmem>>, vector<256x4xbf16>
    tpu.vector_store %arg9[%c0_13, %c12], %22 {strides = array<i32>} : memref<256x36xbf16, #tpu.memory_space<vmem>>, vector<256x4xbf16>,
    %24 = vector.extract_strided_slice %7 {offsets = [1, 1, 0], sizes = [16, 16, 4], strides = [1, 1, 1]} : vector<18x18x4xf32> to vector<16x16x4xf32>
    %25 = vector.shape_cast %24 : vector<16x16x4xf32> to vector<256x4xf32>
    %26 = arith.truncf %25 : vector<256x4xf32> to vector<256x4xbf16>
    %c0_14 = arith.constant 0 : index
    %c16 = arith.constant 16 : index
    %27 = vector.load %arg9[%c0_14, %c16] : memref<256x36xbf16, #tpu.memory_space<vmem>>, vector<256x4xbf16>
    tpu.vector_store %arg9[%c0_14, %c16], %26 {strides = array<i32>} : memref<256x36xbf16, #tpu.memory_space<vmem>>, vector<256x4xbf16>,
    %28 = vector.extract_strided_slice %7 {offsets = [1, 2, 0], sizes = [16, 16, 4], strides = [1, 1, 1]} : vector<18x18x4xf32> to vector<16x16x4xf32>
    %29 = vector.shape_cast %28 : vector<16x16x4xf32> to vector<256x4xf32>
    %30 = arith.truncf %29 : vector<256x4xf32> to vector<256x4xbf16>
    %c0_15 = arith.constant 0 : index
    %c20 = arith.constant 20 : index
    %31 = vector.load %arg9[%c0_15, %c20] : memref<256x36xbf16, #tpu.memory_space<vmem>>, vector<256x4xbf16>
    tpu.vector_store %arg9[%c0_15, %c20], %30 {strides = array<i32>} : memref<256x36xbf16, #tpu.memory_space<vmem>>, vector<256x4xbf16>,
    %32 = vector.extract_strided_slice %7 {offsets = [2, 0, 0], sizes = [16, 16, 4], strides = [1, 1, 1]} : vector<18x18x4xf32> to vector<16x16x4xf32>
    %33 = vector.shape_cast %32 : vector<16x16x4xf32> to vector<256x4xf32>
    %34 = arith.truncf %33 : vector<256x4xf32> to vector<256x4xbf16>
    %c0_16 = arith.constant 0 : index
    %c24 = arith.constant 24 : index
    %35 = vector.load %arg9[%c0_16, %c24] : memref<256x36xbf16, #tpu.memory_space<vmem>>, vector<256x4xbf16>
    tpu.vector_store %arg9[%c0_16, %c24], %34 {strides = array<i32>} : memref<256x36xbf16, #tpu.memory_space<vmem>>, vector<256x4xbf16>,
    %36 = vector.extract_strided_slice %7 {offsets = [2, 1, 0], sizes = [16, 16, 4], strides = [1, 1, 1]} : vector<18x18x4xf32> to vector<16x16x4xf32>
    %37 = vector.shape_cast %36 : vector<16x16x4xf32> to vector<256x4xf32>
    %38 = arith.truncf %37 : vector<256x4xf32> to vector<256x4xbf16>
    %c0_17 = arith.constant 0 : index
    %c28 = arith.constant 28 : index
    %39 = vector.load %arg9[%c0_17, %c28] : memref<256x36xbf16, #tpu.memory_space<vmem>>, vector<256x4xbf16>
    tpu.vector_store %arg9[%c0_17, %c28], %38 {strides = array<i32>} : memref<256x36xbf16, #tpu.memory_space<vmem>>, vector<256x4xbf16>,
    %40 = vector.extract_strided_slice %7 {offsets = [2, 2, 0], sizes = [16, 16, 4], strides = [1, 1, 1]} : vector<18x18x4xf32> to vector<16x16x4xf32>
    %41 = vector.shape_cast %40 : vector<16x16x4xf32> to vector<256x4xf32>
    %42 = arith.truncf %41 : vector<256x4xf32> to vector<256x4xbf16>
    %c0_18 = arith.constant 0 : index
    %c32 = arith.constant 32 : index
    %43 = vector.load %arg9[%c0_18, %c32] : memref<256x36xbf16, #tpu.memory_space<vmem>>, vector<256x4xbf16>
    tpu.vector_store %arg9[%c0_18, %c32], %42 {strides = array<i32>} : memref<256x36xbf16, #tpu.memory_space<vmem>>, vector<256x4xbf16>,
    %c0_19 = arith.constant 0 : index
    %c0_20 = arith.constant 0 : index
    %44 = vector.load %arg9[%c0_19, %c0_20] : memref<256x36xbf16, #tpu.memory_space<vmem>>, vector<256x36xbf16>
    %c0_21 = arith.constant 0 : index
    %c0_22 = arith.constant 0 : index
    %45 = vector.load %arg2[%c0_21, %c0_22] : memref<36x4xbf16, #tpu.memory_space<vmem>>, vector<36x4xbf16>
    %cst = arith.constant dense<0.000000e+00> : vector<256x4xf32>
    %46 = tpu.matmul %44, %45, %cst {dimension_numbers = #tpu.dot_dimension_numbers<[1], [0], [0], [1], [0, 0, 1, 1], [], []>} : vector<256x36xbf16>, vector<36x4xbf16>, vector<256x4xf32> -> vector<256x4xf32>
    %c0_23 = arith.constant 0 : index
    %c0_24 = arith.constant 0 : index
    %47 = vector.load %arg4[%c0_23, %c0_24] : memref<1x4xf32, #tpu.memory_space<vmem>>, vector<1x4xf32>
    %48 = vector.broadcast %47 : vector<1x4xf32> to vector<256x4xf32>
    %49 = arith.addf %46, %48 : vector<256x4xf32>
    %cst_25 = arith.constant 0.000000e+00 : f32
    %50 = vector.broadcast %cst_25 : f32 to vector<256x4xf32>
    %51 = arith.maximumf %49, %50 : vector<256x4xf32>
    %52 = vector.shape_cast %51 : vector<256x4xf32> to vector<16x16x4xf32>
    %c1_26 = arith.constant 1 : index
    %c1_27 = arith.constant 1 : index
    %c0_28 = arith.constant 0 : index
    %53 = vector.load %arg8[%c1_26, %c1_27, %c0_28] : memref<18x18x4xf32, #tpu.memory_space<vmem>>, vector<16x16x4xf32>
    tpu.vector_store %arg8[%c1_26, %c1_27, %c0_28], %52 {strides = array<i32>} : memref<18x18x4xf32, #tpu.memory_space<vmem>>, vector<16x16x4xf32>,
    %c0_29 = arith.constant 0 : index
    %c0_30 = arith.constant 0 : index
    %c0_31 = arith.constant 0 : index
    %54 = vector.load %arg8[%c0_29, %c0_30, %c0_31] : memref<18x18x4xf32, #tpu.memory_space<vmem>>, vector<18x18x4xf32>
    %55 = vector.extract_strided_slice %54 {offsets = [0, 0, 0], sizes = [16, 16, 4], strides = [1, 1, 1]} : vector<18x18x4xf32> to vector<16x16x4xf32>
    %56 = vector.shape_cast %55 : vector<16x16x4xf32> to vector<256x4xf32>
    %57 = arith.truncf %56 : vector<256x4xf32> to vector<256x4xbf16>
    %c0_32 = arith.constant 0 : index
    %c0_33 = arith.constant 0 : index
    %58 = vector.load %arg10[%c0_32, %c0_33] : memref<256x40xbf16, #tpu.memory_space<vmem>>, vector<256x4xbf16>
    tpu.vector_store %arg10[%c0_32, %c0_33], %57 {strides = array<i32>} : memref<256x40xbf16, #tpu.memory_space<vmem>>, vector<256x4xbf16>,
    %59 = vector.extract_strided_slice %54 {offsets = [0, 1, 0], sizes = [16, 16, 4], strides = [1, 1, 1]} : vector<18x18x4xf32> to vector<16x16x4xf32>
    %60 = vector.shape_cast %59 : vector<16x16x4xf32> to vector<256x4xf32>
    %61 = arith.truncf %60 : vector<256x4xf32> to vector<256x4xbf16>
    %c0_34 = arith.constant 0 : index
    %c4_35 = arith.constant 4 : index
    %62 = vector.load %arg10[%c0_34, %c4_35] : memref<256x40xbf16, #tpu.memory_space<vmem>>, vector<256x4xbf16>
    tpu.vector_store %arg10[%c0_34, %c4_35], %61 {strides = array<i32>} : memref<256x40xbf16, #tpu.memory_space<vmem>>, vector<256x4xbf16>,
    %63 = vector.extract_strided_slice %54 {offsets = [0, 2, 0], sizes = [16, 16, 4], strides = [1, 1, 1]} : vector<18x18x4xf32> to vector<16x16x4xf32>
    %64 = vector.shape_cast %63 : vector<16x16x4xf32> to vector<256x4xf32>
    %65 = arith.truncf %64 : vector<256x4xf32> to vector<256x4xbf16>
    %c0_36 = arith.constant 0 : index
    %c8_37 = arith.constant 8 : index
    %66 = vector.load %arg10[%c0_36, %c8_37] : memref<256x40xbf16, #tpu.memory_space<vmem>>, vector<256x4xbf16>
    tpu.vector_store %arg10[%c0_36, %c8_37], %65 {strides = array<i32>} : memref<256x40xbf16, #tpu.memory_space<vmem>>, vector<256x4xbf16>,
    %67 = vector.extract_strided_slice %54 {offsets = [1, 0, 0], sizes = [16, 16, 4], strides = [1, 1, 1]} : vector<18x18x4xf32> to vector<16x16x4xf32>
    %68 = vector.shape_cast %67 : vector<16x16x4xf32> to vector<256x4xf32>
    %69 = arith.truncf %68 : vector<256x4xf32> to vector<256x4xbf16>
    %c0_38 = arith.constant 0 : index
    %c12_39 = arith.constant 12 : index
    %70 = vector.load %arg10[%c0_38, %c12_39] : memref<256x40xbf16, #tpu.memory_space<vmem>>, vector<256x4xbf16>
    tpu.vector_store %arg10[%c0_38, %c12_39], %69 {strides = array<i32>} : memref<256x40xbf16, #tpu.memory_space<vmem>>, vector<256x4xbf16>,
    %71 = vector.extract_strided_slice %54 {offsets = [1, 1, 0], sizes = [16, 16, 4], strides = [1, 1, 1]} : vector<18x18x4xf32> to vector<16x16x4xf32>
    %72 = vector.shape_cast %71 : vector<16x16x4xf32> to vector<256x4xf32>
    %73 = arith.truncf %72 : vector<256x4xf32> to vector<256x4xbf16>
    %c0_40 = arith.constant 0 : index
    %c16_41 = arith.constant 16 : index
    %74 = vector.load %arg10[%c0_40, %c16_41] : memref<256x40xbf16, #tpu.memory_space<vmem>>, vector<256x4xbf16>
    tpu.vector_store %arg10[%c0_40, %c16_41], %73 {strides = array<i32>} : memref<256x40xbf16, #tpu.memory_space<vmem>>, vector<256x4xbf16>,
    %75 = vector.extract_strided_slice %54 {offsets = [1, 2, 0], sizes = [16, 16, 4], strides = [1, 1, 1]} : vector<18x18x4xf32> to vector<16x16x4xf32>
    %76 = vector.shape_cast %75 : vector<16x16x4xf32> to vector<256x4xf32>
    %77 = arith.truncf %76 : vector<256x4xf32> to vector<256x4xbf16>
    %c0_42 = arith.constant 0 : index
    %c20_43 = arith.constant 20 : index
    %78 = vector.load %arg10[%c0_42, %c20_43] : memref<256x40xbf16, #tpu.memory_space<vmem>>, vector<256x4xbf16>
    tpu.vector_store %arg10[%c0_42, %c20_43], %77 {strides = array<i32>} : memref<256x40xbf16, #tpu.memory_space<vmem>>, vector<256x4xbf16>,
    %79 = vector.extract_strided_slice %54 {offsets = [2, 0, 0], sizes = [16, 16, 4], strides = [1, 1, 1]} : vector<18x18x4xf32> to vector<16x16x4xf32>
    %80 = vector.shape_cast %79 : vector<16x16x4xf32> to vector<256x4xf32>
    %81 = arith.truncf %80 : vector<256x4xf32> to vector<256x4xbf16>
    %c0_44 = arith.constant 0 : index
    %c24_45 = arith.constant 24 : index
    %82 = vector.load %arg10[%c0_44, %c24_45] : memref<256x40xbf16, #tpu.memory_space<vmem>>, vector<256x4xbf16>
    tpu.vector_store %arg10[%c0_44, %c24_45], %81 {strides = array<i32>} : memref<256x40xbf16, #tpu.memory_space<vmem>>, vector<256x4xbf16>,
    %83 = vector.extract_strided_slice %54 {offsets = [2, 1, 0], sizes = [16, 16, 4], strides = [1, 1, 1]} : vector<18x18x4xf32> to vector<16x16x4xf32>
    %84 = vector.shape_cast %83 : vector<16x16x4xf32> to vector<256x4xf32>
    %85 = arith.truncf %84 : vector<256x4xf32> to vector<256x4xbf16>
    %c0_46 = arith.constant 0 : index
    %c28_47 = arith.constant 28 : index
    %86 = vector.load %arg10[%c0_46, %c28_47] : memref<256x40xbf16, #tpu.memory_space<vmem>>, vector<256x4xbf16>
    tpu.vector_store %arg10[%c0_46, %c28_47], %85 {strides = array<i32>} : memref<256x40xbf16, #tpu.memory_space<vmem>>, vector<256x4xbf16>,
    %87 = vector.extract_strided_slice %54 {offsets = [2, 2, 0], sizes = [16, 16, 4], strides = [1, 1, 1]} : vector<18x18x4xf32> to vector<16x16x4xf32>
    %88 = vector.shape_cast %87 : vector<16x16x4xf32> to vector<256x4xf32>
    %89 = arith.truncf %88 : vector<256x4xf32> to vector<256x4xbf16>
    %c0_48 = arith.constant 0 : index
    %c32_49 = arith.constant 32 : index
    %90 = vector.load %arg10[%c0_48, %c32_49] : memref<256x40xbf16, #tpu.memory_space<vmem>>, vector<256x4xbf16>
    tpu.vector_store %arg10[%c0_48, %c32_49], %89 {strides = array<i32>} : memref<256x40xbf16, #tpu.memory_space<vmem>>, vector<256x4xbf16>,
    %91 = vector.shape_cast %4 : vector<16x16x4xbf16> to vector<256x4xbf16>
    %c0_50 = arith.constant 0 : index
    %c36 = arith.constant 36 : index
    %92 = vector.load %arg10[%c0_50, %c36] : memref<256x40xbf16, #tpu.memory_space<vmem>>, vector<256x4xbf16>
    tpu.vector_store %arg10[%c0_50, %c36], %91 {strides = array<i32>} : memref<256x40xbf16, #tpu.memory_space<vmem>>, vector<256x4xbf16>,
    %c0_51 = arith.constant 0 : index
    %c0_52 = arith.constant 0 : index
    %93 = vector.load %arg3[%c0_51, %c0_52] : memref<4x40xbf16, #tpu.memory_space<vmem>>, vector<4x40xbf16>
    %c0_53 = arith.constant 0 : index
    %c0_54 = arith.constant 0 : index
    %94 = vector.load %arg10[%c0_53, %c0_54] : memref<256x40xbf16, #tpu.memory_space<vmem>>, vector<256x40xbf16>
    %cst_55 = arith.constant dense<0.000000e+00> : vector<4x256xf32>
    %95 = tpu.matmul %93, %94, %cst_55 {dimension_numbers = #tpu.dot_dimension_numbers<[1], [1], [0], [0], [0, 0, 1, 0], [], []>} : vector<4x40xbf16>, vector<256x40xbf16>, vector<4x256xf32> -> vector<4x256xf32>
    %c0_56 = arith.constant 0 : index
    %c0_57 = arith.constant 0 : index
    %96 = vector.load %arg5[%c0_56, %c0_57] : memref<4x1xf32, #tpu.memory_space<vmem>>, vector<4x1xf32>
    %97 = vector.broadcast %96 : vector<4x1xf32> to vector<4x256xf32>
    %98 = arith.addf %95, %97 : vector<4x256xf32>
    %cst_58 = arith.constant 0.000000e+00 : f32
    %99 = vector.broadcast %cst_58 : f32 to vector<4x256xf32>
    %100 = arith.maximumf %98, %99 : vector<4x256xf32>
    %c0_59 = arith.constant 0 : index
    %c0_60 = arith.constant 0 : index
    %c0_61 = arith.constant 0 : index
    %101 = vector.load %arg6[%c0_59, %c0_60, %c0_61] : memref<1x4x256xf32, #tpu.memory_space<vmem>>, vector<1x4x256xf32>
    %102 = vector.shape_cast %101 : vector<1x4x256xf32> to vector<4x256xf32>
    %103 = vector.shape_cast %100 : vector<4x256xf32> to vector<1x4x256xf32>
    tpu.vector_store %arg6[%c0_59, %c0_60, %c0_61], %103 {strides = array<i32>} : memref<1x4x256xf32, #tpu.memory_space<vmem>>, vector<1x4x256xf32>,
    return
  }
  func.func @transform_0(%arg0: i32) -> (i32, i32, i32, i32) {
    %c0_i32 = arith.constant 0 : i32
    %c0_i32_0 = arith.constant 0 : i32
    %c0_i32_1 = arith.constant 0 : i32
    %c0_i32_2 = arith.constant 0 : i32
    return %arg0, %c0_i32, %c0_i32_0, %c0_i32_1 : i32, i32, i32, i32
  }
  func.func @transform_1(%arg0: i32) -> (i32, i32) {
    %c0_i32 = arith.constant 0 : i32
    %c0_i32_0 = arith.constant 0 : i32
    %c0_i32_1 = arith.constant 0 : i32
    return %c0_i32, %c0_i32_0 : i32, i32
  }
  func.func @transform_2(%arg0: i32) -> (i32, i32) {
    %c0_i32 = arith.constant 0 : i32
    %c0_i32_0 = arith.constant 0 : i32
    %c0_i32_1 = arith.constant 0 : i32
    return %c0_i32, %c0_i32_0 : i32, i32
  }
  func.func @transform_3(%arg0: i32) -> (i32, i32) {
    %c0_i32 = arith.constant 0 : i32
    %c0_i32_0 = arith.constant 0 : i32
    %c0_i32_1 = arith.constant 0 : i32
    return %c0_i32, %c0_i32_0 : i32, i32
  }
  func.func @transform_4(%arg0: i32) -> (i32, i32) {
    %c0_i32 = arith.constant 0 : i32
    %c0_i32_0 = arith.constant 0 : i32
    %c0_i32_1 = arith.constant 0 : i32
    return %c0_i32, %c0_i32_0 : i32, i32
  }
  func.func @transform_5(%arg0: i32) -> (i32, i32, i32) {
    %c0_i32 = arith.constant 0 : i32
    %c0_i32_0 = arith.constant 0 : i32
    %c0_i32_1 = arith.constant 0 : i32
    return %arg0, %c0_i32, %c0_i32_0 : i32, i32, i32
  }
}

</mosaic_0001>

<llo_original>
// kernel: basic_block_forward.1
$region0: #{basic_block_forward.1}
  #allocation0 [shape = 'u32[]', space=smem, size = 0x4, offset = 0x4, fixed_abs, tag = 'smem constant byte address 0x4 - core index']
  #allocation1 [shape = 'u32[72,128]{1,0:T(1,128)}', space=vmem, size = 0x9000, scoped, tag = 'internal scratch']
  #allocation2 [shape = 'f32[18,18,4]{2,1,0:T(8,128)}', space=vmem, size = 0x36000, scoped, tag = 'scratch operand']
  #allocation3 [shape = 'f32[18,18,4]{2,1,0:T(8,128)}', space=vmem, size = 0x36000, scoped, tag = 'scratch operand']
  #allocation4 [shape = 'bf16[256,36]{1,0:T(8,128)(2,1)}', space=vmem, size = 0x10000, scoped, tag = 'scratch operand']
  #allocation5 [shape = 'bf16[256,40]{1,0:T(8,128)(2,1)}', space=vmem, size = 0x10000, scoped, tag = 'scratch operand']
  %s0 = inlined_call_operand.vmem [shape: bf16[2,16,16,4], index: 0, kind: input, shape index: {}]
  %s1 = inlined_call_operand.vmem [shape: bf16[36,4], index: 1, kind: input, shape index: {}]
  %s2 = inlined_call_operand.vmem [shape: bf16[4,40], index: 2, kind: input, shape index: {}]
  %s3 = inlined_call_operand.vmem [shape: f32[1,4], index: 3, kind: input, shape index: {}]
  %s4 = inlined_call_operand.vmem [shape: f32[4,1], index: 4, kind: input, shape index: {}]
  %s5 = inlined_call_operand.vmem [shape: f32[2,4,256], index: 5, kind: output, shape index: {}]
  %s6 = sld [smem:[#allocation0]]
  $region57: #{basic_block_forward.1} parent=0
    _
  %s8 = ssub.s32 1, %s6
  %s9 = scalar_select 0, %s8, %s6
  loop: start=0, step=1, limit=4
  $region2: #{basic_block_forward.1} parent=0 // loop_pre_header
    _
  $region3: #{basic_block_forward.1} parent=0 // loop_header
    %s11 = sphi 0, %s15
    %p12 = scmp.ge.s32.totalorder %s11, 4
    %s21 = sphi 0, %s23
    %s24 = sphi 0, %s21
    %s25 = sphi 0, %s24
    %s41 = sphi 0, %s25
    %s45 = sphi 0, %s45
    %s47 = sphi 0, %s45
    %s48 = sphi 0, %s47
    %s62 = sphi 0, %s48
    %s66 = sphi 0, %s66
    %s68 = sphi 0, %s66
    %s69 = sphi 0, %s68
    %s83 = sphi 0, %s69
    %s87 = sphi 0, %s87
    %s89 = sphi 0, %s87
    %s90 = sphi 0, %s89
    %s104 = sphi 0, %s90
    %s108 = sphi 0, %s108
    %s110 = sphi 0, %s108
    %s111 = sphi 0, %s110
    %s125 = sphi 0, %s111
    %s131 = sphi 0, %s133
    %s134 = sphi 0, %s131
    %s135 = sphi 0, %s134
    %s151 = sphi 0, %s135
  $region4: #{basic_block_forward.1} parent=0 // loop_header_branch
    %14 = sbr.rel (%p12) target = $region8
  $region5: #{basic_block_forward.1} parent=0 // loop_body
    %s16 = ssub.s32 %s11, 1
    %s17 = ssub.s32 %s11, 2
    %s18 = sadd.s32 %s11, 1
    %s19 = ssub.s32 %s11, %s18
    %p20 = scmp.eq.s32.totalorder %s19, 0
    %s22 = sadd.s32 %s21, 1
    %s23 = scalar_select %p20, %s21, %s22
    %p26 = pneg %p20
    %p27 = scmp.eq.s32.totalorder %s11, 1
    %p28 = por %p26, %p27
    %p29 = scmp.ne.s32.totalorder %s21, %s24
    %p30 = scmp.eq.s32.totalorder %s11, 0
    %p31 = por %p29, %p30
    %p32 = scmp.ne.s32.totalorder %s21, %s24
    %p33 = scmp.eq.s32.totalorder %s16, 1
    %p34 = por %p32, %p33
    %p35 = scmp.ne.s32.totalorder %s24, %s25
    %p36 = scmp.eq.s32.totalorder %s16, 0
    %p37 = por %p35, %p36
    %p38 = scmp.ne.s32.totalorder %s24, %s25
    %p39 = scmp.eq.s32.totalorder %s17, 1
    %p40 = por %p38, %p39
    %p42 = scmp.ne.s32.totalorder %s25, %s41
    %p43 = scmp.eq.s32.totalorder %s17, 0
    %p44 = por %p42, %p43
    %s46 = sadd.s32 %s45, 1
    %p49 = scmp.eq.s32.totalorder %s11, 1
    %p50 = scmp.ne.s32.totalorder %s45, %s47
    %p51 = scmp.eq.s32.totalorder %s11, 0
    %p52 = por %p50, %p51
    %p53 = scmp.ne.s32.totalorder %s45, %s47
    %p54 = scmp.eq.s32.totalorder %s16, 1
    %p55 = por %p53, %p54
    %p56 = scmp.ne.s32.totalorder %s47, %s48
    %p57 = scmp.eq.s32.totalorder %s16, 0
    %p58 = por %p56, %p57
    %p59 = scmp.ne.s32.totalorder %s47, %s48
    %p60 = scmp.eq.s32.totalorder %s17, 1
    %p61 = por %p59, %p60
    %p63 = scmp.ne.s32.totalorder %s48, %s62
    %p64 = scmp.eq.s32.totalorder %s17, 0
    %p65 = por %p63, %p64
    %s67 = sadd.s32 %s66, 1
    %p70 = scmp.eq.s32.totalorder %s11, 1
    %p71 = scmp.ne.s32.totalorder %s66, %s68
    %p72 = scmp.eq.s32.totalorder %s11, 0
    %p73 = por %p71, %p72
    %p74 = scmp.ne.s32.totalorder %s66, %s68
    %p75 = scmp.eq.s32.totalorder %s16, 1
    %p76 = por %p74, %p75
    %p77 = scmp.ne.s32.totalorder %s68, %s69
    %p78 = scmp.eq.s32.totalorder %s16, 0
    %p79 = por %p77, %p78
    %p80 = scmp.ne.s32.totalorder %s68, %s69
    %p81 = scmp.eq.s32.totalorder %s17, 1
    %p82 = por %p80, %p81
    %p84 = scmp.ne.s32.totalorder %s69, %s83
    %p85 = scmp.eq.s32.totalorder %s17, 0
    %p86 = por %p84, %p85
    %s88 = sadd.s32 %s87, 1
    %p91 = scmp.eq.s32.totalorder %s11, 1
    %p92 = scmp.ne.s32.totalorder %s87, %s89
    %p93 = scmp.eq.s32.totalorder %s11, 0
    %p94 = por %p92, %p93
    %p95 = scmp.ne.s32.totalorder %s87, %s89
    %p96 = scmp.eq.s32.totalorder %s16, 1
    %p97 = por %p95, %p96
    %p98 = scmp.ne.s32.totalorder %s89, %s90
    %p99 = scmp.eq.s32.totalorder %s16, 0
    %p100 = por %p98, %p99
    %p101 = scmp.ne.s32.totalorder %s89, %s90
    %p102 = scmp.eq.s32.totalorder %s17, 1
    %p103 = por %p101, %p102
    %p105 = scmp.ne.s32.totalorder %s90, %s104
    %p106 = scmp.eq.s32.totalorder %s17, 0
    %p107 = por %p105, %p106
    %s109 = sadd.s32 %s108, 1
    %p112 = scmp.eq.s32.totalorder %s11, 1
    %p113 = scmp.ne.s32.totalorder %s108, %s110
    %p114 = scmp.eq.s32.totalorder %s11, 0
    %p115 = por %p113, %p114
    %p116 = scmp.ne.s32.totalorder %s108, %s110
    %p117 = scmp.eq.s32.totalorder %s16, 1
    %p118 = por %p116, %p117
    %p119 = scmp.ne.s32.totalorder %s110, %s111
    %p120 = scmp.eq.s32.totalorder %s16, 0
    %p121 = por %p119, %p120
    %p122 = scmp.ne.s32.totalorder %s110, %s111
    %p123 = scmp.eq.s32.totalorder %s17, 1
    %p124 = por %p122, %p123
    %p126 = scmp.ne.s32.totalorder %s111, %s125
    %p127 = scmp.eq.s32.totalorder %s17, 0
    %p128 = por %p126, %p127
    %s129 = ssub.s32 %s11, %s18
    %p130 = scmp.eq.s32.totalorder %s129, 0
    %s132 = sadd.s32 %s131, 1
    %s133 = scalar_select %p130, %s131, %s132
    %p136 = pneg %p130
    %p137 = scmp.eq.s32.totalorder %s11, 1
    %p138 = por %p136, %p137
    %p139 = scmp.ne.s32.totalorder %s131, %s134
    %p140 = scmp.eq.s32.totalorder %s11, 0
    %p141 = por %p139, %p140
    %p142 = scmp.ne.s32.totalorder %s131, %s134
    %p143 = scmp.eq.s32.totalorder %s16, 1
    %p144 = por %p142, %p143
    %p145 = scmp.ne.s32.totalorder %s134, %s135
    %p146 = scmp.eq.s32.totalorder %s16, 0
    %p147 = por %p145, %p146
    %p148 = scmp.ne.s32.totalorder %s134, %s135
    %p149 = scmp.eq.s32.totalorder %s17, 1
    %p150 = por %p148, %p149
    %p152 = scmp.ne.s32.totalorder %s135, %s151
    %p153 = scmp.eq.s32.totalorder %s17, 0
    %p154 = por %p152, %p153
    %p155 = scmp.le.s32.totalorder 1, %s11
    %p156 = scmp.lt.s32.totalorder %s11, 3
    %p157 = pnand %p155, %p156
    %p158 = pneg %p157
    // Predicated region
    $region9: #{basic_block_forward.1} parent=5 // pred_check
      _
    $region10: #{basic_block_forward.1} parent=5 // pred_check_branch
      %160 = sbr.rel (%p157) target = $region12
    $region11: #{basic_block_forward.1} parent=5 // pred_region
      %s161 = ssub.s32 %s11, 1
      // Predicated region
      $region13: #{basic_block_forward.1} parent=11 // pred_check
        %p162 = pneg %p58
      $region14: #{basic_block_forward.1} parent=11 // pred_check_branch
        %164 = sbr.rel (%p162) target = $region16
      $region15: #{basic_block_forward.1} parent=11 // pred_region
        _
      $region16: #{basic_block_forward.1} parent=11 // pred_fallthru
        _
      // Predicated region
      $region17: #{basic_block_forward.1} parent=11 // pred_check
        %p165 = pneg %p79
      $region18: #{basic_block_forward.1} parent=11 // pred_check_branch
        %167 = sbr.rel (%p165) target = $region20
      $region19: #{basic_block_forward.1} parent=11 // pred_region
        _
      $region20: #{basic_block_forward.1} parent=11 // pred_fallthru
        _
      // Predicated region
      $region21: #{basic_block_forward.1} parent=11 // pred_check
        %p168 = pneg %p100
      $region22: #{basic_block_forward.1} parent=11 // pred_check_branch
        %170 = sbr.rel (%p168) target = $region24
      $region23: #{basic_block_forward.1} parent=11 // pred_region
        _
      $region24: #{basic_block_forward.1} parent=11 // pred_fallthru
        _
      // Predicated region
      $region25: #{basic_block_forward.1} parent=11 // pred_check
        %p171 = pneg %p121
      $region26: #{basic_block_forward.1} parent=11 // pred_check_branch
        %173 = sbr.rel (%p171) target = $region28
      $region27: #{basic_block_forward.1} parent=11 // pred_region
        _
      $region28: #{basic_block_forward.1} parent=11 // pred_fallthru
        _
    $region12: #{basic_block_forward.1} parent=5 // pred_fallthru
      _
    %p174 = scmp.lt.s32.totalorder %s11, 2
    // Predicated region
    $region29: #{basic_block_forward.1} parent=5 // pred_check
      %p175 = pneg %p174
    $region30: #{basic_block_forward.1} parent=5 // pred_check_branch
      %177 = sbr.rel (%p175) target = $region32
    $region31: #{basic_block_forward.1} parent=5 // pred_region
      // Predicated region
      $region33: #{basic_block_forward.1} parent=31 // pred_check
        %p178 = pneg %p31
      $region34: #{basic_block_forward.1} parent=31 // pred_check_branch
        %180 = sbr.rel (%p178) target = $region36
      $region35: #{basic_block_forward.1} parent=31 // pred_region
        %p181 = scmp.lt.s32.totalorder %s11, 1
        %s182 = scalar_select %p181, %s11, 1
        %s183 = smul.addr %s182, 32
        %s184 = smul.addr %s183, 4
        %s185 = scalar_lea.vmem %s0, %s184
      $region36: #{basic_block_forward.1} parent=31 // pred_fallthru
        _
    $region32: #{basic_block_forward.1} parent=5 // pred_fallthru
      _
    %p186 = scmp.le.s32.totalorder 1, %s11
    %p187 = scmp.lt.s32.totalorder %s11, 3
    %p188 = pnand %p186, %p187
    %p189 = pneg %p188
    // Predicated region
    $region37: #{basic_block_forward.1} parent=5 // pred_check
      _
    $region38: #{basic_block_forward.1} parent=5 // pred_check_branch
      %191 = sbr.rel (%p188) target = $region40
    $region39: #{basic_block_forward.1} parent=5 // pred_region
      %s192 = ssub.s32 %s11, 1
      %p193 = scmp.lt.s32.totalorder %s16, 1
      %s194 = scalar_select %p193, %s16, 1
      %s195 = smul.addr %s194, 32
      %s196 = smul.addr %s195, 4
      %s197 = scalar_lea.vmem %s0, %s196
      %p198 = pneg %p37
      %p199 = pneg %p34
      %p200 = pneg %p58
      %p201 = pneg %p55
      %p202 = pneg %p79
      %p203 = pneg %p76
      %p204 = pneg %p100
      %p205 = pneg %p97
      %p206 = pneg %p121
      %p207 = pneg %p118
      %p208 = pneg %p147
      %p209 = pneg %p144
      %p210 = scmp.lt.s32.totalorder %s16, 1
      %s211 = scalar_select %p210, %s16, 1
      %s212 = smul.addr %s211, 2
      %s213 = smul.addr %s212, 4
      %s214 = scalar_lea.vmem %s5, %s213
      %p215 = scmp.lt.s32.totalorder %s16, 1
      %s216 = scalar_select %p215, %s16, 1
      %s217 = smul.addr %s216, 32
      %s218 = smul.addr %s217, 4
      %s219 = scalar_lea.vmem %s0, %s218
      %p220 = scmp.lt.s32.totalorder %s16, 1
      %s221 = scalar_select %p220, %s16, 1
      %s222 = smul.addr %s221, 2
      %s223 = smul.addr %s222, 4
      %s224 = scalar_lea.vmem %s5, %s223
      %p226 = scmp.eq.s32.totalorder %s16, 0
      // Predicated region
      $region41: #{basic_block_forward.1} parent=39 // pred_check
        %p227 = pneg %p226
      $region42: #{basic_block_forward.1} parent=39 // pred_check_branch
        %229 = sbr.rel (%p227) target = $region44
      $region43: #{basic_block_forward.1} parent=39 // pred_region
        %vm230 = vcmask 31744
        %231 = vst.msk [vmem:[#allocation2] sm:$0xff] %vm230, 0.0
        %232 = vst.msk [vmem:[#allocation2 + $0x8] sm:$0xff] %vm230, 0.0
        %vm233 = vcmask 25600
        %234 = vst.msk [vmem:[#allocation2 + $0x10] sm:$0x3] %vm233, 0.0
        %235 = vst.msk [vmem:[#allocation2 + $0x18] sm:$0xff] %vm230, 0.0
        %236 = vst.msk [vmem:[#allocation2 + $0x20] sm:$0xff] %vm230, 0.0
        %237 = vst.msk [vmem:[#allocation2 + $0x28] sm:$0x3] %vm233, 0.0
        %238 = vst.msk [vmem:[#allocation2 + $0x30] sm:$0xff] %vm230, 0.0
        %239 = vst.msk [vmem:[#allocation2 + $0x38] sm:$0xff] %vm230, 0.0
        %240 = vst.msk [vmem:[#allocation2 + $0x40] sm:$0x3] %vm233, 0.0
        %241 = vst.msk [vmem:[#allocation2 + $0x48] sm:$0xff] %vm230, 0.0
        %242 = vst.msk [vmem:[#allocation2 + $0x50] sm:$0xff] %vm230, 0.0
        %243 = vst.msk [vmem:[#allocation2 + $0x58] sm:$0x3] %vm233, 0.0
        %244 = vst.msk [vmem:[#allocation2 + $0x60] sm:$0xff] %vm230, 0.0
        %245 = vst.msk [vmem:[#allocation2 + $0x68] sm:$0xff] %vm230, 0.0
        %246 = vst.msk [vmem:[#allocation2 + $0x70] sm:$0x3] %vm233, 0.0
        %247 = vst.msk [vmem:[#allocation2 + $0x78] sm:$0xff] %vm230, 0.0
        %248 = vst.msk [vmem:[#allocation2 + $0x80] sm:$0xff] %vm230, 0.0
        %249 = vst.msk [vmem:[#allocation2 + $0x88] sm:$0x3] %vm233, 0.0
        %250 = vst.msk [vmem:[#allocation2 + $0x90] sm:$0xff] %vm230, 0.0
        %251 = vst.msk [vmem:[#allocation2 + $0x98] sm:$0xff] %vm230, 0.0
        %252 = vst.msk [vmem:[#allocation2 + $0xa0] sm:$0x3] %vm233, 0.0
        %253 = vst.msk [vmem:[#allocation2 + $0xa8] sm:$0xff] %vm230, 0.0
        %254 = vst.msk [vmem:[#allocation2 + $0xb0] sm:$0xff] %vm230, 0.0
        %255 = vst.msk [vmem:[#allocation2 + $0xb8] sm:$0x3] %vm233, 0.0
        %256 = vst.msk [vmem:[#allocation2 + $0xc0] sm:$0xff] %vm230, 0.0
        %257 = vst.msk [vmem:[#allocation2 + $0xc8] sm:$0xff] %vm230, 0.0
        %258 = vst.msk [vmem:[#allocation2 + $0xd0] sm:$0x3] %vm233, 0.0
        %259 = vst.msk [vmem:[#allocation2 + $0xd8] sm:$0xff] %vm230, 0.0
        %260 = vst.msk [vmem:[#allocation2 + $0xe0] sm:$0xff] %vm230, 0.0
        %261 = vst.msk [vmem:[#allocation2 + $0xe8] sm:$0x3] %vm233, 0.0
        %262 = vst.msk [vmem:[#allocation2 + $0xf0] sm:$0xff] %vm230, 0.0
        %263 = vst.msk [vmem:[#allocation2 + $0xf8] sm:$0xff] %vm230, 0.0
        %264 = vst.msk [vmem:[#allocation2 + $0x100] sm:$0x3] %vm233, 0.0
        %265 = vst.msk [vmem:[#allocation2 + $0x108] sm:$0xff] %vm230, 0.0
        %266 = vst.msk [vmem:[#allocation2 + $0x110] sm:$0xff] %vm230, 0.0
        %267 = vst.msk [vmem:[#allocation2 + $0x118] sm:$0x3] %vm233, 0.0
        %268 = vst.msk [vmem:[#allocation2 + $0x120] sm:$0xff] %vm230, 0.0
        %269 = vst.msk [vmem:[#allocation2 + $0x128] sm:$0xff] %vm230, 0.0
        %270 = vst.msk [vmem:[#allocation2 + $0x130] sm:$0x3] %vm233, 0.0
        %271 = vst.msk [vmem:[#allocation2 + $0x138] sm:$0xff] %vm230, 0.0
        %272 = vst.msk [vmem:[#allocation2 + $0x140] sm:$0xff] %vm230, 0.0
        %273 = vst.msk [vmem:[#allocation2 + $0x148] sm:$0x3] %vm233, 0.0
        %274 = vst.msk [vmem:[#allocation2 + $0x150] sm:$0xff] %vm230, 0.0
        %275 = vst.msk [vmem:[#allocation2 + $0x158] sm:$0xff] %vm230, 0.0
        %276 = vst.msk [vmem:[#allocation2 + $0x160] sm:$0x3] %vm233, 0.0
        %277 = vst.msk [vmem:[#allocation2 + $0x168] sm:$0xff] %vm230, 0.0
        %278 = vst.msk [vmem:[#allocation2 + $0x170] sm:$0xff] %vm230, 0.0
        %279 = vst.msk [vmem:[#allocation2 + $0x178] sm:$0x3] %vm233, 0.0
        %280 = vst.msk [vmem:[#allocation2 + $0x180] sm:$0xff] %vm230, 0.0
        %281 = vst.msk [vmem:[#allocation2 + $0x188] sm:$0xff] %vm230, 0.0
        %282 = vst.msk [vmem:[#allocation2 + $0x190] sm:$0x3] %vm233, 0.0
        %283 = vst.msk [vmem:[#allocation2 + $0x198] sm:$0xff] %vm230, 0.0
        %284 = vst.msk [vmem:[#allocation2 + $0x1a0] sm:$0xff] %vm230, 0.0
        %285 = vst.msk [vmem:[#allocation2 + $0x1a8] sm:$0x3] %vm233, 0.0
        %286 = vst.msk [vmem:[#allocation3] sm:$0xff] %vm230, 0.0
        %287 = vst.msk [vmem:[#allocation3 + $0x8] sm:$0xff] %vm230, 0.0
        %288 = vst.msk [vmem:[#allocation3 + $0x10] sm:$0x3] %vm233, 0.0
        %289 = vst.msk [vmem:[#allocation3 + $0x18] sm:$0xff] %vm230, 0.0
        %290 = vst.msk [vmem:[#allocation3 + $0x20] sm:$0xff] %vm230, 0.0
        %291 = vst.msk [vmem:[#allocation3 + $0x28] sm:$0x3] %vm233, 0.0
        %292 = vst.msk [vmem:[#allocation3 + $0x30] sm:$0xff] %vm230, 0.0
        %293 = vst.msk [vmem:[#allocation3 + $0x38] sm:$0xff] %vm230, 0.0
        %294 = vst.msk [vmem:[#allocation3 + $0x40] sm:$0x3] %vm233, 0.0
        %295 = vst.msk [vmem:[#allocation3 + $0x48] sm:$0xff] %vm230, 0.0
        %296 = vst.msk [vmem:[#allocation3 + $0x50] sm:$0xff] %vm230, 0.0
        %297 = vst.msk [vmem:[#allocation3 + $0x58] sm:$0x3] %vm233, 0.0
        %298 = vst.msk [vmem:[#allocation3 + $0x60] sm:$0xff] %vm230, 0.0
        %299 = vst.msk [vmem:[#allocation3 + $0x68] sm:$0xff] %vm230, 0.0
        %300 = vst.msk [vmem:[#allocation3 + $0x70] sm:$0x3] %vm233, 0.0
        %301 = vst.msk [vmem:[#allocation3 + $0x78] sm:$0xff] %vm230, 0.0
        %302 = vst.msk [vmem:[#allocation3 + $0x80] sm:$0xff] %vm230, 0.0
        %303 = vst.msk [vmem:[#allocation3 + $0x88] sm:$0x3] %vm233, 0.0
        %304 = vst.msk [vmem:[#allocation3 + $0x90] sm:$0xff] %vm230, 0.0
        %305 = vst.msk [vmem:[#allocation3 + $0x98] sm:$0xff] %vm230, 0.0
        %306 = vst.msk [vmem:[#allocation3 + $0xa0] sm:$0x3] %vm233, 0.0
        %307 = vst.msk [vmem:[#allocation3 + $0xa8] sm:$0xff] %vm230, 0.0
        %308 = vst.msk [vmem:[#allocation3 + $0xb0] sm:$0xff] %vm230, 0.0
        %309 = vst.msk [vmem:[#allocation3 + $0xb8] sm:$0x3] %vm233, 0.0
        %310 = vst.msk [vmem:[#allocation3 + $0xc0] sm:$0xff] %vm230, 0.0
        %311 = vst.msk [vmem:[#allocation3 + $0xc8] sm:$0xff] %vm230, 0.0
        %312 = vst.msk [vmem:[#allocation3 + $0xd0] sm:$0x3] %vm233, 0.0
        %313 = vst.msk [vmem:[#allocation3 + $0xd8] sm:$0xff] %vm230, 0.0
        %314 = vst.msk [vmem:[#allocation3 + $0xe0] sm:$0xff] %vm230, 0.0
        %315 = vst.msk [vmem:[#allocation3 + $0xe8] sm:$0x3] %vm233, 0.0
        %316 = vst.msk [vmem:[#allocation3 + $0xf0] sm:$0xff] %vm230, 0.0
        %317 = vst.msk [vmem:[#allocation3 + $0xf8] sm:$0xff] %vm230, 0.0
        %318 = vst.msk [vmem:[#allocation3 + $0x100] sm:$0x3] %vm233, 0.0
        %319 = vst.msk [vmem:[#allocation3 + $0x108] sm:$0xff] %vm230, 0.0
        %320 = vst.msk [vmem:[#allocation3 + $0x110] sm:$0xff] %vm230, 0.0
        %321 = vst.msk [vmem:[#allocation3 + $0x118] sm:$0x3] %vm233, 0.0
        %322 = vst.msk [vmem:[#allocation3 + $0x120] sm:$0xff] %vm230, 0.0
        %323 = vst.msk [vmem:[#allocation3 + $0x128] sm:$0xff] %vm230, 0.0
        %324 = vst.msk [vmem:[#allocation3 + $0x130] sm:$0x3] %vm233, 0.0
        %325 = vst.msk [vmem:[#allocation3 + $0x138] sm:$0xff] %vm230, 0.0
        %326 = vst.msk [vmem:[#allocation3 + $0x140] sm:$0xff] %vm230, 0.0
        %327 = vst.msk [vmem:[#allocation3 + $0x148] sm:$0x3] %vm233, 0.0
        %328 = vst.msk [vmem:[#allocation3 + $0x150] sm:$0xff] %vm230, 0.0
        %329 = vst.msk [vmem:[#allocation3 + $0x158] sm:$0xff] %vm230, 0.0
        %330 = vst.msk [vmem:[#allocation3 + $0x160] sm:$0x3] %vm233, 0.0
        %331 = vst.msk [vmem:[#allocation3 + $0x168] sm:$0xff] %vm230, 0.0
        %332 = vst.msk [vmem:[#allocation3 + $0x170] sm:$0xff] %vm230, 0.0
        %333 = vst.msk [vmem:[#allocation3 + $0x178] sm:$0x3] %vm233, 0.0
        %334 = vst.msk [vmem:[#allocation3 + $0x180] sm:$0xff] %vm230, 0.0
        %335 = vst.msk [vmem:[#allocation3 + $0x188] sm:$0xff] %vm230, 0.0
        %336 = vst.msk [vmem:[#allocation3 + $0x190] sm:$0x3] %vm233, 0.0
        %337 = vst.msk [vmem:[#allocation3 + $0x198] sm:$0xff] %vm230, 0.0
        %338 = vst.msk [vmem:[#allocation3 + $0x1a0] sm:$0xff] %vm230, 0.0
        %339 = vst.msk [vmem:[#allocation3 + $0x1a8] sm:$0x3] %vm233, 0.0
      $region44: #{basic_block_forward.1} parent=39 // pred_fallthru
        _
      %v340 = vld [vmem:[%s219] sm:$0xf]
      %v341 = vld [vmem:[%s219 + $0x4] sm:$0xf]
      %v342 = vld [vmem:[%s219 + $0x8] sm:$0xf]
      %v343 = vld [vmem:[%s219 + $0xc] sm:$0xf]
      %v344 = vld [vmem:[%s219 + $0x10] sm:$0xf]
      %v345 = vld [vmem:[%s219 + $0x14] sm:$0xf]
      %v346 = vld [vmem:[%s219 + $0x18] sm:$0xf]
      %v347 = vld [vmem:[%s219 + $0x1c] sm:$0xf]
      %v348 = vld [vmem:[%s219 + $0x20] sm:$0xf]
      %v349 = vld [vmem:[%s219 + $0x24] sm:$0xf]
      %v350 = vld [vmem:[%s219 + $0x28] sm:$0xf]
      %v351 = vld [vmem:[%s219 + $0x2c] sm:$0xf]
      %v352 = vld [vmem:[%s219 + $0x30] sm:$0xf]
      %v353 = vld [vmem:[%s219 + $0x34] sm:$0xf]
      %v354 = vld [vmem:[%s219 + $0x38] sm:$0xf]
      %v355 = vld [vmem:[%s219 + $0x3c] sm:$0xf]
      %v356 = vld [vmem:[%s219 + $0x40] sm:$0xf]
      %v357 = vld [vmem:[%s219 + $0x44] sm:$0xf]
      %v358 = vld [vmem:[%s219 + $0x48] sm:$0xf]
      %v359 = vld [vmem:[%s219 + $0x4c] sm:$0xf]
      %v360 = vld [vmem:[%s219 + $0x50] sm:$0xf]
      %v361 = vld [vmem:[%s219 + $0x54] sm:$0xf]
      %v362 = vld [vmem:[%s219 + $0x58] sm:$0xf]
      %v363 = vld [vmem:[%s219 + $0x5c] sm:$0xf]
      %v364 = vld [vmem:[%s219 + $0x60] sm:$0xf]
      %v365 = vld [vmem:[%s219 + $0x64] sm:$0xf]
      %v366 = vld [vmem:[%s219 + $0x68] sm:$0xf]
      %v367 = vld [vmem:[%s219 + $0x6c] sm:$0xf]
      %v368 = vld [vmem:[%s219 + $0x70] sm:$0xf]
      %v369 = vld [vmem:[%s219 + $0x74] sm:$0xf]
      %v370 = vld [vmem:[%s219 + $0x78] sm:$0xf]
      %v371 = vld [vmem:[%s219 + $0x7c] sm:$0xf]
      %v372 = vunpack.c.l.bf16 %v340
      %v373 = vunpack.c.l.bf16 %v341
      %v374 = vunpack.c.l.bf16 %v342
      %v375 = vunpack.c.l.bf16 %v343
      %v376 = vunpack.c.l.bf16 %v344
      %v377 = vunpack.c.l.bf16 %v345
      %v378 = vunpack.c.l.bf16 %v346
      %v379 = vunpack.c.l.bf16 %v347
      %v380 = vunpack.c.l.bf16 %v348
      %v381 = vunpack.c.l.bf16 %v349
      %v382 = vunpack.c.l.bf16 %v350
      %v383 = vunpack.c.l.bf16 %v351
      %v384 = vunpack.c.l.bf16 %v352
      %v385 = vunpack.c.l.bf16 %v353
      %v386 = vunpack.c.l.bf16 %v354
      %v387 = vunpack.c.l.bf16 %v355
      %v388 = vunpack.c.l.bf16 %v356
      %v389 = vunpack.c.l.bf16 %v357
      %v390 = vunpack.c.l.bf16 %v358
      %v391 = vunpack.c.l.bf16 %v359
      %v392 = vunpack.c.l.bf16 %v360
      %v393 = vunpack.c.l.bf16 %v361
      %v394 = vunpack.c.l.bf16 %v362
      %v395 = vunpack.c.l.bf16 %v363
      %v396 = vunpack.c.l.bf16 %v364
      %v397 = vunpack.c.l.bf16 %v365
      %v398 = vunpack.c.l.bf16 %v366
      %v399 = vunpack.c.l.bf16 %v367
      %v400 = vunpack.c.l.bf16 %v368
      %v401 = vunpack.c.l.bf16 %v369
      %v402 = vunpack.c.l.bf16 %v370
      %v403 = vunpack.c.l.bf16 %v371
      %s404 = scalar_lea.vmem [#allocation2], 24
      %vm405 = vcmask 31744
      %406 = vst.msk [vmem:[%s404 + $0x1] sm:$0xff] %vm405, %v372
      %407 = vst.msk [vmem:[%s404 + $0x9] sm:$0xff] %vm405, %v373
      %408 = vst.msk [vmem:[%s404 + $0x19] sm:$0xff] %vm405, %v374
      %409 = vst.msk [vmem:[%s404 + $0x21] sm:$0xff] %vm405, %v375
      %410 = vst.msk [vmem:[%s404 + $0x31] sm:$0xff] %vm405, %v376
      %411 = vst.msk [vmem:[%s404 + $0x39] sm:$0xff] %vm405, %v377
      %412 = vst.msk [vmem:[%s404 + $0x49] sm:$0xff] %vm405, %v378
      %413 = vst.msk [vmem:[%s404 + $0x51] sm:$0xff] %vm405, %v379
      %414 = vst.msk [vmem:[%s404 + $0x61] sm:$0xff] %vm405, %v380
      %415 = vst.msk [vmem:[%s404 + $0x69] sm:$0xff] %vm405, %v381
      %416 = vst.msk [vmem:[%s404 + $0x79] sm:$0xff] %vm405, %v382
      %417 = vst.msk [vmem:[%s404 + $0x81] sm:$0xff] %vm405, %v383
      %418 = vst.msk [vmem:[%s404 + $0x91] sm:$0xff] %vm405, %v384
      %419 = vst.msk [vmem:[%s404 + $0x99] sm:$0xff] %vm405, %v385
      %420 = vst.msk [vmem:[%s404 + $0xa9] sm:$0xff] %vm405, %v386
      %421 = vst.msk [vmem:[%s404 + $0xb1] sm:$0xff] %vm405, %v387
      %422 = vst.msk [vmem:[%s404 + $0xc1] sm:$0xff] %vm405, %v388
      %423 = vst.msk [vmem:[%s404 + $0xc9] sm:$0xff] %vm405, %v389
      %424 = vst.msk [vmem:[%s404 + $0xd9] sm:$0xff] %vm405, %v390
      %425 = vst.msk [vmem:[%s404 + $0xe1] sm:$0xff] %vm405, %v391
      %426 = vst.msk [vmem:[%s404 + $0xf1] sm:$0xff] %vm405, %v392
      %427 = vst.msk [vmem:[%s404 + $0xf9] sm:$0xff] %vm405, %v393
      %428 = vst.msk [vmem:[%s404 + $0x109] sm:$0xff] %vm405, %v394
      %429 = vst.msk [vmem:[%s404 + $0x111] sm:$0xff] %vm405, %v395
      %430 = vst.msk [vmem:[%s404 + $0x121] sm:$0xff] %vm405, %v396
      %431 = vst.msk [vmem:[%s404 + $0x129] sm:$0xff] %vm405, %v397
      %432 = vst.msk [vmem:[%s404 + $0x139] sm:$0xff] %vm405, %v398
      %433 = vst.msk [vmem:[%s404 + $0x141] sm:$0xff] %vm405, %v399
      %434 = vst.msk [vmem:[%s404 + $0x151] sm:$0xff] %vm405, %v400
      %435 = vst.msk [vmem:[%s404 + $0x159] sm:$0xff] %vm405, %v401
      %436 = vst.msk [vmem:[%s404 + $0x169] sm:$0xff] %vm405, %v402
      %437 = vst.msk [vmem:[%s404 + $0x171] sm:$0xff] %vm405, %v403
      %v438 = vld [vmem:[#allocation2] sm:$0xff]
      %v439 = vld [vmem:[#allocation2 + $0x8] sm:$0xff]
      %v440 = vld [vmem:[#allocation2 + $0x10] sm:$0x3]
      %v441 = vld [vmem:[#allocation2 + $0x18] sm:$0xff]
      %v442 = vld [vmem:[#allocation2 + $0x20] sm:$0xff]
      %v443 = vld [vmem:[#allocation2 + $0x28] sm:$0x3]
      %v444 = vld [vmem:[#allocation2 + $0x30] sm:$0xff]
      %v445 = vld [vmem:[#allocation2 + $0x38] sm:$0xff]
      %v446 = vld [vmem:[#allocation2 + $0x40] sm:$0x3]
      %v447 = vld [vmem:[#allocation2 + $0x48] sm:$0xff]
      %v448 = vld [vmem:[#allocation2 + $0x50] sm:$0xff]
      %v449 = vld [vmem:[#allocation2 + $0x58] sm:$0x3]
      %v450 = vld [vmem:[#allocation2 + $0x60] sm:$0xff]
      %v451 = vld [vmem:[#allocation2 + $0x68] sm:$0xff]
      %v452 = vld [vmem:[#allocation2 + $0x70] sm:$0x3]
      %v453 = vld [vmem:[#allocation2 + $0x78] sm:$0xff]
      %v454 = vld [vmem:[#allocation2 + $0x80] sm:$0xff]
      %v455 = vld [vmem:[#allocation2 + $0x88] sm:$0x3]
      %v456 = vld [vmem:[#allocation2 + $0x90] sm:$0xff]
      %v457 = vld [vmem:[#allocation2 + $0x98] sm:$0xff]
      %v458 = vld [vmem:[#allocation2 + $0xa0] sm:$0x3]
      %v459 = vld [vmem:[#allocation2 + $0xa8] sm:$0xff]
      %v460 = vld [vmem:[#allocation2 + $0xb0] sm:$0xff]
      %v461 = vld [vmem:[#allocation2 + $0xb8] sm:$0x3]
      %v462 = vld [vmem:[#allocation2 + $0xc0] sm:$0xff]
      %v463 = vld [vmem:[#allocation2 + $0xc8] sm:$0xff]
      %v464 = vld [vmem:[#allocation2 + $0xd0] sm:$0x3]
      %v465 = vld [vmem:[#allocation2 + $0xd8] sm:$0xff]
      %v466 = vld [vmem:[#allocation2 + $0xe0] sm:$0xff]
      %v467 = vld [vmem:[#allocation2 + $0xe8] sm:$0x3]
      %v468 = vld [vmem:[#allocation2 + $0xf0] sm:$0xff]
      %v469 = vld [vmem:[#allocation2 + $0xf8] sm:$0xff]
      %v470 = vld [vmem:[#allocation2 + $0x100] sm:$0x3]
      %v471 = vld [vmem:[#allocation2 + $0x108] sm:$0xff]
      %v472 = vld [vmem:[#allocation2 + $0x110] sm:$0xff]
      %v473 = vld [vmem:[#allocation2 + $0x118] sm:$0x3]
      %v474 = vld [vmem:[#allocation2 + $0x120] sm:$0xff]
      %v475 = vld [vmem:[#allocation2 + $0x128] sm:$0xff]
      %v476 = vld [vmem:[#allocation2 + $0x130] sm:$0x3]
      %v477 = vld [vmem:[#allocation2 + $0x138] sm:$0xff]
      %v478 = vld [vmem:[#allocation2 + $0x140] sm:$0xff]
      %v479 = vld [vmem:[#allocation2 + $0x148] sm:$0x3]
      %v480 = vld [vmem:[#allocation2 + $0x150] sm:$0xff]
      %v481 = vld [vmem:[#allocation2 + $0x158] sm:$0xff]
      %v482 = vld [vmem:[#allocation2 + $0x160] sm:$0x3]
      %v483 = vld [vmem:[#allocation2 + $0x168] sm:$0xff]
      %v484 = vld [vmem:[#allocation2 + $0x170] sm:$0xff]
      %v485 = vld [vmem:[#allocation2 + $0x178] sm:$0x3]
      %v486 = vld [vmem:[#allocation2 + $0x180] sm:$0xff]
      %v487 = vld [vmem:[#allocation2 + $0x188] sm:$0xff]
      %v488 = vld [vmem:[#allocation2 + $0x190] sm:$0x3]
      %v489 = vld [vmem:[#allocation2 + $0x198] sm:$0xff]
      %v490 = vld [vmem:[#allocation2 + $0x1a0] sm:$0xff]
      %v491 = vld [vmem:[#allocation2 + $0x1a8] sm:$0x3]
      %v492 = vpack.c.bf16 %v438, %v438
      %v493 = vpack.c.bf16 %v439, %v439
      %v494 = vpack.c.bf16 %v441, %v441
      %v495 = vpack.c.bf16 %v442, %v442
      %v496 = vpack.c.bf16 %v444, %v444
      %v497 = vpack.c.bf16 %v445, %v445
      %v498 = vpack.c.bf16 %v447, %v447
      %v499 = vpack.c.bf16 %v448, %v448
      %v500 = vpack.c.bf16 %v450, %v450
      %v501 = vpack.c.bf16 %v451, %v451
      %v502 = vpack.c.bf16 %v453, %v453
      %v503 = vpack.c.bf16 %v454, %v454
      %v504 = vpack.c.bf16 %v456, %v456
      %v505 = vpack.c.bf16 %v457, %v457
      %v506 = vpack.c.bf16 %v459, %v459
      %v507 = vpack.c.bf16 %v460, %v460
      %v508 = vpack.c.bf16 %v462, %v462
      %v509 = vpack.c.bf16 %v463, %v463
      %v510 = vpack.c.bf16 %v465, %v465
      %v511 = vpack.c.bf16 %v466, %v466
      %v512 = vpack.c.bf16 %v468, %v468
      %v513 = vpack.c.bf16 %v469, %v469
      %v514 = vpack.c.bf16 %v471, %v471
      %v515 = vpack.c.bf16 %v472, %v472
      %v516 = vpack.c.bf16 %v474, %v474
      %v517 = vpack.c.bf16 %v475, %v475
      %v518 = vpack.c.bf16 %v477, %v477
      %v519 = vpack.c.bf16 %v478, %v478
      %v520 = vpack.c.bf16 %v480, %v480
      %v521 = vpack.c.bf16 %v481, %v481
      %v522 = vpack.c.bf16 %v483, %v483
      %v523 = vpack.c.bf16 %v484, %v484
      %vm524 = vcmask 27648
      %525 = vst.msk [vmem:[#allocation4] sm:$0xf] %vm524, %v492
      %526 = vst.msk [vmem:[#allocation4 + $0x4] sm:$0xf] %vm524, %v493
      %527 = vst.msk [vmem:[#allocation4 + $0x8] sm:$0xf] %vm524, %v494
      %528 = vst.msk [vmem:[#allocation4 + $0xc] sm:$0xf] %vm524, %v495
      %529 = vst.msk [vmem:[#allocation4 + $0x10] sm:$0xf] %vm524, %v496
      %530 = vst.msk [vmem:[#allocation4 + $0x14] sm:$0xf] %vm524, %v497
      %531 = vst.msk [vmem:[#allocation4 + $0x18] sm:$0xf] %vm524, %v498
      %532 = vst.msk [vmem:[#allocation4 + $0x1c] sm:$0xf] %vm524, %v499
      %533 = vst.msk [vmem:[#allocation4 + $0x20] sm:$0xf] %vm524, %v500
      %534 = vst.msk [vmem:[#allocation4 + $0x24] sm:$0xf] %vm524, %v501
      %535 = vst.msk [vmem:[#allocation4 + $0x28] sm:$0xf] %vm524, %v502
      %536 = vst.msk [vmem:[#allocation4 + $0x2c] sm:$0xf] %vm524, %v503
      %537 = vst.msk [vmem:[#allocation4 + $0x30] sm:$0xf] %vm524, %v504
      %538 = vst.msk [vmem:[#allocation4 + $0x34] sm:$0xf] %vm524, %v505
      %539 = vst.msk [vmem:[#allocation4 + $0x38] sm:$0xf] %vm524, %v506
      %540 = vst.msk [vmem:[#allocation4 + $0x3c] sm:$0xf] %vm524, %v507
      %541 = vst.msk [vmem:[#allocation4 + $0x40] sm:$0xf] %vm524, %v508
      %542 = vst.msk [vmem:[#allocation4 + $0x44] sm:$0xf] %vm524, %v509
      %543 = vst.msk [vmem:[#allocation4 + $0x48] sm:$0xf] %vm524, %v510
      %544 = vst.msk [vmem:[#allocation4 + $0x4c] sm:$0xf] %vm524, %v511
      %545 = vst.msk [vmem:[#allocation4 + $0x50] sm:$0xf] %vm524, %v512
      %546 = vst.msk [vmem:[#allocation4 + $0x54] sm:$0xf] %vm524, %v513
      %547 = vst.msk [vmem:[#allocation4 + $0x58] sm:$0xf] %vm524, %v514
      %548 = vst.msk [vmem:[#allocation4 + $0x5c] sm:$0xf] %vm524, %v515
      %549 = vst.msk [vmem:[#allocation4 + $0x60] sm:$0xf] %vm524, %v516
      %550 = vst.msk [vmem:[#allocation4 + $0x64] sm:$0xf] %vm524, %v517
      %551 = vst.msk [vmem:[#allocation4 + $0x68] sm:$0xf] %vm524, %v518
      %552 = vst.msk [vmem:[#allocation4 + $0x6c] sm:$0xf] %vm524, %v519
      %553 = vst.msk [vmem:[#allocation4 + $0x70] sm:$0xf] %vm524, %v520
      %554 = vst.msk [vmem:[#allocation4 + $0x74] sm:$0xf] %vm524, %v521
      %555 = vst.msk [vmem:[#allocation4 + $0x78] sm:$0xf] %vm524, %v522
      %556 = vst.msk [vmem:[#allocation4 + $0x7c] sm:$0xf] %vm524, %v523
      %vm605 = vcmask 1046528
      %v606 = vrot.slane %v438, 1
      %v607 = vrot.slane %v439, 1
      %v608 = vsel %vm605, %v606, %v607
      %v609 = vrot.slane %v440, 1
      %v610 = vsel %vm605, %v607, %v609
      %v611 = vrot.slane %v441, 1
      %v612 = vrot.slane %v442, 1
      %v613 = vsel %vm605, %v611, %v612
      %v614 = vrot.slane %v443, 1
      %v615 = vsel %vm605, %v612, %v614
      %v616 = vrot.slane %v444, 1
      %v617 = vrot.slane %v445, 1
      %v618 = vsel %vm605, %v616, %v617
      %v619 = vrot.slane %v446, 1
      %v620 = vsel %vm605, %v617, %v619
      %v621 = vrot.slane %v447, 1
      %v622 = vrot.slane %v448, 1
      %v623 = vsel %vm605, %v621, %v622
      %v624 = vrot.slane %v449, 1
      %v625 = vsel %vm605, %v622, %v624
      %v626 = vrot.slane %v450, 1
      %v627 = vrot.slane %v451, 1
      %v628 = vsel %vm605, %v626, %v627
      %v629 = vrot.slane %v452, 1
      %v630 = vsel %vm605, %v627, %v629
      %v631 = vrot.slane %v453, 1
      %v632 = vrot.slane %v454, 1
      %v633 = vsel %vm605, %v631, %v632
      %v634 = vrot.slane %v455, 1
      %v635 = vsel %vm605, %v632, %v634
      %v636 = vrot.slane %v456, 1
      %v637 = vrot.slane %v457, 1
      %v638 = vsel %vm605, %v636, %v637
      %v639 = vrot.slane %v458, 1
      %v640 = vsel %vm605, %v637, %v639
      %v641 = vrot.slane %v459, 1
      %v642 = vrot.slane %v460, 1
      %v643 = vsel %vm605, %v641, %v642
      %v644 = vrot.slane %v461, 1
      %v645 = vsel %vm605, %v642, %v644
      %v646 = vrot.slane %v462, 1
      %v647 = vrot.slane %v463, 1
      %v648 = vsel %vm605, %v646, %v647
      %v649 = vrot.slane %v464, 1
      %v650 = vsel %vm605, %v647, %v649
      %v651 = vrot.slane %v465, 1
      %v652 = vrot.slane %v466, 1
      %v653 = vsel %vm605, %v651, %v652
      %v654 = vrot.slane %v467, 1
      %v655 = vsel %vm605, %v652, %v654
      %v656 = vrot.slane %v468, 1
      %v657 = vrot.slane %v469, 1
      %v658 = vsel %vm605, %v656, %v657
      %v659 = vrot.slane %v470, 1
      %v660 = vsel %vm605, %v657, %v659
      %v661 = vrot.slane %v471, 1
      %v662 = vrot.slane %v472, 1
      %v663 = vsel %vm605, %v661, %v662
      %v664 = vrot.slane %v473, 1
      %v665 = vsel %vm605, %v662, %v664
      %v666 = vrot.slane %v474, 1
      %v667 = vrot.slane %v475, 1
      %v668 = vsel %vm605, %v666, %v667
      %v669 = vrot.slane %v476, 1
      %v670 = vsel %vm605, %v667, %v669
      %v671 = vrot.slane %v477, 1
      %v672 = vrot.slane %v478, 1
      %v673 = vsel %vm605, %v671, %v672
      %v674 = vrot.slane %v479, 1
      %v675 = vsel %vm605, %v672, %v674
      %v676 = vrot.slane %v480, 1
      %v677 = vrot.slane %v481, 1
      %v678 = vsel %vm605, %v676, %v677
      %v679 = vrot.slane %v482, 1
      %v680 = vsel %vm605, %v677, %v679
      %v681 = vrot.slane %v483, 1
      %v682 = vrot.slane %v484, 1
      %v683 = vsel %vm605, %v681, %v682
      %v684 = vrot.slane %v485, 1
      %v685 = vsel %vm605, %v682, %v684
      %v718 = vpack.c.bf16 %v608, %v608
      %v719 = vpack.c.bf16 %v610, %v610
      %v720 = vpack.c.bf16 %v613, %v613
      %v721 = vpack.c.bf16 %v615, %v615
      %v722 = vpack.c.bf16 %v618, %v618
      %v723 = vpack.c.bf16 %v620, %v620
      %v724 = vpack.c.bf16 %v623, %v623
      %v725 = vpack.c.bf16 %v625, %v625
      %v726 = vpack.c.bf16 %v628, %v628
      %v727 = vpack.c.bf16 %v630, %v630
      %v728 = vpack.c.bf16 %v633, %v633
      %v729 = vpack.c.bf16 %v635, %v635
      %v730 = vpack.c.bf16 %v638, %v638
      %v731 = vpack.c.bf16 %v640, %v640
      %v732 = vpack.c.bf16 %v643, %v643
      %v733 = vpack.c.bf16 %v645, %v645
      %v734 = vpack.c.bf16 %v648, %v648
      %v735 = vpack.c.bf16 %v650, %v650
      %v736 = vpack.c.bf16 %v653, %v653
      %v737 = vpack.c.bf16 %v655, %v655
      %v738 = vpack.c.bf16 %v658, %v658
      %v739 = vpack.c.bf16 %v660, %v660
      %v740 = vpack.c.bf16 %v663, %v663
      %v741 = vpack.c.bf16 %v665, %v665
      %v742 = vpack.c.bf16 %v668, %v668
      %v743 = vpack.c.bf16 %v670, %v670
      %v744 = vpack.c.bf16 %v673, %v673
      %v745 = vpack.c.bf16 %v675, %v675
      %v746 = vpack.c.bf16 %v678, %v678
      %v747 = vpack.c.bf16 %v680, %v680
      %v748 = vpack.c.bf16 %v683, %v683
      %v749 = vpack.c.bf16 %v685, %v685
      %782 = vrot.lane.b32.xlu0 %v718, 4
      %v783 = vpop.permute.xlu0 %782
      %784 = vrot.lane.b32.xlu0 %v719, 4
      %v785 = vpop.permute.xlu0 %784
      %786 = vrot.lane.b32.xlu0 %v720, 4
      %v787 = vpop.permute.xlu0 %786
      %788 = vrot.lane.b32.xlu0 %v721, 4
      %v789 = vpop.permute.xlu0 %788
      %790 = vrot.lane.b32.xlu0 %v722, 4
      %v791 = vpop.permute.xlu0 %790
      %792 = vrot.lane.b32.xlu0 %v723, 4
      %v793 = vpop.permute.xlu0 %792
      %794 = vrot.lane.b32.xlu0 %v724, 4
      %v795 = vpop.permute.xlu0 %794
      %796 = vrot.lane.b32.xlu0 %v725, 4
      %v797 = vpop.permute.xlu0 %796
      %798 = vrot.lane.b32.xlu0 %v726, 4
      %v799 = vpop.permute.xlu0 %798
      %800 = vrot.lane.b32.xlu0 %v727, 4
      %v801 = vpop.permute.xlu0 %800
      %802 = vrot.lane.b32.xlu0 %v728, 4
      %v803 = vpop.permute.xlu0 %802
      %804 = vrot.lane.b32.xlu0 %v729, 4
      %v805 = vpop.permute.xlu0 %804
      %806 = vrot.lane.b32.xlu0 %v730, 4
      %v807 = vpop.permute.xlu0 %806
      %808 = vrot.lane.b32.xlu0 %v731, 4
      %v809 = vpop.permute.xlu0 %808
      %810 = vrot.lane.b32.xlu0 %v732, 4
      %v811 = vpop.permute.xlu0 %810
      %812 = vrot.lane.b32.xlu0 %v733, 4
      %v813 = vpop.permute.xlu0 %812
      %814 = vrot.lane.b32.xlu0 %v734, 4
      %v815 = vpop.permute.xlu0 %814
      %816 = vrot.lane.b32.xlu0 %v735, 4
      %v817 = vpop.permute.xlu0 %816
      %818 = vrot.lane.b32.xlu0 %v736, 4
      %v819 = vpop.permute.xlu0 %818
      %820 = vrot.lane.b32.xlu0 %v737, 4
      %v821 = vpop.permute.xlu0 %820
      %822 = vrot.lane.b32.xlu0 %v738, 4
      %v823 = vpop.permute.xlu0 %822
      %824 = vrot.lane.b32.xlu0 %v739, 4
      %v825 = vpop.permute.xlu0 %824
      %826 = vrot.lane.b32.xlu0 %v740, 4
      %v827 = vpop.permute.xlu0 %826
      %828 = vrot.lane.b32.xlu0 %v741, 4
      %v829 = vpop.permute.xlu0 %828
      %830 = vrot.lane.b32.xlu0 %v742, 4
      %v831 = vpop.permute.xlu0 %830
      %832 = vrot.lane.b32.xlu0 %v743, 4
      %v833 = vpop.permute.xlu0 %832
      %834 = vrot.lane.b32.xlu0 %v744, 4
      %v835 = vpop.permute.xlu0 %834
      %836 = vrot.lane.b32.xlu0 %v745, 4
      %v837 = vpop.permute.xlu0 %836
      %838 = vrot.lane.b32.xlu0 %v746, 4
      %v839 = vpop.permute.xlu0 %838
      %840 = vrot.lane.b32.xlu0 %v747, 4
      %v841 = vpop.permute.xlu0 %840
      %842 = vrot.lane.b32.xlu0 %v748, 4
      %v843 = vpop.permute.xlu0 %842
      %844 = vrot.lane.b32.xlu0 %v749, 4
      %v845 = vpop.permute.xlu0 %844
      %vm878 = vcmask 60448
      %879 = vst.msk [vmem:[#allocation4] sm:$0xf] %vm878, %v783
      %880 = vst.msk [vmem:[#allocation4 + $0x4] sm:$0xf] %vm878, %v785
      %881 = vst.msk [vmem:[#allocation4 + $0x8] sm:$0xf] %vm878, %v787
      %882 = vst.msk [vmem:[#allocation4 + $0xc] sm:$0xf] %vm878, %v789
      %883 = vst.msk [vmem:[#allocation4 + $0x10] sm:$0xf] %vm878, %v791
      %884 = vst.msk [vmem:[#allocation4 + $0x14] sm:$0xf] %vm878, %v793
      %885 = vst.msk [vmem:[#allocation4 + $0x18] sm:$0xf] %vm878, %v795
      %886 = vst.msk [vmem:[#allocation4 + $0x1c] sm:$0xf] %vm878, %v797
      %887 = vst.msk [vmem:[#allocation4 + $0x20] sm:$0xf] %vm878, %v799
      %888 = vst.msk [vmem:[#allocation4 + $0x24] sm:$0xf] %vm878, %v801
      %889 = vst.msk [vmem:[#allocation4 + $0x28] sm:$0xf] %vm878, %v803
      %890 = vst.msk [vmem:[#allocation4 + $0x2c] sm:$0xf] %vm878, %v805
      %891 = vst.msk [vmem:[#allocation4 + $0x30] sm:$0xf] %vm878, %v807
      %892 = vst.msk [vmem:[#allocation4 + $0x34] sm:$0xf] %vm878, %v809
      %893 = vst.msk [vmem:[#allocation4 + $0x38] sm:$0xf] %vm878, %v811
      %894 = vst.msk [vmem:[#allocation4 + $0x3c] sm:$0xf] %vm878, %v813
      %895 = vst.msk [vmem:[#allocation4 + $0x40] sm:$0xf] %vm878, %v815
      %896 = vst.msk [vmem:[#allocation4 + $0x44] sm:$0xf] %vm878, %v817
      %897 = vst.msk [vmem:[#allocation4 + $0x48] sm:$0xf] %vm878, %v819
      %898 = vst.msk [vmem:[#allocation4 + $0x4c] sm:$0xf] %vm878, %v821
      %899 = vst.msk [vmem:[#allocation4 + $0x50] sm:$0xf] %vm878, %v823
      %900 = vst.msk [vmem:[#allocation4 + $0x54] sm:$0xf] %vm878, %v825
      %901 = vst.msk [vmem:[#allocation4 + $0x58] sm:$0xf] %vm878, %v827
      %902 = vst.msk [vmem:[#allocation4 + $0x5c] sm:$0xf] %vm878, %v829
      %903 = vst.msk [vmem:[#allocation4 + $0x60] sm:$0xf] %vm878, %v831
      %904 = vst.msk [vmem:[#allocation4 + $0x64] sm:$0xf] %vm878, %v833
      %905 = vst.msk [vmem:[#allocation4 + $0x68] sm:$0xf] %vm878, %v835
      %906 = vst.msk [vmem:[#allocation4 + $0x6c] sm:$0xf] %vm878, %v837
      %907 = vst.msk [vmem:[#allocation4 + $0x70] sm:$0xf] %vm878, %v839
      %908 = vst.msk [vmem:[#allocation4 + $0x74] sm:$0xf] %vm878, %v841
      %909 = vst.msk [vmem:[#allocation4 + $0x78] sm:$0xf] %vm878, %v843
      %910 = vst.msk [vmem:[#allocation4 + $0x7c] sm:$0xf] %vm878, %v845
      %vm911 = vcmask 1045504
      %v912 = vrot.slane %v438, 2
      %v913 = vrot.slane %v439, 2
      %v914 = vsel %vm911, %v912, %v913
      %v915 = vrot.slane %v440, 2
      %v916 = vsel %vm911, %v913, %v915
      %v917 = vrot.slane %v441, 2
      %v918 = vrot.slane %v442, 2
      %v919 = vsel %vm911, %v917, %v918
      %v920 = vrot.slane %v443, 2
      %v921 = vsel %vm911, %v918, %v920
      %v922 = vrot.slane %v444, 2
      %v923 = vrot.slane %v445, 2
      %v924 = vsel %vm911, %v922, %v923
      %v925 = vrot.slane %v446, 2
      %v926 = vsel %vm911, %v923, %v925
      %v927 = vrot.slane %v447, 2
      %v928 = vrot.slane %v448, 2
      %v929 = vsel %vm911, %v927, %v928
      %v930 = vrot.slane %v449, 2
      %v931 = vsel %vm911, %v928, %v930
      %v932 = vrot.slane %v450, 2
      %v933 = vrot.slane %v451, 2
      %v934 = vsel %vm911, %v932, %v933
      %v935 = vrot.slane %v452, 2
      %v936 = vsel %vm911, %v933, %v935
      %v937 = vrot.slane %v453, 2
      %v938 = vrot.slane %v454, 2
      %v939 = vsel %vm911, %v937, %v938
      %v940 = vrot.slane %v455, 2
      %v941 = vsel %vm911, %v938, %v940
      %v942 = vrot.slane %v456, 2
      %v943 = vrot.slane %v457, 2
      %v944 = vsel %vm911, %v942, %v943
      %v945 = vrot.slane %v458, 2
      %v946 = vsel %vm911, %v943, %v945
      %v947 = vrot.slane %v459, 2
      %v948 = vrot.slane %v460, 2
      %v949 = vsel %vm911, %v947, %v948
      %v950 = vrot.slane %v461, 2
      %v951 = vsel %vm911, %v948, %v950
      %v952 = vrot.slane %v462, 2
      %v953 = vrot.slane %v463, 2
      %v954 = vsel %vm911, %v952, %v953
      %v955 = vrot.slane %v464, 2
      %v956 = vsel %vm911, %v953, %v955
      %v957 = vrot.slane %v465, 2
      %v958 = vrot.slane %v466, 2
      %v959 = vsel %vm911, %v957, %v958
      %v960 = vrot.slane %v467, 2
      %v961 = vsel %vm911, %v958, %v960
      %v962 = vrot.slane %v468, 2
      %v963 = vrot.slane %v469, 2
      %v964 = vsel %vm911, %v962, %v963
      %v965 = vrot.slane %v470, 2
      %v966 = vsel %vm911, %v963, %v965
      %v967 = vrot.slane %v471, 2
      %v968 = vrot.slane %v472, 2
      %v969 = vsel %vm911, %v967, %v968
      %v970 = vrot.slane %v473, 2
      %v971 = vsel %vm911, %v968, %v970
      %v972 = vrot.slane %v474, 2
      %v973 = vrot.slane %v475, 2
      %v974 = vsel %vm911, %v972, %v973
      %v975 = vrot.slane %v476, 2
      %v976 = vsel %vm911, %v973, %v975
      %v977 = vrot.slane %v477, 2
      %v978 = vrot.slane %v478, 2
      %v979 = vsel %vm911, %v977, %v978
      %v980 = vrot.slane %v479, 2
      %v981 = vsel %vm911, %v978, %v980
      %v982 = vrot.slane %v480, 2
      %v983 = vrot.slane %v481, 2
      %v984 = vsel %vm911, %v982, %v983
      %v985 = vrot.slane %v482, 2
      %v986 = vsel %vm911, %v983, %v985
      %v987 = vrot.slane %v483, 2
      %v988 = vrot.slane %v484, 2
      %v989 = vsel %vm911, %v987, %v988
      %v990 = vrot.slane %v485, 2
      %v991 = vsel %vm911, %v988, %v990
      %v1024 = vpack.c.bf16 %v914, %v914
      %v1025 = vpack.c.bf16 %v916, %v916
      %v1026 = vpack.c.bf16 %v919, %v919
      %v1027 = vpack.c.bf16 %v921, %v921
      %v1028 = vpack.c.bf16 %v924, %v924
      %v1029 = vpack.c.bf16 %v926, %v926
      %v1030 = vpack.c.bf16 %v929, %v929
      %v1031 = vpack.c.bf16 %v931, %v931
      %v1032 = vpack.c.bf16 %v934, %v934
      %v1033 = vpack.c.bf16 %v936, %v936
      %v1034 = vpack.c.bf16 %v939, %v939
      %v1035 = vpack.c.bf16 %v941, %v941
      %v1036 = vpack.c.bf16 %v944, %v944
      %v1037 = vpack.c.bf16 %v946, %v946
      %v1038 = vpack.c.bf16 %v949, %v949
      %v1039 = vpack.c.bf16 %v951, %v951
      %v1040 = vpack.c.bf16 %v954, %v954
      %v1041 = vpack.c.bf16 %v956, %v956
      %v1042 = vpack.c.bf16 %v959, %v959
      %v1043 = vpack.c.bf16 %v961, %v961
      %v1044 = vpack.c.bf16 %v964, %v964
      %v1045 = vpack.c.bf16 %v966, %v966
      %v1046 = vpack.c.bf16 %v969, %v969
      %v1047 = vpack.c.bf16 %v971, %v971
      %v1048 = vpack.c.bf16 %v974, %v974
      %v1049 = vpack.c.bf16 %v976, %v976
      %v1050 = vpack.c.bf16 %v979, %v979
      %v1051 = vpack.c.bf16 %v981, %v981
      %v1052 = vpack.c.bf16 %v984, %v984
      %v1053 = vpack.c.bf16 %v986, %v986
      %v1054 = vpack.c.bf16 %v989, %v989
      %v1055 = vpack.c.bf16 %v991, %v991
      %1088 = vrot.lane.b32.xlu0 %v1024, 8
      %v1089 = vpop.permute.xlu0 %1088
      %1090 = vrot.lane.b32.xlu0 %v1025, 8
      %v1091 = vpop.permute.xlu0 %1090
      %1092 = vrot.lane.b32.xlu0 %v1026, 8
      %v1093 = vpop.permute.xlu0 %1092
      %1094 = vrot.lane.b32.xlu0 %v1027, 8
      %v1095 = vpop.permute.xlu0 %1094
      %1096 = vrot.lane.b32.xlu0 %v1028, 8
      %v1097 = vpop.permute.xlu0 %1096
      %1098 = vrot.lane.b32.xlu0 %v1029, 8
      %v1099 = vpop.permute.xlu0 %1098
      %1100 = vrot.lane.b32.xlu0 %v1030, 8
      %v1101 = vpop.permute.xlu0 %1100
      %1102 = vrot.lane.b32.xlu0 %v1031, 8
      %v1103 = vpop.permute.xlu0 %1102
      %1104 = vrot.lane.b32.xlu0 %v1032, 8
      %v1105 = vpop.permute.xlu0 %1104
      %1106 = vrot.lane.b32.xlu0 %v1033, 8
      %v1107 = vpop.permute.xlu0 %1106
      %1108 = vrot.lane.b32.xlu0 %v1034, 8
      %v1109 = vpop.permute.xlu0 %1108
      %1110 = vrot.lane.b32.xlu0 %v1035, 8
      %v1111 = vpop.permute.xlu0 %1110
      %1112 = vrot.lane.b32.xlu0 %v1036, 8
      %v1113 = vpop.permute.xlu0 %1112
      %1114 = vrot.lane.b32.xlu0 %v1037, 8
      %v1115 = vpop.permute.xlu0 %1114
      %1116 = vrot.lane.b32.xlu0 %v1038, 8
      %v1117 = vpop.permute.xlu0 %1116
      %1118 = vrot.lane.b32.xlu0 %v1039, 8
      %v1119 = vpop.permute.xlu0 %1118
      %1120 = vrot.lane.b32.xlu0 %v1040, 8
      %v1121 = vpop.permute.xlu0 %1120
      %1122 = vrot.lane.b32.xlu0 %v1041, 8
      %v1123 = vpop.permute.xlu0 %1122
      %1124 = vrot.lane.b32.xlu0 %v1042, 8
      %v1125 = vpop.permute.xlu0 %1124
      %1126 = vrot.lane.b32.xlu0 %v1043, 8
      %v1127 = vpop.permute.xlu0 %1126
      %1128 = vrot.lane.b32.xlu0 %v1044, 8
      %v1129 = vpop.permute.xlu0 %1128
      %1130 = vrot.lane.b32.xlu0 %v1045, 8
      %v1131 = vpop.permute.xlu0 %1130
      %1132 = vrot.lane.b32.xlu0 %v1046, 8
      %v1133 = vpop.permute.xlu0 %1132
      %1134 = vrot.lane.b32.xlu0 %v1047, 8
      %v1135 = vpop.permute.xlu0 %1134
      %1136 = vrot.lane.b32.xlu0 %v1048, 8
      %v1137 = vpop.permute.xlu0 %1136
      %1138 = vrot.lane.b32.xlu0 %v1049, 8
      %v1139 = vpop.permute.xlu0 %1138
      %1140 = vrot.lane.b32.xlu0 %v1050, 8
      %v1141 = vpop.permute.xlu0 %1140
      %1142 = vrot.lane.b32.xlu0 %v1051, 8
      %v1143 = vpop.permute.xlu0 %1142
      %1144 = vrot.lane.b32.xlu0 %v1052, 8
      %v1145 = vpop.permute.xlu0 %1144
      %1146 = vrot.lane.b32.xlu0 %v1053, 8
      %v1147 = vpop.permute.xlu0 %1146
      %1148 = vrot.lane.b32.xlu0 %v1054, 8
      %v1149 = vpop.permute.xlu0 %1148
      %1150 = vrot.lane.b32.xlu0 %v1055, 8
      %v1151 = vpop.permute.xlu0 %1150
      %vm1184 = vcmask 93248
      %1185 = vst.msk [vmem:[#allocation4] sm:$0xf] %vm1184, %v1089
      %1186 = vst.msk [vmem:[#allocation4 + $0x4] sm:$0xf] %vm1184, %v1091
      %1187 = vst.msk [vmem:[#allocation4 + $0x8] sm:$0xf] %vm1184, %v1093
      %1188 = vst.msk [vmem:[#allocation4 + $0xc] sm:$0xf] %vm1184, %v1095
      %1189 = vst.msk [vmem:[#allocation4 + $0x10] sm:$0xf] %vm1184, %v1097
      %1190 = vst.msk [vmem:[#allocation4 + $0x14] sm:$0xf] %vm1184, %v1099
      %1191 = vst.msk [vmem:[#allocation4 + $0x18] sm:$0xf] %vm1184, %v1101
      %1192 = vst.msk [vmem:[#allocation4 + $0x1c] sm:$0xf] %vm1184, %v1103
      %1193 = vst.msk [vmem:[#allocation4 + $0x20] sm:$0xf] %vm1184, %v1105
      %1194 = vst.msk [vmem:[#allocation4 + $0x24] sm:$0xf] %vm1184, %v1107
      %1195 = vst.msk [vmem:[#allocation4 + $0x28] sm:$0xf] %vm1184, %v1109
      %1196 = vst.msk [vmem:[#allocation4 + $0x2c] sm:$0xf] %vm1184, %v1111
      %1197 = vst.msk [vmem:[#allocation4 + $0x30] sm:$0xf] %vm1184, %v1113
      %1198 = vst.msk [vmem:[#allocation4 + $0x34] sm:$0xf] %vm1184, %v1115
      %1199 = vst.msk [vmem:[#allocation4 + $0x38] sm:$0xf] %vm1184, %v1117
      %1200 = vst.msk [vmem:[#allocation4 + $0x3c] sm:$0xf] %vm1184, %v1119
      %1201 = vst.msk [vmem:[#allocation4 + $0x40] sm:$0xf] %vm1184, %v1121
      %1202 = vst.msk [vmem:[#allocation4 + $0x44] sm:$0xf] %vm1184, %v1123
      %1203 = vst.msk [vmem:[#allocation4 + $0x48] sm:$0xf] %vm1184, %v1125
      %1204 = vst.msk [vmem:[#allocation4 + $0x4c] sm:$0xf] %vm1184, %v1127
      %1205 = vst.msk [vmem:[#allocation4 + $0x50] sm:$0xf] %vm1184, %v1129
      %1206 = vst.msk [vmem:[#allocation4 + $0x54] sm:$0xf] %vm1184, %v1131
      %1207 = vst.msk [vmem:[#allocation4 + $0x58] sm:$0xf] %vm1184, %v1133
      %1208 = vst.msk [vmem:[#allocation4 + $0x5c] sm:$0xf] %vm1184, %v1135
      %1209 = vst.msk [vmem:[#allocation4 + $0x60] sm:$0xf] %vm1184, %v1137
      %1210 = vst.msk [vmem:[#allocation4 + $0x64] sm:$0xf] %vm1184, %v1139
      %1211 = vst.msk [vmem:[#allocation4 + $0x68] sm:$0xf] %vm1184, %v1141
      %1212 = vst.msk [vmem:[#allocation4 + $0x6c] sm:$0xf] %vm1184, %v1143
      %1213 = vst.msk [vmem:[#allocation4 + $0x70] sm:$0xf] %vm1184, %v1145
      %1214 = vst.msk [vmem:[#allocation4 + $0x74] sm:$0xf] %vm1184, %v1147
      %1215 = vst.msk [vmem:[#allocation4 + $0x78] sm:$0xf] %vm1184, %v1149
      %1216 = vst.msk [vmem:[#allocation4 + $0x7c] sm:$0xf] %vm1184, %v1151
      %v1217 = vpack.c.bf16 %v486, %v486
      %v1218 = vpack.c.bf16 %v487, %v487
      %1251 = vrot.lane.b32.xlu0 %v494, 12
      %v1252 = vpop.permute.xlu0 %1251
      %1253 = vrot.lane.b32.xlu0 %v495, 12
      %v1254 = vpop.permute.xlu0 %1253
      %1255 = vrot.lane.b32.xlu0 %v496, 12
      %v1256 = vpop.permute.xlu0 %1255
      %1257 = vrot.lane.b32.xlu0 %v497, 12
      %v1258 = vpop.permute.xlu0 %1257
      %1259 = vrot.lane.b32.xlu0 %v498, 12
      %v1260 = vpop.permute.xlu0 %1259
      %1261 = vrot.lane.b32.xlu0 %v499, 12
      %v1262 = vpop.permute.xlu0 %1261
      %1263 = vrot.lane.b32.xlu0 %v500, 12
      %v1264 = vpop.permute.xlu0 %1263
      %1265 = vrot.lane.b32.xlu0 %v501, 12
      %v1266 = vpop.permute.xlu0 %1265
      %1267 = vrot.lane.b32.xlu0 %v502, 12
      %v1268 = vpop.permute.xlu0 %1267
      %1269 = vrot.lane.b32.xlu0 %v503, 12
      %v1270 = vpop.permute.xlu0 %1269
      %1271 = vrot.lane.b32.xlu0 %v504, 12
      %v1272 = vpop.permute.xlu0 %1271
      %1273 = vrot.lane.b32.xlu0 %v505, 12
      %v1274 = vpop.permute.xlu0 %1273
      %1275 = vrot.lane.b32.xlu0 %v506, 12
      %v1276 = vpop.permute.xlu0 %1275
      %1277 = vrot.lane.b32.xlu0 %v507, 12
      %v1278 = vpop.permute.xlu0 %1277
      %1279 = vrot.lane.b32.xlu0 %v508, 12
      %v1280 = vpop.permute.xlu0 %1279
      %1281 = vrot.lane.b32.xlu0 %v509, 12
      %v1282 = vpop.permute.xlu0 %1281
      %1283 = vrot.lane.b32.xlu0 %v510, 12
      %v1284 = vpop.permute.xlu0 %1283
      %1285 = vrot.lane.b32.xlu0 %v511, 12
      %v1286 = vpop.permute.xlu0 %1285
      %1287 = vrot.lane.b32.xlu0 %v512, 12
      %v1288 = vpop.permute.xlu0 %1287
      %1289 = vrot.lane.b32.xlu0 %v513, 12
      %v1290 = vpop.permute.xlu0 %1289
      %1291 = vrot.lane.b32.xlu0 %v514, 12
      %v1292 = vpop.permute.xlu0 %1291
      %1293 = vrot.lane.b32.xlu0 %v515, 12
      %v1294 = vpop.permute.xlu0 %1293
      %1295 = vrot.lane.b32.xlu0 %v516, 12
      %v1296 = vpop.permute.xlu0 %1295
      %1297 = vrot.lane.b32.xlu0 %v517, 12
      %v1298 = vpop.permute.xlu0 %1297
      %1299 = vrot.lane.b32.xlu0 %v518, 12
      %v1300 = vpop.permute.xlu0 %1299
      %1301 = vrot.lane.b32.xlu0 %v519, 12
      %v1302 = vpop.permute.xlu0 %1301
      %1303 = vrot.lane.b32.xlu0 %v520, 12
      %v1304 = vpop.permute.xlu0 %1303
      %1305 = vrot.lane.b32.xlu0 %v521, 12
      %v1306 = vpop.permute.xlu0 %1305
      %1307 = vrot.lane.b32.xlu0 %v522, 12
      %v1308 = vpop.permute.xlu0 %1307
      %1309 = vrot.lane.b32.xlu0 %v523, 12
      %v1310 = vpop.permute.xlu0 %1309
      %1311 = vrot.lane.b32.xlu0 %v1217, 12
      %v1312 = vpop.permute.xlu0 %1311
      %1313 = vrot.lane.b32.xlu0 %v1218, 12
      %v1314 = vpop.permute.xlu0 %1313
      %vm1347 = vcmask 126048
      %1348 = vst.msk [vmem:[#allocation4] sm:$0xf] %vm1347, %v1252
      %1349 = vst.msk [vmem:[#allocation4 + $0x4] sm:$0xf] %vm1347, %v1254
      %1350 = vst.msk [vmem:[#allocation4 + $0x8] sm:$0xf] %vm1347, %v1256
      %1351 = vst.msk [vmem:[#allocation4 + $0xc] sm:$0xf] %vm1347, %v1258
      %1352 = vst.msk [vmem:[#allocation4 + $0x10] sm:$0xf] %vm1347, %v1260
      %1353 = vst.msk [vmem:[#allocation4 + $0x14] sm:$0xf] %vm1347, %v1262
      %1354 = vst.msk [vmem:[#allocation4 + $0x18] sm:$0xf] %vm1347, %v1264
      %1355 = vst.msk [vmem:[#allocation4 + $0x1c] sm:$0xf] %vm1347, %v1266
      %1356 = vst.msk [vmem:[#allocation4 + $0x20] sm:$0xf] %vm1347, %v1268
      %1357 = vst.msk [vmem:[#allocation4 + $0x24] sm:$0xf] %vm1347, %v1270
      %1358 = vst.msk [vmem:[#allocation4 + $0x28] sm:$0xf] %vm1347, %v1272
      %1359 = vst.msk [vmem:[#allocation4 + $0x2c] sm:$0xf] %vm1347, %v1274
      %1360 = vst.msk [vmem:[#allocation4 + $0x30] sm:$0xf] %vm1347, %v1276
      %1361 = vst.msk [vmem:[#allocation4 + $0x34] sm:$0xf] %vm1347, %v1278
      %1362 = vst.msk [vmem:[#allocation4 + $0x38] sm:$0xf] %vm1347, %v1280
      %1363 = vst.msk [vmem:[#allocation4 + $0x3c] sm:$0xf] %vm1347, %v1282
      %1364 = vst.msk [vmem:[#allocation4 + $0x40] sm:$0xf] %vm1347, %v1284
      %1365 = vst.msk [vmem:[#allocation4 + $0x44] sm:$0xf] %vm1347, %v1286
      %1366 = vst.msk [vmem:[#allocation4 + $0x48] sm:$0xf] %vm1347, %v1288
      %1367 = vst.msk [vmem:[#allocation4 + $0x4c] sm:$0xf] %vm1347, %v1290
      %1368 = vst.msk [vmem:[#allocation4 + $0x50] sm:$0xf] %vm1347, %v1292
      %1369 = vst.msk [vmem:[#allocation4 + $0x54] sm:$0xf] %vm1347, %v1294
      %1370 = vst.msk [vmem:[#allocation4 + $0x58] sm:$0xf] %vm1347, %v1296
      %1371 = vst.msk [vmem:[#allocation4 + $0x5c] sm:$0xf] %vm1347, %v1298
      %1372 = vst.msk [vmem:[#allocation4 + $0x60] sm:$0xf] %vm1347, %v1300
      %1373 = vst.msk [vmem:[#allocation4 + $0x64] sm:$0xf] %vm1347, %v1302
      %1374 = vst.msk [vmem:[#allocation4 + $0x68] sm:$0xf] %vm1347, %v1304
      %1375 = vst.msk [vmem:[#allocation4 + $0x6c] sm:$0xf] %vm1347, %v1306
      %1376 = vst.msk [vmem:[#allocation4 + $0x70] sm:$0xf] %vm1347, %v1308
      %1377 = vst.msk [vmem:[#allocation4 + $0x74] sm:$0xf] %vm1347, %v1310
      %1378 = vst.msk [vmem:[#allocation4 + $0x78] sm:$0xf] %vm1347, %v1312
      %1379 = vst.msk [vmem:[#allocation4 + $0x7c] sm:$0xf] %vm1347, %v1314
      %v1383 = vrot.slane %v486, 1
      %v1384 = vrot.slane %v487, 1
      %v1385 = vsel %vm605, %v1383, %v1384
      %v1386 = vrot.slane %v488, 1
      %v1387 = vsel %vm605, %v1384, %v1386
      %v1390 = vpack.c.bf16 %v1385, %v1385
      %v1391 = vpack.c.bf16 %v1387, %v1387
      %1394 = vrot.lane.b32.xlu0 %v720, 16
      %v1395 = vpop.permute.xlu0 %1394
      %1396 = vrot.lane.b32.xlu0 %v721, 16
      %v1397 = vpop.permute.xlu0 %1396
      %1398 = vrot.lane.b32.xlu0 %v722, 16
      %v1399 = vpop.permute.xlu0 %1398
      %1400 = vrot.lane.b32.xlu0 %v723, 16
      %v1401 = vpop.permute.xlu0 %1400
      %1402 = vrot.lane.b32.xlu0 %v724, 16
      %v1403 = vpop.permute.xlu0 %1402
      %1404 = vrot.lane.b32.xlu0 %v725, 16
      %v1405 = vpop.permute.xlu0 %1404
      %1406 = vrot.lane.b32.xlu0 %v726, 16
      %v1407 = vpop.permute.xlu0 %1406
      %1408 = vrot.lane.b32.xlu0 %v727, 16
      %v1409 = vpop.permute.xlu0 %1408
      %1410 = vrot.lane.b32.xlu0 %v728, 16
      %v1411 = vpop.permute.xlu0 %1410
      %1412 = vrot.lane.b32.xlu0 %v729, 16
      %v1413 = vpop.permute.xlu0 %1412
      %1414 = vrot.lane.b32.xlu0 %v730, 16
      %v1415 = vpop.permute.xlu0 %1414
      %1416 = vrot.lane.b32.xlu0 %v731, 16
      %v1417 = vpop.permute.xlu0 %1416
      %1418 = vrot.lane.b32.xlu0 %v732, 16
      %v1419 = vpop.permute.xlu0 %1418
      %1420 = vrot.lane.b32.xlu0 %v733, 16
      %v1421 = vpop.permute.xlu0 %1420
      %1422 = vrot.lane.b32.xlu0 %v734, 16
      %v1423 = vpop.permute.xlu0 %1422
      %1424 = vrot.lane.b32.xlu0 %v735, 16
      %v1425 = vpop.permute.xlu0 %1424
      %1426 = vrot.lane.b32.xlu0 %v736, 16
      %v1427 = vpop.permute.xlu0 %1426
      %1428 = vrot.lane.b32.xlu0 %v737, 16
      %v1429 = vpop.permute.xlu0 %1428
      %1430 = vrot.lane.b32.xlu0 %v738, 16
      %v1431 = vpop.permute.xlu0 %1430
      %1432 = vrot.lane.b32.xlu0 %v739, 16
      %v1433 = vpop.permute.xlu0 %1432
      %1434 = vrot.lane.b32.xlu0 %v740, 16
      %v1435 = vpop.permute.xlu0 %1434
      %1436 = vrot.lane.b32.xlu0 %v741, 16
      %v1437 = vpop.permute.xlu0 %1436
      %1438 = vrot.lane.b32.xlu0 %v742, 16
      %v1439 = vpop.permute.xlu0 %1438
      %1440 = vrot.lane.b32.xlu0 %v743, 16
      %v1441 = vpop.permute.xlu0 %1440
      %1442 = vrot.lane.b32.xlu0 %v744, 16
      %v1443 = vpop.permute.xlu0 %1442
      %1444 = vrot.lane.b32.xlu0 %v745, 16
      %v1445 = vpop.permute.xlu0 %1444
      %1446 = vrot.lane.b32.xlu0 %v746, 16
      %v1447 = vpop.permute.xlu0 %1446
      %1448 = vrot.lane.b32.xlu0 %v747, 16
      %v1449 = vpop.permute.xlu0 %1448
      %1450 = vrot.lane.b32.xlu0 %v748, 16
      %v1451 = vpop.permute.xlu0 %1450
      %1452 = vrot.lane.b32.xlu0 %v749, 16
      %v1453 = vpop.permute.xlu0 %1452
      %1454 = vrot.lane.b32.xlu0 %v1390, 16
      %v1455 = vpop.permute.xlu0 %1454
      %1456 = vrot.lane.b32.xlu0 %v1391, 16
      %v1457 = vpop.permute.xlu0 %1456
      %vm1490 = vcmask 158848
      %1491 = vst.msk [vmem:[#allocation4] sm:$0xf] %vm1490, %v1395
      %1492 = vst.msk [vmem:[#allocation4 + $0x4] sm:$0xf] %vm1490, %v1397
      %1493 = vst.msk [vmem:[#allocation4 + $0x8] sm:$0xf] %vm1490, %v1399
      %1494 = vst.msk [vmem:[#allocation4 + $0xc] sm:$0xf] %vm1490, %v1401
      %1495 = vst.msk [vmem:[#allocation4 + $0x10] sm:$0xf] %vm1490, %v1403
      %1496 = vst.msk [vmem:[#allocation4 + $0x14] sm:$0xf] %vm1490, %v1405
      %1497 = vst.msk [vmem:[#allocation4 + $0x18] sm:$0xf] %vm1490, %v1407
      %1498 = vst.msk [vmem:[#allocation4 + $0x1c] sm:$0xf] %vm1490, %v1409
      %1499 = vst.msk [vmem:[#allocation4 + $0x20] sm:$0xf] %vm1490, %v1411
      %1500 = vst.msk [vmem:[#allocation4 + $0x24] sm:$0xf] %vm1490, %v1413
      %1501 = vst.msk [vmem:[#allocation4 + $0x28] sm:$0xf] %vm1490, %v1415
      %1502 = vst.msk [vmem:[#allocation4 + $0x2c] sm:$0xf] %vm1490, %v1417
      %1503 = vst.msk [vmem:[#allocation4 + $0x30] sm:$0xf] %vm1490, %v1419
      %1504 = vst.msk [vmem:[#allocation4 + $0x34] sm:$0xf] %vm1490, %v1421
      %1505 = vst.msk [vmem:[#allocation4 + $0x38] sm:$0xf] %vm1490, %v1423
      %1506 = vst.msk [vmem:[#allocation4 + $0x3c] sm:$0xf] %vm1490, %v1425
      %1507 = vst.msk [vmem:[#allocation4 + $0x40] sm:$0xf] %vm1490, %v1427
      %1508 = vst.msk [vmem:[#allocation4 + $0x44] sm:$0xf] %vm1490, %v1429
      %1509 = vst.msk [vmem:[#allocation4 + $0x48] sm:$0xf] %vm1490, %v1431
      %1510 = vst.msk [vmem:[#allocation4 + $0x4c] sm:$0xf] %vm1490, %v1433
      %1511 = vst.msk [vmem:[#allocation4 + $0x50] sm:$0xf] %vm1490, %v1435
      %1512 = vst.msk [vmem:[#allocation4 + $0x54] sm:$0xf] %vm1490, %v1437
      %1513 = vst.msk [vmem:[#allocation4 + $0x58] sm:$0xf] %vm1490, %v1439
      %1514 = vst.msk [vmem:[#allocation4 + $0x5c] sm:$0xf] %vm1490, %v1441
      %1515 = vst.msk [vmem:[#allocation4 + $0x60] sm:$0xf] %vm1490, %v1443
      %1516 = vst.msk [vmem:[#allocation4 + $0x64] sm:$0xf] %vm1490, %v1445
      %1517 = vst.msk [vmem:[#allocation4 + $0x68] sm:$0xf] %vm1490, %v1447
      %1518 = vst.msk [vmem:[#allocation4 + $0x6c] sm:$0xf] %vm1490, %v1449
      %1519 = vst.msk [vmem:[#allocation4 + $0x70] sm:$0xf] %vm1490, %v1451
      %1520 = vst.msk [vmem:[#allocation4 + $0x74] sm:$0xf] %vm1490, %v1453
      %1521 = vst.msk [vmem:[#allocation4 + $0x78] sm:$0xf] %vm1490, %v1455
      %1522 = vst.msk [vmem:[#allocation4 + $0x7c] sm:$0xf] %vm1490, %v1457
      %v1523 = vrot.slane %v486, 2
      %v1524 = vrot.slane %v487, 2
      %v1525 = vsel %vm911, %v1523, %v1524
      %v1526 = vrot.slane %v488, 2
      %v1527 = vsel %vm911, %v1524, %v1526
      %v1530 = vpack.c.bf16 %v1525, %v1525
      %v1531 = vpack.c.bf16 %v1527, %v1527
      %1534 = vrot.lane.b32.xlu0 %v1026, 20
      %v1535 = vpop.permute.xlu0 %1534
      %1536 = vrot.lane.b32.xlu0 %v1027, 20
      %v1537 = vpop.permute.xlu0 %1536
      %1538 = vrot.lane.b32.xlu0 %v1028, 20
      %v1539 = vpop.permute.xlu0 %1538
      %1540 = vrot.lane.b32.xlu0 %v1029, 20
      %v1541 = vpop.permute.xlu0 %1540
      %1542 = vrot.lane.b32.xlu0 %v1030, 20
      %v1543 = vpop.permute.xlu0 %1542
      %1544 = vrot.lane.b32.xlu0 %v1031, 20
      %v1545 = vpop.permute.xlu0 %1544
      %1546 = vrot.lane.b32.xlu0 %v1032, 20
      %v1547 = vpop.permute.xlu0 %1546
      %1548 = vrot.lane.b32.xlu0 %v1033, 20
      %v1549 = vpop.permute.xlu0 %1548
      %1550 = vrot.lane.b32.xlu0 %v1034, 20
      %v1551 = vpop.permute.xlu0 %1550
      %1552 = vrot.lane.b32.xlu0 %v1035, 20
      %v1553 = vpop.permute.xlu0 %1552
      %1554 = vrot.lane.b32.xlu0 %v1036, 20
      %v1555 = vpop.permute.xlu0 %1554
      %1556 = vrot.lane.b32.xlu0 %v1037, 20
      %v1557 = vpop.permute.xlu0 %1556
      %1558 = vrot.lane.b32.xlu0 %v1038, 20
      %v1559 = vpop.permute.xlu0 %1558
      %1560 = vrot.lane.b32.xlu0 %v1039, 20
      %v1561 = vpop.permute.xlu0 %1560
      %1562 = vrot.lane.b32.xlu0 %v1040, 20
      %v1563 = vpop.permute.xlu0 %1562
      %1564 = vrot.lane.b32.xlu0 %v1041, 20
      %v1565 = vpop.permute.xlu0 %1564
      %1566 = vrot.lane.b32.xlu0 %v1042, 20
      %v1567 = vpop.permute.xlu0 %1566
      %1568 = vrot.lane.b32.xlu0 %v1043, 20
      %v1569 = vpop.permute.xlu0 %1568
      %1570 = vrot.lane.b32.xlu0 %v1044, 20
      %v1571 = vpop.permute.xlu0 %1570
      %1572 = vrot.lane.b32.xlu0 %v1045, 20
      %v1573 = vpop.permute.xlu0 %1572
      %1574 = vrot.lane.b32.xlu0 %v1046, 20
      %v1575 = vpop.permute.xlu0 %1574
      %1576 = vrot.lane.b32.xlu0 %v1047, 20
      %v1577 = vpop.permute.xlu0 %1576
      %1578 = vrot.lane.b32.xlu0 %v1048, 20
      %v1579 = vpop.permute.xlu0 %1578
      %1580 = vrot.lane.b32.xlu0 %v1049, 20
      %v1581 = vpop.permute.xlu0 %1580
      %1582 = vrot.lane.b32.xlu0 %v1050, 20
      %v1583 = vpop.permute.xlu0 %1582
      %1584 = vrot.lane.b32.xlu0 %v1051, 20
      %v1585 = vpop.permute.xlu0 %1584
      %1586 = vrot.lane.b32.xlu0 %v1052, 20
      %v1587 = vpop.permute.xlu0 %1586
      %1588 = vrot.lane.b32.xlu0 %v1053, 20
      %v1589 = vpop.permute.xlu0 %1588
      %1590 = vrot.lane.b32.xlu0 %v1054, 20
      %v1591 = vpop.permute.xlu0 %1590
      %1592 = vrot.lane.b32.xlu0 %v1055, 20
      %v1593 = vpop.permute.xlu0 %1592
      %1594 = vrot.lane.b32.xlu0 %v1530, 20
      %v1595 = vpop.permute.xlu0 %1594
      %1596 = vrot.lane.b32.xlu0 %v1531, 20
      %v1597 = vpop.permute.xlu0 %1596
      %vm1630 = vcmask 191648
      %1631 = vst.msk [vmem:[#allocation4] sm:$0xf] %vm1630, %v1535
      %1632 = vst.msk [vmem:[#allocation4 + $0x4] sm:$0xf] %vm1630, %v1537
      %1633 = vst.msk [vmem:[#allocation4 + $0x8] sm:$0xf] %vm1630, %v1539
      %1634 = vst.msk [vmem:[#allocation4 + $0xc] sm:$0xf] %vm1630, %v1541
      %1635 = vst.msk [vmem:[#allocation4 + $0x10] sm:$0xf] %vm1630, %v1543
      %1636 = vst.msk [vmem:[#allocation4 + $0x14] sm:$0xf] %vm1630, %v1545
      %1637 = vst.msk [vmem:[#allocation4 + $0x18] sm:$0xf] %vm1630, %v1547
      %1638 = vst.msk [vmem:[#allocation4 + $0x1c] sm:$0xf] %vm1630, %v1549
      %1639 = vst.msk [vmem:[#allocation4 + $0x20] sm:$0xf] %vm1630, %v1551
      %1640 = vst.msk [vmem:[#allocation4 + $0x24] sm:$0xf] %vm1630, %v1553
      %1641 = vst.msk [vmem:[#allocation4 + $0x28] sm:$0xf] %vm1630, %v1555
      %1642 = vst.msk [vmem:[#allocation4 + $0x2c] sm:$0xf] %vm1630, %v1557
      %1643 = vst.msk [vmem:[#allocation4 + $0x30] sm:$0xf] %vm1630, %v1559
      %1644 = vst.msk [vmem:[#allocation4 + $0x34] sm:$0xf] %vm1630, %v1561
      %1645 = vst.msk [vmem:[#allocation4 + $0x38] sm:$0xf] %vm1630, %v1563
      %1646 = vst.msk [vmem:[#allocation4 + $0x3c] sm:$0xf] %vm1630, %v1565
      %1647 = vst.msk [vmem:[#allocation4 + $0x40] sm:$0xf] %vm1630, %v1567
      %1648 = vst.msk [vmem:[#allocation4 + $0x44] sm:$0xf] %vm1630, %v1569
      %1649 = vst.msk [vmem:[#allocation4 + $0x48] sm:$0xf] %vm1630, %v1571
      %1650 = vst.msk [vmem:[#allocation4 + $0x4c] sm:$0xf] %vm1630, %v1573
      %1651 = vst.msk [vmem:[#allocation4 + $0x50] sm:$0xf] %vm1630, %v1575
      %1652 = vst.msk [vmem:[#allocation4 + $0x54] sm:$0xf] %vm1630, %v1577
      %1653 = vst.msk [vmem:[#allocation4 + $0x58] sm:$0xf] %vm1630, %v1579
      %1654 = vst.msk [vmem:[#allocation4 + $0x5c] sm:$0xf] %vm1630, %v1581
      %1655 = vst.msk [vmem:[#allocation4 + $0x60] sm:$0xf] %vm1630, %v1583
      %1656 = vst.msk [vmem:[#allocation4 + $0x64] sm:$0xf] %vm1630, %v1585
      %1657 = vst.msk [vmem:[#allocation4 + $0x68] sm:$0xf] %vm1630, %v1587
      %1658 = vst.msk [vmem:[#allocation4 + $0x6c] sm:$0xf] %vm1630, %v1589
      %1659 = vst.msk [vmem:[#allocation4 + $0x70] sm:$0xf] %vm1630, %v1591
      %1660 = vst.msk [vmem:[#allocation4 + $0x74] sm:$0xf] %vm1630, %v1593
      %1661 = vst.msk [vmem:[#allocation4 + $0x78] sm:$0xf] %vm1630, %v1595
      %1662 = vst.msk [vmem:[#allocation4 + $0x7c] sm:$0xf] %vm1630, %v1597
      %v1663 = vpack.c.bf16 %v489, %v489
      %v1664 = vpack.c.bf16 %v490, %v490
      %1667 = vrot.lane.b32.xlu0 %v496, 24
      %v1668 = vpop.permute.xlu0 %1667
      %1669 = vrot.lane.b32.xlu0 %v497, 24
      %v1670 = vpop.permute.xlu0 %1669
      %1671 = vrot.lane.b32.xlu0 %v498, 24
      %v1672 = vpop.permute.xlu0 %1671
      %1673 = vrot.lane.b32.xlu0 %v499, 24
      %v1674 = vpop.permute.xlu0 %1673
      %1675 = vrot.lane.b32.xlu0 %v500, 24
      %v1676 = vpop.permute.xlu0 %1675
      %1677 = vrot.lane.b32.xlu0 %v501, 24
      %v1678 = vpop.permute.xlu0 %1677
      %1679 = vrot.lane.b32.xlu0 %v502, 24
      %v1680 = vpop.permute.xlu0 %1679
      %1681 = vrot.lane.b32.xlu0 %v503, 24
      %v1682 = vpop.permute.xlu0 %1681
      %1683 = vrot.lane.b32.xlu0 %v504, 24
      %v1684 = vpop.permute.xlu0 %1683
      %1685 = vrot.lane.b32.xlu0 %v505, 24
      %v1686 = vpop.permute.xlu0 %1685
      %1687 = vrot.lane.b32.xlu0 %v506, 24
      %v1688 = vpop.permute.xlu0 %1687
      %1689 = vrot.lane.b32.xlu0 %v507, 24
      %v1690 = vpop.permute.xlu0 %1689
      %1691 = vrot.lane.b32.xlu0 %v508, 24
      %v1692 = vpop.permute.xlu0 %1691
      %1693 = vrot.lane.b32.xlu0 %v509, 24
      %v1694 = vpop.permute.xlu0 %1693
      %1695 = vrot.lane.b32.xlu0 %v510, 24
      %v1696 = vpop.permute.xlu0 %1695
      %1697 = vrot.lane.b32.xlu0 %v511, 24
      %v1698 = vpop.permute.xlu0 %1697
      %1699 = vrot.lane.b32.xlu0 %v512, 24
      %v1700 = vpop.permute.xlu0 %1699
      %1701 = vrot.lane.b32.xlu0 %v513, 24
      %v1702 = vpop.permute.xlu0 %1701
      %1703 = vrot.lane.b32.xlu0 %v514, 24
      %v1704 = vpop.permute.xlu0 %1703
      %1705 = vrot.lane.b32.xlu0 %v515, 24
      %v1706 = vpop.permute.xlu0 %1705
      %1707 = vrot.lane.b32.xlu0 %v516, 24
      %v1708 = vpop.permute.xlu0 %1707
      %1709 = vrot.lane.b32.xlu0 %v517, 24
      %v1710 = vpop.permute.xlu0 %1709
      %1711 = vrot.lane.b32.xlu0 %v518, 24
      %v1712 = vpop.permute.xlu0 %1711
      %1713 = vrot.lane.b32.xlu0 %v519, 24
      %v1714 = vpop.permute.xlu0 %1713
      %1715 = vrot.lane.b32.xlu0 %v520, 24
      %v1716 = vpop.permute.xlu0 %1715
      %1717 = vrot.lane.b32.xlu0 %v521, 24
      %v1718 = vpop.permute.xlu0 %1717
      %1719 = vrot.lane.b32.xlu0 %v522, 24
      %v1720 = vpop.permute.xlu0 %1719
      %1721 = vrot.lane.b32.xlu0 %v523, 24
      %v1722 = vpop.permute.xlu0 %1721
      %1723 = vrot.lane.b32.xlu0 %v1217, 24
      %v1724 = vpop.permute.xlu0 %1723
      %1725 = vrot.lane.b32.xlu0 %v1218, 24
      %v1726 = vpop.permute.xlu0 %1725
      %1727 = vrot.lane.b32.xlu0 %v1663, 24
      %v1728 = vpop.permute.xlu0 %1727
      %1729 = vrot.lane.b32.xlu0 %v1664, 24
      %v1730 = vpop.permute.xlu0 %1729
      %vm1763 = vcmask 224448
      %1764 = vst.msk [vmem:[#allocation4] sm:$0xf] %vm1763, %v1668
      %1765 = vst.msk [vmem:[#allocation4 + $0x4] sm:$0xf] %vm1763, %v1670
      %1766 = vst.msk [vmem:[#allocation4 + $0x8] sm:$0xf] %vm1763, %v1672
      %1767 = vst.msk [vmem:[#allocation4 + $0xc] sm:$0xf] %vm1763, %v1674
      %1768 = vst.msk [vmem:[#allocation4 + $0x10] sm:$0xf] %vm1763, %v1676
      %1769 = vst.msk [vmem:[#allocation4 + $0x14] sm:$0xf] %vm1763, %v1678
      %1770 = vst.msk [vmem:[#allocation4 + $0x18] sm:$0xf] %vm1763, %v1680
      %1771 = vst.msk [vmem:[#allocation4 + $0x1c] sm:$0xf] %vm1763, %v1682
      %1772 = vst.msk [vmem:[#allocation4 + $0x20] sm:$0xf] %vm1763, %v1684
      %1773 = vst.msk [vmem:[#allocation4 + $0x24] sm:$0xf] %vm1763, %v1686
      %1774 = vst.msk [vmem:[#allocation4 + $0x28] sm:$0xf] %vm1763, %v1688
      %1775 = vst.msk [vmem:[#allocation4 + $0x2c] sm:$0xf] %vm1763, %v1690
      %1776 = vst.msk [vmem:[#allocation4 + $0x30] sm:$0xf] %vm1763, %v1692
      %1777 = vst.msk [vmem:[#allocation4 + $0x34] sm:$0xf] %vm1763, %v1694
      %1778 = vst.msk [vmem:[#allocation4 + $0x38] sm:$0xf] %vm1763, %v1696
      %1779 = vst.msk [vmem:[#allocation4 + $0x3c] sm:$0xf] %vm1763, %v1698
      %1780 = vst.msk [vmem:[#allocation4 + $0x40] sm:$0xf] %vm1763, %v1700
      %1781 = vst.msk [vmem:[#allocation4 + $0x44] sm:$0xf] %vm1763, %v1702
      %1782 = vst.msk [vmem:[#allocation4 + $0x48] sm:$0xf] %vm1763, %v1704
      %1783 = vst.msk [vmem:[#allocation4 + $0x4c] sm:$0xf] %vm1763, %v1706
      %1784 = vst.msk [vmem:[#allocation4 + $0x50] sm:$0xf] %vm1763, %v1708
      %1785 = vst.msk [vmem:[#allocation4 + $0x54] sm:$0xf] %vm1763, %v1710
      %1786 = vst.msk [vmem:[#allocation4 + $0x58] sm:$0xf] %vm1763, %v1712
      %1787 = vst.msk [vmem:[#allocation4 + $0x5c] sm:$0xf] %vm1763, %v1714
      %1788 = vst.msk [vmem:[#allocation4 + $0x60] sm:$0xf] %vm1763, %v1716
      %1789 = vst.msk [vmem:[#allocation4 + $0x64] sm:$0xf] %vm1763, %v1718
      %1790 = vst.msk [vmem:[#allocation4 + $0x68] sm:$0xf] %vm1763, %v1720
      %1791 = vst.msk [vmem:[#allocation4 + $0x6c] sm:$0xf] %vm1763, %v1722
      %1792 = vst.msk [vmem:[#allocation4 + $0x70] sm:$0xf] %vm1763, %v1724
      %1793 = vst.msk [vmem:[#allocation4 + $0x74] sm:$0xf] %vm1763, %v1726
      %1794 = vst.msk [vmem:[#allocation4 + $0x78] sm:$0xf] %vm1763, %v1728
      %1795 = vst.msk [vmem:[#allocation4 + $0x7c] sm:$0xf] %vm1763, %v1730
      %v1799 = vrot.slane %v489, 1
      %v1800 = vrot.slane %v490, 1
      %v1801 = vsel %vm605, %v1799, %v1800
      %v1802 = vrot.slane %v491, 1
      %v1803 = vsel %vm605, %v1800, %v1802
      %v1806 = vpack.c.bf16 %v1801, %v1801
      %v1807 = vpack.c.bf16 %v1803, %v1803
      %1810 = vrot.lane.b32.xlu0 %v722, 28
      %v1811 = vpop.permute.xlu0 %1810
      %1812 = vrot.lane.b32.xlu0 %v723, 28
      %v1813 = vpop.permute.xlu0 %1812
      %1814 = vrot.lane.b32.xlu0 %v724, 28
      %v1815 = vpop.permute.xlu0 %1814
      %1816 = vrot.lane.b32.xlu0 %v725, 28
      %v1817 = vpop.permute.xlu0 %1816
      %1818 = vrot.lane.b32.xlu0 %v726, 28
      %v1819 = vpop.permute.xlu0 %1818
      %1820 = vrot.lane.b32.xlu0 %v727, 28
      %v1821 = vpop.permute.xlu0 %1820
      %1822 = vrot.lane.b32.xlu0 %v728, 28
      %v1823 = vpop.permute.xlu0 %1822
      %1824 = vrot.lane.b32.xlu0 %v729, 28
      %v1825 = vpop.permute.xlu0 %1824
      %1826 = vrot.lane.b32.xlu0 %v730, 28
      %v1827 = vpop.permute.xlu0 %1826
      %1828 = vrot.lane.b32.xlu0 %v731, 28
      %v1829 = vpop.permute.xlu0 %1828
      %1830 = vrot.lane.b32.xlu0 %v732, 28
      %v1831 = vpop.permute.xlu0 %1830
      %1832 = vrot.lane.b32.xlu0 %v733, 28
      %v1833 = vpop.permute.xlu0 %1832
      %1834 = vrot.lane.b32.xlu0 %v734, 28
      %v1835 = vpop.permute.xlu0 %1834
      %1836 = vrot.lane.b32.xlu0 %v735, 28
      %v1837 = vpop.permute.xlu0 %1836
      %1838 = vrot.lane.b32.xlu0 %v736, 28
      %v1839 = vpop.permute.xlu0 %1838
      %1840 = vrot.lane.b32.xlu0 %v737, 28
      %v1841 = vpop.permute.xlu0 %1840
      %1842 = vrot.lane.b32.xlu0 %v738, 28
      %v1843 = vpop.permute.xlu0 %1842
      %1844 = vrot.lane.b32.xlu0 %v739, 28
      %v1845 = vpop.permute.xlu0 %1844
      %1846 = vrot.lane.b32.xlu0 %v740, 28
      %v1847 = vpop.permute.xlu0 %1846
      %1848 = vrot.lane.b32.xlu0 %v741, 28
      %v1849 = vpop.permute.xlu0 %1848
      %1850 = vrot.lane.b32.xlu0 %v742, 28
      %v1851 = vpop.permute.xlu0 %1850
      %1852 = vrot.lane.b32.xlu0 %v743, 28
      %v1853 = vpop.permute.xlu0 %1852
      %1854 = vrot.lane.b32.xlu0 %v744, 28
      %v1855 = vpop.permute.xlu0 %1854
      %1856 = vrot.lane.b32.xlu0 %v745, 28
      %v1857 = vpop.permute.xlu0 %1856
      %1858 = vrot.lane.b32.xlu0 %v746, 28
      %v1859 = vpop.permute.xlu0 %1858
      %1860 = vrot.lane.b32.xlu0 %v747, 28
      %v1861 = vpop.permute.xlu0 %1860
      %1862 = vrot.lane.b32.xlu0 %v748, 28
      %v1863 = vpop.permute.xlu0 %1862
      %1864 = vrot.lane.b32.xlu0 %v749, 28
      %v1865 = vpop.permute.xlu0 %1864
      %1866 = vrot.lane.b32.xlu0 %v1390, 28
      %v1867 = vpop.permute.xlu0 %1866
      %1868 = vrot.lane.b32.xlu0 %v1391, 28
      %v1869 = vpop.permute.xlu0 %1868
      %1870 = vrot.lane.b32.xlu0 %v1806, 28
      %v1871 = vpop.permute.xlu0 %1870
      %1872 = vrot.lane.b32.xlu0 %v1807, 28
      %v1873 = vpop.permute.xlu0 %1872
      %vm1906 = vcmask 257248
      %1907 = vst.msk [vmem:[#allocation4] sm:$0xf] %vm1906, %v1811
      %1908 = vst.msk [vmem:[#allocation4 + $0x4] sm:$0xf] %vm1906, %v1813
      %1909 = vst.msk [vmem:[#allocation4 + $0x8] sm:$0xf] %vm1906, %v1815
      %1910 = vst.msk [vmem:[#allocation4 + $0xc] sm:$0xf] %vm1906, %v1817
      %1911 = vst.msk [vmem:[#allocation4 + $0x10] sm:$0xf] %vm1906, %v1819
      %1912 = vst.msk [vmem:[#allocation4 + $0x14] sm:$0xf] %vm1906, %v1821
      %1913 = vst.msk [vmem:[#allocation4 + $0x18] sm:$0xf] %vm1906, %v1823
      %1914 = vst.msk [vmem:[#allocation4 + $0x1c] sm:$0xf] %vm1906, %v1825
      %1915 = vst.msk [vmem:[#allocation4 + $0x20] sm:$0xf] %vm1906, %v1827
      %1916 = vst.msk [vmem:[#allocation4 + $0x24] sm:$0xf] %vm1906, %v1829
      %1917 = vst.msk [vmem:[#allocation4 + $0x28] sm:$0xf] %vm1906, %v1831
      %1918 = vst.msk [vmem:[#allocation4 + $0x2c] sm:$0xf] %vm1906, %v1833
      %1919 = vst.msk [vmem:[#allocation4 + $0x30] sm:$0xf] %vm1906, %v1835
      %1920 = vst.msk [vmem:[#allocation4 + $0x34] sm:$0xf] %vm1906, %v1837
      %1921 = vst.msk [vmem:[#allocation4 + $0x38] sm:$0xf] %vm1906, %v1839
      %1922 = vst.msk [vmem:[#allocation4 + $0x3c] sm:$0xf] %vm1906, %v1841
      %1923 = vst.msk [vmem:[#allocation4 + $0x40] sm:$0xf] %vm1906, %v1843
      %1924 = vst.msk [vmem:[#allocation4 + $0x44] sm:$0xf] %vm1906, %v1845
      %1925 = vst.msk [vmem:[#allocation4 + $0x48] sm:$0xf] %vm1906, %v1847
      %1926 = vst.msk [vmem:[#allocation4 + $0x4c] sm:$0xf] %vm1906, %v1849
      %1927 = vst.msk [vmem:[#allocation4 + $0x50] sm:$0xf] %vm1906, %v1851
      %1928 = vst.msk [vmem:[#allocation4 + $0x54] sm:$0xf] %vm1906, %v1853
      %1929 = vst.msk [vmem:[#allocation4 + $0x58] sm:$0xf] %vm1906, %v1855
      %1930 = vst.msk [vmem:[#allocation4 + $0x5c] sm:$0xf] %vm1906, %v1857
      %1931 = vst.msk [vmem:[#allocation4 + $0x60] sm:$0xf] %vm1906, %v1859
      %1932 = vst.msk [vmem:[#allocation4 + $0x64] sm:$0xf] %vm1906, %v1861
      %1933 = vst.msk [vmem:[#allocation4 + $0x68] sm:$0xf] %vm1906, %v1863
      %1934 = vst.msk [vmem:[#allocation4 + $0x6c] sm:$0xf] %vm1906, %v1865
      %1935 = vst.msk [vmem:[#allocation4 + $0x70] sm:$0xf] %vm1906, %v1867
      %1936 = vst.msk [vmem:[#allocation4 + $0x74] sm:$0xf] %vm1906, %v1869
      %1937 = vst.msk [vmem:[#allocation4 + $0x78] sm:$0xf] %vm1906, %v1871
      %1938 = vst.msk [vmem:[#allocation4 + $0x7c] sm:$0xf] %vm1906, %v1873
      %v1939 = vrot.slane %v489, 2
      %v1940 = vrot.slane %v490, 2
      %v1941 = vsel %vm911, %v1939, %v1940
      %v1942 = vrot.slane %v491, 2
      %v1943 = vsel %vm911, %v1940, %v1942
      %v1946 = vpack.c.bf16 %v1941, %v1941
      %v1947 = vpack.c.bf16 %v1943, %v1943
      %1950 = vrot.lane.b32.xlu0 %v1028, 32
      %v1951 = vpop.permute.xlu0 %1950
      %1952 = vrot.lane.b32.xlu0 %v1029, 32
      %v1953 = vpop.permute.xlu0 %1952
      %1954 = vrot.lane.b32.xlu0 %v1030, 32
      %v1955 = vpop.permute.xlu0 %1954
      %1956 = vrot.lane.b32.xlu0 %v1031, 32
      %v1957 = vpop.permute.xlu0 %1956
      %1958 = vrot.lane.b32.xlu0 %v1032, 32
      %v1959 = vpop.permute.xlu0 %1958
      %1960 = vrot.lane.b32.xlu0 %v1033, 32
      %v1961 = vpop.permute.xlu0 %1960
      %1962 = vrot.lane.b32.xlu0 %v1034, 32
      %v1963 = vpop.permute.xlu0 %1962
      %1964 = vrot.lane.b32.xlu0 %v1035, 32
      %v1965 = vpop.permute.xlu0 %1964
      %1966 = vrot.lane.b32.xlu0 %v1036, 32
      %v1967 = vpop.permute.xlu0 %1966
      %1968 = vrot.lane.b32.xlu0 %v1037, 32
      %v1969 = vpop.permute.xlu0 %1968
      %1970 = vrot.lane.b32.xlu0 %v1038, 32
      %v1971 = vpop.permute.xlu0 %1970
      %1972 = vrot.lane.b32.xlu0 %v1039, 32
      %v1973 = vpop.permute.xlu0 %1972
      %1974 = vrot.lane.b32.xlu0 %v1040, 32
      %v1975 = vpop.permute.xlu0 %1974
      %1976 = vrot.lane.b32.xlu0 %v1041, 32
      %v1977 = vpop.permute.xlu0 %1976
      %1978 = vrot.lane.b32.xlu0 %v1042, 32
      %v1979 = vpop.permute.xlu0 %1978
      %1980 = vrot.lane.b32.xlu0 %v1043, 32
      %v1981 = vpop.permute.xlu0 %1980
      %1982 = vrot.lane.b32.xlu0 %v1044, 32
      %v1983 = vpop.permute.xlu0 %1982
      %1984 = vrot.lane.b32.xlu0 %v1045, 32
      %v1985 = vpop.permute.xlu0 %1984
      %1986 = vrot.lane.b32.xlu0 %v1046, 32
      %v1987 = vpop.permute.xlu0 %1986
      %1988 = vrot.lane.b32.xlu0 %v1047, 32
      %v1989 = vpop.permute.xlu0 %1988
      %1990 = vrot.lane.b32.xlu0 %v1048, 32
      %v1991 = vpop.permute.xlu0 %1990
      %1992 = vrot.lane.b32.xlu0 %v1049, 32
      %v1993 = vpop.permute.xlu0 %1992
      %1994 = vrot.lane.b32.xlu0 %v1050, 32
      %v1995 = vpop.permute.xlu0 %1994
      %1996 = vrot.lane.b32.xlu0 %v1051, 32
      %v1997 = vpop.permute.xlu0 %1996
      %1998 = vrot.lane.b32.xlu0 %v1052, 32
      %v1999 = vpop.permute.xlu0 %1998
      %2000 = vrot.lane.b32.xlu0 %v1053, 32
      %v2001 = vpop.permute.xlu0 %2000
      %2002 = vrot.lane.b32.xlu0 %v1054, 32
      %v2003 = vpop.permute.xlu0 %2002
      %2004 = vrot.lane.b32.xlu0 %v1055, 32
      %v2005 = vpop.permute.xlu0 %2004
      %2006 = vrot.lane.b32.xlu0 %v1530, 32
      %v2007 = vpop.permute.xlu0 %2006
      %2008 = vrot.lane.b32.xlu0 %v1531, 32
      %v2009 = vpop.permute.xlu0 %2008
      %2010 = vrot.lane.b32.xlu0 %v1946, 32
      %v2011 = vpop.permute.xlu0 %2010
      %2012 = vrot.lane.b32.xlu0 %v1947, 32
      %v2013 = vpop.permute.xlu0 %2012
      %vm2046 = vcmask 290048
      %2047 = vst.msk [vmem:[#allocation4] sm:$0xf] %vm2046, %v1951
      %2048 = vst.msk [vmem:[#allocation4 + $0x4] sm:$0xf] %vm2046, %v1953
      %2049 = vst.msk [vmem:[#allocation4 + $0x8] sm:$0xf] %vm2046, %v1955
      %2050 = vst.msk [vmem:[#allocation4 + $0xc] sm:$0xf] %vm2046, %v1957
      %2051 = vst.msk [vmem:[#allocation4 + $0x10] sm:$0xf] %vm2046, %v1959
      %2052 = vst.msk [vmem:[#allocation4 + $0x14] sm:$0xf] %vm2046, %v1961
      %2053 = vst.msk [vmem:[#allocation4 + $0x18] sm:$0xf] %vm2046, %v1963
      %2054 = vst.msk [vmem:[#allocation4 + $0x1c] sm:$0xf] %vm2046, %v1965
      %2055 = vst.msk [vmem:[#allocation4 + $0x20] sm:$0xf] %vm2046, %v1967
      %2056 = vst.msk [vmem:[#allocation4 + $0x24] sm:$0xf] %vm2046, %v1969
      %2057 = vst.msk [vmem:[#allocation4 + $0x28] sm:$0xf] %vm2046, %v1971
      %2058 = vst.msk [vmem:[#allocation4 + $0x2c] sm:$0xf] %vm2046, %v1973
      %2059 = vst.msk [vmem:[#allocation4 + $0x30] sm:$0xf] %vm2046, %v1975
      %2060 = vst.msk [vmem:[#allocation4 + $0x34] sm:$0xf] %vm2046, %v1977
      %2061 = vst.msk [vmem:[#allocation4 + $0x38] sm:$0xf] %vm2046, %v1979
      %2062 = vst.msk [vmem:[#allocation4 + $0x3c] sm:$0xf] %vm2046, %v1981
      %2063 = vst.msk [vmem:[#allocation4 + $0x40] sm:$0xf] %vm2046, %v1983
      %2064 = vst.msk [vmem:[#allocation4 + $0x44] sm:$0xf] %vm2046, %v1985
      %2065 = vst.msk [vmem:[#allocation4 + $0x48] sm:$0xf] %vm2046, %v1987
      %2066 = vst.msk [vmem:[#allocation4 + $0x4c] sm:$0xf] %vm2046, %v1989
      %2067 = vst.msk [vmem:[#allocation4 + $0x50] sm:$0xf] %vm2046, %v1991
      %2068 = vst.msk [vmem:[#allocation4 + $0x54] sm:$0xf] %vm2046, %v1993
      %2069 = vst.msk [vmem:[#allocation4 + $0x58] sm:$0xf] %vm2046, %v1995
      %2070 = vst.msk [vmem:[#allocation4 + $0x5c] sm:$0xf] %vm2046, %v1997
      %2071 = vst.msk [vmem:[#allocation4 + $0x60] sm:$0xf] %vm2046, %v1999
      %2072 = vst.msk [vmem:[#allocation4 + $0x64] sm:$0xf] %vm2046, %v2001
      %2073 = vst.msk [vmem:[#allocation4 + $0x68] sm:$0xf] %vm2046, %v2003
      %2074 = vst.msk [vmem:[#allocation4 + $0x6c] sm:$0xf] %vm2046, %v2005
      %2075 = vst.msk [vmem:[#allocation4 + $0x70] sm:$0xf] %vm2046, %v2007
      %2076 = vst.msk [vmem:[#allocation4 + $0x74] sm:$0xf] %vm2046, %v2009
      %2077 = vst.msk [vmem:[#allocation4 + $0x78] sm:$0xf] %vm2046, %v2011
      %2078 = vst.msk [vmem:[#allocation4 + $0x7c] sm:$0xf] %vm2046, %v2013
      %v2079 = vld [vmem:[#allocation4] sm:$0xf]
      %v2080 = vld [vmem:[#allocation4 + $0x4] sm:$0xf]
      %v2081 = vld [vmem:[#allocation4 + $0x8] sm:$0xf]
      %v2082 = vld [vmem:[#allocation4 + $0xc] sm:$0xf]
      %v2083 = vld [vmem:[#allocation4 + $0x10] sm:$0xf]
      %v2084 = vld [vmem:[#allocation4 + $0x14] sm:$0xf]
      %v2085 = vld [vmem:[#allocation4 + $0x18] sm:$0xf]
      %v2086 = vld [vmem:[#allocation4 + $0x1c] sm:$0xf]
      %v2087 = vld [vmem:[#allocation4 + $0x20] sm:$0xf]
      %v2088 = vld [vmem:[#allocation4 + $0x24] sm:$0xf]
      %v2089 = vld [vmem:[#allocation4 + $0x28] sm:$0xf]
      %v2090 = vld [vmem:[#allocation4 + $0x2c] sm:$0xf]
      %v2091 = vld [vmem:[#allocation4 + $0x30] sm:$0xf]
      %v2092 = vld [vmem:[#allocation4 + $0x34] sm:$0xf]
      %v2093 = vld [vmem:[#allocation4 + $0x38] sm:$0xf]
      %v2094 = vld [vmem:[#allocation4 + $0x3c] sm:$0xf]
      %v2095 = vld [vmem:[#allocation4 + $0x40] sm:$0xf]
      %v2096 = vld [vmem:[#allocation4 + $0x44] sm:$0xf]
      %v2097 = vld [vmem:[#allocation4 + $0x48] sm:$0xf]
      %v2098 = vld [vmem:[#allocation4 + $0x4c] sm:$0xf]
      %v2099 = vld [vmem:[#allocation4 + $0x50] sm:$0xf]
      %v2100 = vld [vmem:[#allocation4 + $0x54] sm:$0xf]
      %v2101 = vld [vmem:[#allocation4 + $0x58] sm:$0xf]
      %v2102 = vld [vmem:[#allocation4 + $0x5c] sm:$0xf]
      %v2103 = vld [vmem:[#allocation4 + $0x60] sm:$0xf]
      %v2104 = vld [vmem:[#allocation4 + $0x64] sm:$0xf]
      %v2105 = vld [vmem:[#allocation4 + $0x68] sm:$0xf]
      %v2106 = vld [vmem:[#allocation4 + $0x6c] sm:$0xf]
      %v2107 = vld [vmem:[#allocation4 + $0x70] sm:$0xf]
      %v2108 = vld [vmem:[#allocation4 + $0x74] sm:$0xf]
      %v2109 = vld [vmem:[#allocation4 + $0x78] sm:$0xf]
      %v2110 = vld [vmem:[#allocation4 + $0x7c] sm:$0xf]
      %v2111 = vld [vmem:[%s1] sm:$0xf]
      %v2112 = vld [vmem:[%s1 + $0x4] sm:$0xf]
      %v2113 = vld [vmem:[%s1 + $0x8] sm:$0xf]
      %v2114 = vld [vmem:[%s1 + $0xc] sm:$0xf]
      %v2115 = vld [vmem:[%s1 + $0x10] sm:$0x3]
      %v2116 = vld [vmem:[%s3] sm:$0x1]
      %v2118 = vperm.slane %v2116, 0
      %v2152 = vunpack.c.l.b16 %v2079
      %v2153 = vunpack.c.l.b16 %v2080
      %v2154 = vunpack.c.l.b16 %v2081
      %v2155 = vunpack.c.l.b16 %v2082
      %v2156 = vunpack.c.l.b16 %v2083
      %v2157 = vunpack.c.l.b16 %v2084
      %v2158 = vunpack.c.l.b16 %v2085
      %v2159 = vunpack.c.l.b16 %v2086
      %v2160 = vunpack.c.l.b16 %v2087
      %v2161 = vunpack.c.l.b16 %v2088
      %v2162 = vunpack.c.l.b16 %v2089
      %v2163 = vunpack.c.l.b16 %v2090
      %v2164 = vunpack.c.l.b16 %v2091
      %v2165 = vunpack.c.l.b16 %v2092
      %v2166 = vunpack.c.l.b16 %v2093
      %v2167 = vunpack.c.l.b16 %v2094
      %v2168 = vunpack.c.l.b16 %v2095
      %v2169 = vunpack.c.l.b16 %v2096
      %v2170 = vunpack.c.l.b16 %v2097
      %v2171 = vunpack.c.l.b16 %v2098
      %v2172 = vunpack.c.l.b16 %v2099
      %v2173 = vunpack.c.l.b16 %v2100
      %v2174 = vunpack.c.l.b16 %v2101
      %v2175 = vunpack.c.l.b16 %v2102
      %v2176 = vunpack.c.l.b16 %v2103
      %v2177 = vunpack.c.l.b16 %v2104
      %v2178 = vunpack.c.l.b16 %v2105
      %v2179 = vunpack.c.l.b16 %v2106
      %v2180 = vunpack.c.l.b16 %v2107
      %v2181 = vunpack.c.l.b16 %v2108
      %v2182 = vunpack.c.l.b16 %v2109
      %v2183 = vunpack.c.l.b16 %v2110
      %v2184 = vpack.c.b16 %v2153, %v2152
      %v2185 = vpack.c.b16 %v2155, %v2154
      %v2186 = vpack.c.b16 %v2157, %v2156
      %v2187 = vpack.c.b16 %v2159, %v2158
      %v2188 = vpack.c.b16 %v2161, %v2160
      %v2189 = vpack.c.b16 %v2163, %v2162
      %v2190 = vpack.c.b16 %v2165, %v2164
      %v2191 = vpack.c.b16 %v2167, %v2166
      %v2192 = vpack.c.b16 %v2169, %v2168
      %v2193 = vpack.c.b16 %v2171, %v2170
      %v2194 = vpack.c.b16 %v2173, %v2172
      %v2195 = vpack.c.b16 %v2175, %v2174
      %v2196 = vpack.c.b16 %v2177, %v2176
      %v2197 = vpack.c.b16 %v2179, %v2178
      %v2198 = vpack.c.b16 %v2181, %v2180
      %v2199 = vpack.c.b16 %v2183, %v2182
      %v2205 = vunpack.c.l.b16 %v2111
      %v2206 = vunpack.c.l.b16 %v2112
      %v2207 = vunpack.c.l.b16 %v2113
      %v2208 = vunpack.c.l.b16 %v2114
      %v2209 = vunpack.c.l.b16 %v2115
      %v2210 = vpack.c.b16 %v2206, %v2205
      %v2211 = vpack.c.b16 %v2208, %v2207
      %v2212 = vpack.c.b16 %v2209, %v2209
      %vm2215 = vcmask 293888
      %v2217 = vsel %vm2215, %v2184, 0
      %v2220 = vsel %vm2215, %v2185, 0
      %v2223 = vsel %vm2215, %v2186, 0
      %v2226 = vsel %vm2215, %v2187, 0
      %v2229 = vsel %vm2215, %v2188, 0
      %v2232 = vsel %vm2215, %v2189, 0
      %v2235 = vsel %vm2215, %v2190, 0
      %v2238 = vsel %vm2215, %v2191, 0
      %v2241 = vsel %vm2215, %v2192, 0
      %v2244 = vsel %vm2215, %v2193, 0
      %v2247 = vsel %vm2215, %v2194, 0
      %v2250 = vsel %vm2215, %v2195, 0
      %v2253 = vsel %vm2215, %v2196, 0
      %v2256 = vsel %vm2215, %v2197, 0
      %v2259 = vsel %vm2215, %v2198, 0
      %v2262 = vsel %vm2215, %v2199, 0
      %vm2264 = vcmask 1041408
      %v2266 = vsel %vm2264, %v2212, 0
      %2268 = vmatpush.bf16.msra.mxu0 0
      %2269 = vmatpush.bf16.msra.mxu0 0
      %2270 = vmatpush.bf16.msra.mxu0 0
      %2271 = vmatpush.bf16.msra.mxu0 0
      %2272 = vmatpush.bf16.msra.mxu0 0
      %2273 = vmatpush.bf16.msra.mxu0 %v2266
      %2274 = vmatpush.bf16.msra.mxu0 %v2211
      %2275 = vmatpush.bf16.msra.mxu0 %v2210
      %2276 = vmatmul.bf16.gmra.mxu0 %v2217
      %v2277 = vpop.f32.mrf.mxu0
      %v2278 = vadd.f32 %v2118, %v2277
      %v2279 = vpop.f32.mrf.mxu0
      %v2280 = vadd.f32 %v2118, %v2279
      %2281 = vmatmul.bf16.gmra.mxu0 %v2220
      %v2282 = vpop.f32.mrf.mxu0
      %v2283 = vadd.f32 %v2118, %v2282
      %v2284 = vpop.f32.mrf.mxu0
      %v2285 = vadd.f32 %v2118, %v2284
      %2286 = vmatmul.bf16.gmra.mxu0 %v2223
      %v2287 = vpop.f32.mrf.mxu0
      %v2288 = vadd.f32 %v2118, %v2287
      %v2289 = vpop.f32.mrf.mxu0
      %v2290 = vadd.f32 %v2118, %v2289
      %2291 = vmatmul.bf16.gmra.mxu0 %v2226
      %v2292 = vpop.f32.mrf.mxu0
      %v2293 = vadd.f32 %v2118, %v2292
      %v2294 = vpop.f32.mrf.mxu0
      %v2295 = vadd.f32 %v2118, %v2294
      %2296 = vmatmul.bf16.gmra.mxu0 %v2229
      %v2297 = vpop.f32.mrf.mxu0
      %v2298 = vadd.f32 %v2118, %v2297
      %v2299 = vpop.f32.mrf.mxu0
      %v2300 = vadd.f32 %v2118, %v2299
      %2301 = vmatmul.bf16.gmra.mxu0 %v2232
      %v2302 = vpop.f32.mrf.mxu0
      %v2303 = vadd.f32 %v2118, %v2302
      %v2304 = vpop.f32.mrf.mxu0
      %v2305 = vadd.f32 %v2118, %v2304
      %2306 = vmatmul.bf16.gmra.mxu0 %v2235
      %v2307 = vpop.f32.mrf.mxu0
      %v2308 = vadd.f32 %v2118, %v2307
      %v2309 = vpop.f32.mrf.mxu0
      %v2310 = vadd.f32 %v2118, %v2309
      %2311 = vmatmul.bf16.gmra.mxu0 %v2238
      %v2312 = vpop.f32.mrf.mxu0
      %v2313 = vadd.f32 %v2118, %v2312
      %v2314 = vpop.f32.mrf.mxu0
      %v2315 = vadd.f32 %v2118, %v2314
      %2316 = vmatmul.bf16.gmra.mxu0 %v2241
      %v2317 = vpop.f32.mrf.mxu0
      %v2318 = vadd.f32 %v2118, %v2317
      %v2319 = vpop.f32.mrf.mxu0
      %v2320 = vadd.f32 %v2118, %v2319
      %2321 = vmatmul.bf16.gmra.mxu0 %v2244
      %v2322 = vpop.f32.mrf.mxu0
      %v2323 = vadd.f32 %v2118, %v2322
      %v2324 = vpop.f32.mrf.mxu0
      %v2325 = vadd.f32 %v2118, %v2324
      %2326 = vmatmul.bf16.gmra.mxu0 %v2247
      %v2327 = vpop.f32.mrf.mxu0
      %v2328 = vadd.f32 %v2118, %v2327
      %v2329 = vpop.f32.mrf.mxu0
      %v2330 = vadd.f32 %v2118, %v2329
      %2331 = vmatmul.bf16.gmra.mxu0 %v2250
      %v2332 = vpop.f32.mrf.mxu0
      %v2333 = vadd.f32 %v2118, %v2332
      %v2334 = vpop.f32.mrf.mxu0
      %v2335 = vadd.f32 %v2118, %v2334
      %2336 = vmatmul.bf16.gmra.mxu0 %v2253
      %v2337 = vpop.f32.mrf.mxu0
      %v2338 = vadd.f32 %v2118, %v2337
      %v2339 = vpop.f32.mrf.mxu0
      %v2340 = vadd.f32 %v2118, %v2339
      %2341 = vmatmul.bf16.gmra.mxu0 %v2256
      %v2342 = vpop.f32.mrf.mxu0
      %v2343 = vadd.f32 %v2118, %v2342
      %v2344 = vpop.f32.mrf.mxu0
      %v2345 = vadd.f32 %v2118, %v2344
      %2346 = vmatmul.bf16.gmra.mxu0 %v2259
      %v2347 = vpop.f32.mrf.mxu0
      %v2348 = vadd.f32 %v2118, %v2347
      %v2349 = vpop.f32.mrf.mxu0
      %v2350 = vadd.f32 %v2118, %v2349
      %2351 = vmatmul.bf16.gmra.mxu0 %v2262
      %v2352 = vpop.f32.mrf.mxu0
      %v2353 = vadd.f32 %v2118, %v2352
      %v2354 = vpop.f32.mrf.mxu0
      %v2355 = vadd.f32 %v2118, %v2354
      %2356 = vdwg.mxu0
      %v2357 = vmax.f32 %v2278, 0.0
      %v2358 = vmax.f32 %v2280, 0.0
      %v2359 = vmax.f32 %v2283, 0.0
      %v2360 = vmax.f32 %v2285, 0.0
      %v2361 = vmax.f32 %v2288, 0.0
      %v2362 = vmax.f32 %v2290, 0.0
      %v2363 = vmax.f32 %v2293, 0.0
      %v2364 = vmax.f32 %v2295, 0.0
      %v2365 = vmax.f32 %v2298, 0.0
      %v2366 = vmax.f32 %v2300, 0.0
      %v2367 = vmax.f32 %v2303, 0.0
      %v2368 = vmax.f32 %v2305, 0.0
      %v2369 = vmax.f32 %v2308, 0.0
      %v2370 = vmax.f32 %v2310, 0.0
      %v2371 = vmax.f32 %v2313, 0.0
      %v2372 = vmax.f32 %v2315, 0.0
      %v2373 = vmax.f32 %v2318, 0.0
      %v2374 = vmax.f32 %v2320, 0.0
      %v2375 = vmax.f32 %v2323, 0.0
      %v2376 = vmax.f32 %v2325, 0.0
      %v2377 = vmax.f32 %v2328, 0.0
      %v2378 = vmax.f32 %v2330, 0.0
      %v2379 = vmax.f32 %v2333, 0.0
      %v2380 = vmax.f32 %v2335, 0.0
      %v2381 = vmax.f32 %v2338, 0.0
      %v2382 = vmax.f32 %v2340, 0.0
      %v2383 = vmax.f32 %v2343, 0.0
      %v2384 = vmax.f32 %v2345, 0.0
      %v2385 = vmax.f32 %v2348, 0.0
      %v2386 = vmax.f32 %v2350, 0.0
      %v2387 = vmax.f32 %v2353, 0.0
      %v2388 = vmax.f32 %v2355, 0.0
      %s2389 = scalar_lea.vmem [#allocation3], 24
      %2390 = vst.msk [vmem:[%s2389 + $0x1] sm:$0xff] %vm405, %v2357
      %2391 = vst.msk [vmem:[%s2389 + $0x9] sm:$0xff] %vm405, %v2358
      %2392 = vst.msk [vmem:[%s2389 + $0x19] sm:$0xff] %vm405, %v2359
      %2393 = vst.msk [vmem:[%s2389 + $0x21] sm:$0xff] %vm405, %v2360
      %2394 = vst.msk [vmem:[%s2389 + $0x31] sm:$0xff] %vm405, %v2361
      %2395 = vst.msk [vmem:[%s2389 + $0x39] sm:$0xff] %vm405, %v2362
      %2396 = vst.msk [vmem:[%s2389 + $0x49] sm:$0xff] %vm405, %v2363
      %2397 = vst.msk [vmem:[%s2389 + $0x51] sm:$0xff] %vm405, %v2364
      %2398 = vst.msk [vmem:[%s2389 + $0x61] sm:$0xff] %vm405, %v2365
      %2399 = vst.msk [vmem:[%s2389 + $0x69] sm:$0xff] %vm405, %v2366
      %2400 = vst.msk [vmem:[%s2389 + $0x79] sm:$0xff] %vm405, %v2367
      %2401 = vst.msk [vmem:[%s2389 + $0x81] sm:$0xff] %vm405, %v2368
      %2402 = vst.msk [vmem:[%s2389 + $0x91] sm:$0xff] %vm405, %v2369
      %2403 = vst.msk [vmem:[%s2389 + $0x99] sm:$0xff] %vm405, %v2370
      %2404 = vst.msk [vmem:[%s2389 + $0xa9] sm:$0xff] %vm405, %v2371
      %2405 = vst.msk [vmem:[%s2389 + $0xb1] sm:$0xff] %vm405, %v2372
      %2406 = vst.msk [vmem:[%s2389 + $0xc1] sm:$0xff] %vm405, %v2373
      %2407 = vst.msk [vmem:[%s2389 + $0xc9] sm:$0xff] %vm405, %v2374
      %2408 = vst.msk [vmem:[%s2389 + $0xd9] sm:$0xff] %vm405, %v2375
      %2409 = vst.msk [vmem:[%s2389 + $0xe1] sm:$0xff] %vm405, %v2376
      %2410 = vst.msk [vmem:[%s2389 + $0xf1] sm:$0xff] %vm405, %v2377
      %2411 = vst.msk [vmem:[%s2389 + $0xf9] sm:$0xff] %vm405, %v2378
      %2412 = vst.msk [vmem:[%s2389 + $0x109] sm:$0xff] %vm405, %v2379
      %2413 = vst.msk [vmem:[%s2389 + $0x111] sm:$0xff] %vm405, %v2380
      %2414 = vst.msk [vmem:[%s2389 + $0x121] sm:$0xff] %vm405, %v2381
      %2415 = vst.msk [vmem:[%s2389 + $0x129] sm:$0xff] %vm405, %v2382
      %2416 = vst.msk [vmem:[%s2389 + $0x139] sm:$0xff] %vm405, %v2383
      %2417 = vst.msk [vmem:[%s2389 + $0x141] sm:$0xff] %vm405, %v2384
      %2418 = vst.msk [vmem:[%s2389 + $0x151] sm:$0xff] %vm405, %v2385
      %2419 = vst.msk [vmem:[%s2389 + $0x159] sm:$0xff] %vm405, %v2386
      %2420 = vst.msk [vmem:[%s2389 + $0x169] sm:$0xff] %vm405, %v2387
      %2421 = vst.msk [vmem:[%s2389 + $0x171] sm:$0xff] %vm405, %v2388
      %v2422 = vld [vmem:[#allocation3] sm:$0xff]
      %v2423 = vld [vmem:[#allocation3 + $0x8] sm:$0xff]
      %v2424 = vld [vmem:[#allocation3 + $0x10] sm:$0x3]
      %v2425 = vld [vmem:[#allocation3 + $0x18] sm:$0xff]
      %v2426 = vld [vmem:[#allocation3 + $0x20] sm:$0xff]
      %v2427 = vld [vmem:[#allocation3 + $0x28] sm:$0x3]
      %v2428 = vld [vmem:[#allocation3 + $0x30] sm:$0xff]
      %v2429 = vld [vmem:[#allocation3 + $0x38] sm:$0xff]
      %v2430 = vld [vmem:[#allocation3 + $0x40] sm:$0x3]
      %v2431 = vld [vmem:[#allocation3 + $0x48] sm:$0xff]
      %v2432 = vld [vmem:[#allocation3 + $0x50] sm:$0xff]
      %v2433 = vld [vmem:[#allocation3 + $0x58] sm:$0x3]
      %v2434 = vld [vmem:[#allocation3 + $0x60] sm:$0xff]
      %v2435 = vld [vmem:[#allocation3 + $0x68] sm:$0xff]
      %v2436 = vld [vmem:[#allocation3 + $0x70] sm:$0x3]
      %v2437 = vld [vmem:[#allocation3 + $0x78] sm:$0xff]
      %v2438 = vld [vmem:[#allocation3 + $0x80] sm:$0xff]
      %v2439 = vld [vmem:[#allocation3 + $0x88] sm:$0x3]
      %v2440 = vld [vmem:[#allocation3 + $0x90] sm:$0xff]
      %v2441 = vld [vmem:[#allocation3 + $0x98] sm:$0xff]
      %v2442 = vld [vmem:[#allocation3 + $0xa0] sm:$0x3]
      %v2443 = vld [vmem:[#allocation3 + $0xa8] sm:$0xff]
      %v2444 = vld [vmem:[#allocation3 + $0xb0] sm:$0xff]
      %v2445 = vld [vmem:[#allocation3 + $0xb8] sm:$0x3]
      %v2446 = vld [vmem:[#allocation3 + $0xc0] sm:$0xff]
      %v2447 = vld [vmem:[#allocation3 + $0xc8] sm:$0xff]
      %v2448 = vld [vmem:[#allocation3 + $0xd0] sm:$0x3]
      %v2449 = vld [vmem:[#allocation3 + $0xd8] sm:$0xff]
      %v2450 = vld [vmem:[#allocation3 + $0xe0] sm:$0xff]
      %v2451 = vld [vmem:[#allocation3 + $0xe8] sm:$0x3]
      %v2452 = vld [vmem:[#allocation3 + $0xf0] sm:$0xff]
      %v2453 = vld [vmem:[#allocation3 + $0xf8] sm:$0xff]
      %v2454 = vld [vmem:[#allocation3 + $0x100] sm:$0x3]
      %v2455 = vld [vmem:[#allocation3 + $0x108] sm:$0xff]
      %v2456 = vld [vmem:[#allocation3 + $0x110] sm:$0xff]
      %v2457 = vld [vmem:[#allocation3 + $0x118] sm:$0x3]
      %v2458 = vld [vmem:[#allocation3 + $0x120] sm:$0xff]
      %v2459 = vld [vmem:[#allocation3 + $0x128] sm:$0xff]
      %v2460 = vld [vmem:[#allocation3 + $0x130] sm:$0x3]
      %v2461 = vld [vmem:[#allocation3 + $0x138] sm:$0xff]
      %v2462 = vld [vmem:[#allocation3 + $0x140] sm:$0xff]
      %v2463 = vld [vmem:[#allocation3 + $0x148] sm:$0x3]
      %v2464 = vld [vmem:[#allocation3 + $0x150] sm:$0xff]
      %v2465 = vld [vmem:[#allocation3 + $0x158] sm:$0xff]
      %v2466 = vld [vmem:[#allocation3 + $0x160] sm:$0x3]
      %v2467 = vld [vmem:[#allocation3 + $0x168] sm:$0xff]
      %v2468 = vld [vmem:[#allocation3 + $0x170] sm:$0xff]
      %v2469 = vld [vmem:[#allocation3 + $0x178] sm:$0x3]
      %v2470 = vld [vmem:[#allocation3 + $0x180] sm:$0xff]
      %v2471 = vld [vmem:[#allocation3 + $0x188] sm:$0xff]
      %v2472 = vld [vmem:[#allocation3 + $0x190] sm:$0x3]
      %v2473 = vld [vmem:[#allocation3 + $0x198] sm:$0xff]
      %v2474 = vld [vmem:[#allocation3 + $0x1a0] sm:$0xff]
      %v2475 = vld [vmem:[#allocation3 + $0x1a8] sm:$0x3]
      %v2476 = vpack.c.bf16 %v2422, %v2422
      %v2477 = vpack.c.bf16 %v2423, %v2423
      %v2478 = vpack.c.bf16 %v2425, %v2425
      %v2479 = vpack.c.bf16 %v2426, %v2426
      %v2480 = vpack.c.bf16 %v2428, %v2428
      %v2481 = vpack.c.bf16 %v2429, %v2429
      %v2482 = vpack.c.bf16 %v2431, %v2431
      %v2483 = vpack.c.bf16 %v2432, %v2432
      %v2484 = vpack.c.bf16 %v2434, %v2434
      %v2485 = vpack.c.bf16 %v2435, %v2435
      %v2486 = vpack.c.bf16 %v2437, %v2437
      %v2487 = vpack.c.bf16 %v2438, %v2438
      %v2488 = vpack.c.bf16 %v2440, %v2440
      %v2489 = vpack.c.bf16 %v2441, %v2441
      %v2490 = vpack.c.bf16 %v2443, %v2443
      %v2491 = vpack.c.bf16 %v2444, %v2444
      %v2492 = vpack.c.bf16 %v2446, %v2446
      %v2493 = vpack.c.bf16 %v2447, %v2447
      %v2494 = vpack.c.bf16 %v2449, %v2449
      %v2495 = vpack.c.bf16 %v2450, %v2450
      %v2496 = vpack.c.bf16 %v2452, %v2452
      %v2497 = vpack.c.bf16 %v2453, %v2453
      %v2498 = vpack.c.bf16 %v2455, %v2455
      %v2499 = vpack.c.bf16 %v2456, %v2456
      %v2500 = vpack.c.bf16 %v2458, %v2458
      %v2501 = vpack.c.bf16 %v2459, %v2459
      %v2502 = vpack.c.bf16 %v2461, %v2461
      %v2503 = vpack.c.bf16 %v2462, %v2462
      %v2504 = vpack.c.bf16 %v2464, %v2464
      %v2505 = vpack.c.bf16 %v2465, %v2465
      %v2506 = vpack.c.bf16 %v2467, %v2467
      %v2507 = vpack.c.bf16 %v2468, %v2468
      %2508 = vst.msk [vmem:[#allocation5] sm:$0xf] %vm524, %v2476
      %2509 = vst.msk [vmem:[#allocation5 + $0x4] sm:$0xf] %vm524, %v2477
      %2510 = vst.msk [vmem:[#allocation5 + $0x8] sm:$0xf] %vm524, %v2478
      %2511 = vst.msk [vmem:[#allocation5 + $0xc] sm:$0xf] %vm524, %v2479
      %2512 = vst.msk [vmem:[#allocation5 + $0x10] sm:$0xf] %vm524, %v2480
      %2513 = vst.msk [vmem:[#allocation5 + $0x14] sm:$0xf] %vm524, %v2481
      %2514 = vst.msk [vmem:[#allocation5 + $0x18] sm:$0xf] %vm524, %v2482
      %2515 = vst.msk [vmem:[#allocation5 + $0x1c] sm:$0xf] %vm524, %v2483
      %2516 = vst.msk [vmem:[#allocation5 + $0x20] sm:$0xf] %vm524, %v2484
      %2517 = vst.msk [vmem:[#allocation5 + $0x24] sm:$0xf] %vm524, %v2485
      %2518 = vst.msk [vmem:[#allocation5 + $0x28] sm:$0xf] %vm524, %v2486
      %2519 = vst.msk [vmem:[#allocation5 + $0x2c] sm:$0xf] %vm524, %v2487
      %2520 = vst.msk [vmem:[#allocation5 + $0x30] sm:$0xf] %vm524, %v2488
      %2521 = vst.msk [vmem:[#allocation5 + $0x34] sm:$0xf] %vm524, %v2489
      %2522 = vst.msk [vmem:[#allocation5 + $0x38] sm:$0xf] %vm524, %v2490
      %2523 = vst.msk [vmem:[#allocation5 + $0x3c] sm:$0xf] %vm524, %v2491
      %2524 = vst.msk [vmem:[#allocation5 + $0x40] sm:$0xf] %vm524, %v2492
      %2525 = vst.msk [vmem:[#allocation5 + $0x44] sm:$0xf] %vm524, %v2493
      %2526 = vst.msk [vmem:[#allocation5 + $0x48] sm:$0xf] %vm524, %v2494
      %2527 = vst.msk [vmem:[#allocation5 + $0x4c] sm:$0xf] %vm524, %v2495
      %2528 = vst.msk [vmem:[#allocation5 + $0x50] sm:$0xf] %vm524, %v2496
      %2529 = vst.msk [vmem:[#allocation5 + $0x54] sm:$0xf] %vm524, %v2497
      %2530 = vst.msk [vmem:[#allocation5 + $0x58] sm:$0xf] %vm524, %v2498
      %2531 = vst.msk [vmem:[#allocation5 + $0x5c] sm:$0xf] %vm524, %v2499
      %2532 = vst.msk [vmem:[#allocation5 + $0x60] sm:$0xf] %vm524, %v2500
      %2533 = vst.msk [vmem:[#allocation5 + $0x64] sm:$0xf] %vm524, %v2501
      %2534 = vst.msk [vmem:[#allocation5 + $0x68] sm:$0xf] %vm524, %v2502
      %2535 = vst.msk [vmem:[#allocation5 + $0x6c] sm:$0xf] %vm524, %v2503
      %2536 = vst.msk [vmem:[#allocation5 + $0x70] sm:$0xf] %vm524, %v2504
      %2537 = vst.msk [vmem:[#allocation5 + $0x74] sm:$0xf] %vm524, %v2505
      %2538 = vst.msk [vmem:[#allocation5 + $0x78] sm:$0xf] %vm524, %v2506
      %2539 = vst.msk [vmem:[#allocation5 + $0x7c] sm:$0xf] %vm524, %v2507
      %v2588 = vrot.slane %v2422, 1
      %v2589 = vrot.slane %v2423, 1
      %v2590 = vsel %vm605, %v2588, %v2589
      %v2591 = vrot.slane %v2424, 1
      %v2592 = vsel %vm605, %v2589, %v2591
      %v2593 = vrot.slane %v2425, 1
      %v2594 = vrot.slane %v2426, 1
      %v2595 = vsel %vm605, %v2593, %v2594
      %v2596 = vrot.slane %v2427, 1
      %v2597 = vsel %vm605, %v2594, %v2596
      %v2598 = vrot.slane %v2428, 1
      %v2599 = vrot.slane %v2429, 1
      %v2600 = vsel %vm605, %v2598, %v2599
      %v2601 = vrot.slane %v2430, 1
      %v2602 = vsel %vm605, %v2599, %v2601
      %v2603 = vrot.slane %v2431, 1
      %v2604 = vrot.slane %v2432, 1
      %v2605 = vsel %vm605, %v2603, %v2604
      %v2606 = vrot.slane %v2433, 1
      %v2607 = vsel %vm605, %v2604, %v2606
      %v2608 = vrot.slane %v2434, 1
      %v2609 = vrot.slane %v2435, 1
      %v2610 = vsel %vm605, %v2608, %v2609
      %v2611 = vrot.slane %v2436, 1
      %v2612 = vsel %vm605, %v2609, %v2611
      %v2613 = vrot.slane %v2437, 1
      %v2614 = vrot.slane %v2438, 1
      %v2615 = vsel %vm605, %v2613, %v2614
      %v2616 = vrot.slane %v2439, 1
      %v2617 = vsel %vm605, %v2614, %v2616
      %v2618 = vrot.slane %v2440, 1
      %v2619 = vrot.slane %v2441, 1
      %v2620 = vsel %vm605, %v2618, %v2619
      %v2621 = vrot.slane %v2442, 1
      %v2622 = vsel %vm605, %v2619, %v2621
      %v2623 = vrot.slane %v2443, 1
      %v2624 = vrot.slane %v2444, 1
      %v2625 = vsel %vm605, %v2623, %v2624
      %v2626 = vrot.slane %v2445, 1
      %v2627 = vsel %vm605, %v2624, %v2626
      %v2628 = vrot.slane %v2446, 1
      %v2629 = vrot.slane %v2447, 1
      %v2630 = vsel %vm605, %v2628, %v2629
      %v2631 = vrot.slane %v2448, 1
      %v2632 = vsel %vm605, %v2629, %v2631
      %v2633 = vrot.slane %v2449, 1
      %v2634 = vrot.slane %v2450, 1
      %v2635 = vsel %vm605, %v2633, %v2634
      %v2636 = vrot.slane %v2451, 1
      %v2637 = vsel %vm605, %v2634, %v2636
      %v2638 = vrot.slane %v2452, 1
      %v2639 = vrot.slane %v2453, 1
      %v2640 = vsel %vm605, %v2638, %v2639
      %v2641 = vrot.slane %v2454, 1
      %v2642 = vsel %vm605, %v2639, %v2641
      %v2643 = vrot.slane %v2455, 1
      %v2644 = vrot.slane %v2456, 1
      %v2645 = vsel %vm605, %v2643, %v2644
      %v2646 = vrot.slane %v2457, 1
      %v2647 = vsel %vm605, %v2644, %v2646
      %v2648 = vrot.slane %v2458, 1
      %v2649 = vrot.slane %v2459, 1
      %v2650 = vsel %vm605, %v2648, %v2649
      %v2651 = vrot.slane %v2460, 1
      %v2652 = vsel %vm605, %v2649, %v2651
      %v2653 = vrot.slane %v2461, 1
      %v2654 = vrot.slane %v2462, 1
      %v2655 = vsel %vm605, %v2653, %v2654
      %v2656 = vrot.slane %v2463, 1
      %v2657 = vsel %vm605, %v2654, %v2656
      %v2658 = vrot.slane %v2464, 1
      %v2659 = vrot.slane %v2465, 1
      %v2660 = vsel %vm605, %v2658, %v2659
      %v2661 = vrot.slane %v2466, 1
      %v2662 = vsel %vm605, %v2659, %v2661
      %v2663 = vrot.slane %v2467, 1
      %v2664 = vrot.slane %v2468, 1
      %v2665 = vsel %vm605, %v2663, %v2664
      %v2666 = vrot.slane %v2469, 1
      %v2667 = vsel %vm605, %v2664, %v2666
      %v2700 = vpack.c.bf16 %v2590, %v2590
      %v2701 = vpack.c.bf16 %v2592, %v2592
      %v2702 = vpack.c.bf16 %v2595, %v2595
      %v2703 = vpack.c.bf16 %v2597, %v2597
      %v2704 = vpack.c.bf16 %v2600, %v2600
      %v2705 = vpack.c.bf16 %v2602, %v2602
      %v2706 = vpack.c.bf16 %v2605, %v2605
      %v2707 = vpack.c.bf16 %v2607, %v2607
      %v2708 = vpack.c.bf16 %v2610, %v2610
      %v2709 = vpack.c.bf16 %v2612, %v2612
      %v2710 = vpack.c.bf16 %v2615, %v2615
      %v2711 = vpack.c.bf16 %v2617, %v2617
      %v2712 = vpack.c.bf16 %v2620, %v2620
      %v2713 = vpack.c.bf16 %v2622, %v2622
      %v2714 = vpack.c.bf16 %v2625, %v2625
      %v2715 = vpack.c.bf16 %v2627, %v2627
      %v2716 = vpack.c.bf16 %v2630, %v2630
      %v2717 = vpack.c.bf16 %v2632, %v2632
      %v2718 = vpack.c.bf16 %v2635, %v2635
      %v2719 = vpack.c.bf16 %v2637, %v2637
      %v2720 = vpack.c.bf16 %v2640, %v2640
      %v2721 = vpack.c.bf16 %v2642, %v2642
      %v2722 = vpack.c.bf16 %v2645, %v2645
      %v2723 = vpack.c.bf16 %v2647, %v2647
      %v2724 = vpack.c.bf16 %v2650, %v2650
      %v2725 = vpack.c.bf16 %v2652, %v2652
      %v2726 = vpack.c.bf16 %v2655, %v2655
      %v2727 = vpack.c.bf16 %v2657, %v2657
      %v2728 = vpack.c.bf16 %v2660, %v2660
      %v2729 = vpack.c.bf16 %v2662, %v2662
      %v2730 = vpack.c.bf16 %v2665, %v2665
      %v2731 = vpack.c.bf16 %v2667, %v2667
      %2764 = vrot.lane.b32.xlu0 %v2700, 4
      %v2765 = vpop.permute.xlu0 %2764
      %2766 = vrot.lane.b32.xlu0 %v2701, 4
      %v2767 = vpop.permute.xlu0 %2766
      %2768 = vrot.lane.b32.xlu0 %v2702, 4
      %v2769 = vpop.permute.xlu0 %2768
      %2770 = vrot.lane.b32.xlu0 %v2703, 4
      %v2771 = vpop.permute.xlu0 %2770
      %2772 = vrot.lane.b32.xlu0 %v2704, 4
      %v2773 = vpop.permute.xlu0 %2772
      %2774 = vrot.lane.b32.xlu0 %v2705, 4
      %v2775 = vpop.permute.xlu0 %2774
      %2776 = vrot.lane.b32.xlu0 %v2706, 4
      %v2777 = vpop.permute.xlu0 %2776
      %2778 = vrot.lane.b32.xlu0 %v2707, 4
      %v2779 = vpop.permute.xlu0 %2778
      %2780 = vrot.lane.b32.xlu0 %v2708, 4
      %v2781 = vpop.permute.xlu0 %2780
      %2782 = vrot.lane.b32.xlu0 %v2709, 4
      %v2783 = vpop.permute.xlu0 %2782
      %2784 = vrot.lane.b32.xlu0 %v2710, 4
      %v2785 = vpop.permute.xlu0 %2784
      %2786 = vrot.lane.b32.xlu0 %v2711, 4
      %v2787 = vpop.permute.xlu0 %2786
      %2788 = vrot.lane.b32.xlu0 %v2712, 4
      %v2789 = vpop.permute.xlu0 %2788
      %2790 = vrot.lane.b32.xlu0 %v2713, 4
      %v2791 = vpop.permute.xlu0 %2790
      %2792 = vrot.lane.b32.xlu0 %v2714, 4
      %v2793 = vpop.permute.xlu0 %2792
      %2794 = vrot.lane.b32.xlu0 %v2715, 4
      %v2795 = vpop.permute.xlu0 %2794
      %2796 = vrot.lane.b32.xlu0 %v2716, 4
      %v2797 = vpop.permute.xlu0 %2796
      %2798 = vrot.lane.b32.xlu0 %v2717, 4
      %v2799 = vpop.permute.xlu0 %2798
      %2800 = vrot.lane.b32.xlu0 %v2718, 4
      %v2801 = vpop.permute.xlu0 %2800
      %2802 = vrot.lane.b32.xlu0 %v2719, 4
      %v2803 = vpop.permute.xlu0 %2802
      %2804 = vrot.lane.b32.xlu0 %v2720, 4
      %v2805 = vpop.permute.xlu0 %2804
      %2806 = vrot.lane.b32.xlu0 %v2721, 4
      %v2807 = vpop.permute.xlu0 %2806
      %2808 = vrot.lane.b32.xlu0 %v2722, 4
      %v2809 = vpop.permute.xlu0 %2808
      %2810 = vrot.lane.b32.xlu0 %v2723, 4
      %v2811 = vpop.permute.xlu0 %2810
      %2812 = vrot.lane.b32.xlu0 %v2724, 4
      %v2813 = vpop.permute.xlu0 %2812
      %2814 = vrot.lane.b32.xlu0 %v2725, 4
      %v2815 = vpop.permute.xlu0 %2814
      %2816 = vrot.lane.b32.xlu0 %v2726, 4
      %v2817 = vpop.permute.xlu0 %2816
      %2818 = vrot.lane.b32.xlu0 %v2727, 4
      %v2819 = vpop.permute.xlu0 %2818
      %2820 = vrot.lane.b32.xlu0 %v2728, 4
      %v2821 = vpop.permute.xlu0 %2820
      %2822 = vrot.lane.b32.xlu0 %v2729, 4
      %v2823 = vpop.permute.xlu0 %2822
      %2824 = vrot.lane.b32.xlu0 %v2730, 4
      %v2825 = vpop.permute.xlu0 %2824
      %2826 = vrot.lane.b32.xlu0 %v2731, 4
      %v2827 = vpop.permute.xlu0 %2826
      %2860 = vst.msk [vmem:[#allocation5] sm:$0xf] %vm878, %v2765
      %2861 = vst.msk [vmem:[#allocation5 + $0x4] sm:$0xf] %vm878, %v2767
      %2862 = vst.msk [vmem:[#allocation5 + $0x8] sm:$0xf] %vm878, %v2769
      %2863 = vst.msk [vmem:[#allocation5 + $0xc] sm:$0xf] %vm878, %v2771
      %2864 = vst.msk [vmem:[#allocation5 + $0x10] sm:$0xf] %vm878, %v2773
      %2865 = vst.msk [vmem:[#allocation5 + $0x14] sm:$0xf] %vm878, %v2775
      %2866 = vst.msk [vmem:[#allocation5 + $0x18] sm:$0xf] %vm878, %v2777
      %2867 = vst.msk [vmem:[#allocation5 + $0x1c] sm:$0xf] %vm878, %v2779
      %2868 = vst.msk [vmem:[#allocation5 + $0x20] sm:$0xf] %vm878, %v2781
      %2869 = vst.msk [vmem:[#allocation5 + $0x24] sm:$0xf] %vm878, %v2783
      %2870 = vst.msk [vmem:[#allocation5 + $0x28] sm:$0xf] %vm878, %v2785
      %2871 = vst.msk [vmem:[#allocation5 + $0x2c] sm:$0xf] %vm878, %v2787
      %2872 = vst.msk [vmem:[#allocation5 + $0x30] sm:$0xf] %vm878, %v2789
      %2873 = vst.msk [vmem:[#allocation5 + $0x34] sm:$0xf] %vm878, %v2791
      %2874 = vst.msk [vmem:[#allocation5 + $0x38] sm:$0xf] %vm878, %v2793
      %2875 = vst.msk [vmem:[#allocation5 + $0x3c] sm:$0xf] %vm878, %v2795
      %2876 = vst.msk [vmem:[#allocation5 + $0x40] sm:$0xf] %vm878, %v2797
      %2877 = vst.msk [vmem:[#allocation5 + $0x44] sm:$0xf] %vm878, %v2799
      %2878 = vst.msk [vmem:[#allocation5 + $0x48] sm:$0xf] %vm878, %v2801
      %2879 = vst.msk [vmem:[#allocation5 + $0x4c] sm:$0xf] %vm878, %v2803
      %2880 = vst.msk [vmem:[#allocation5 + $0x50] sm:$0xf] %vm878, %v2805
      %2881 = vst.msk [vmem:[#allocation5 + $0x54] sm:$0xf] %vm878, %v2807
      %2882 = vst.msk [vmem:[#allocation5 + $0x58] sm:$0xf] %vm878, %v2809
      %2883 = vst.msk [vmem:[#allocation5 + $0x5c] sm:$0xf] %vm878, %v2811
      %2884 = vst.msk [vmem:[#allocation5 + $0x60] sm:$0xf] %vm878, %v2813
      %2885 = vst.msk [vmem:[#allocation5 + $0x64] sm:$0xf] %vm878, %v2815
      %2886 = vst.msk [vmem:[#allocation5 + $0x68] sm:$0xf] %vm878, %v2817
      %2887 = vst.msk [vmem:[#allocation5 + $0x6c] sm:$0xf] %vm878, %v2819
      %2888 = vst.msk [vmem:[#allocation5 + $0x70] sm:$0xf] %vm878, %v2821
      %2889 = vst.msk [vmem:[#allocation5 + $0x74] sm:$0xf] %vm878, %v2823
      %2890 = vst.msk [vmem:[#allocation5 + $0x78] sm:$0xf] %vm878, %v2825
      %2891 = vst.msk [vmem:[#allocation5 + $0x7c] sm:$0xf] %vm878, %v2827
      %v2892 = vrot.slane %v2422, 2
      %v2893 = vrot.slane %v2423, 2
      %v2894 = vsel %vm911, %v2892, %v2893
      %v2895 = vrot.slane %v2424, 2
      %v2896 = vsel %vm911, %v2893, %v2895
      %v2897 = vrot.slane %v2425, 2
      %v2898 = vrot.slane %v2426, 2
      %v2899 = vsel %vm911, %v2897, %v2898
      %v2900 = vrot.slane %v2427, 2
      %v2901 = vsel %vm911, %v2898, %v2900
      %v2902 = vrot.slane %v2428, 2
      %v2903 = vrot.slane %v2429, 2
      %v2904 = vsel %vm911, %v2902, %v2903
      %v2905 = vrot.slane %v2430, 2
      %v2906 = vsel %vm911, %v2903, %v2905
      %v2907 = vrot.slane %v2431, 2
      %v2908 = vrot.slane %v2432, 2
      %v2909 = vsel %vm911, %v2907, %v2908
      %v2910 = vrot.slane %v2433, 2
      %v2911 = vsel %vm911, %v2908, %v2910
      %v2912 = vrot.slane %v2434, 2
      %v2913 = vrot.slane %v2435, 2
      %v2914 = vsel %vm911, %v2912, %v2913
      %v2915 = vrot.slane %v2436, 2
      %v2916 = vsel %vm911, %v2913, %v2915
      %v2917 = vrot.slane %v2437, 2
      %v2918 = vrot.slane %v2438, 2
      %v2919 = vsel %vm911, %v2917, %v2918
      %v2920 = vrot.slane %v2439, 2
      %v2921 = vsel %vm911, %v2918, %v2920
      %v2922 = vrot.slane %v2440, 2
      %v2923 = vrot.slane %v2441, 2
      %v2924 = vsel %vm911, %v2922, %v2923
      %v2925 = vrot.slane %v2442, 2
      %v2926 = vsel %vm911, %v2923, %v2925
      %v2927 = vrot.slane %v2443, 2
      %v2928 = vrot.slane %v2444, 2
      %v2929 = vsel %vm911, %v2927, %v2928
      %v2930 = vrot.slane %v2445, 2
      %v2931 = vsel %vm911, %v2928, %v2930
      %v2932 = vrot.slane %v2446, 2
      %v2933 = vrot.slane %v2447, 2
      %v2934 = vsel %vm911, %v2932, %v2933
      %v2935 = vrot.slane %v2448, 2
      %v2936 = vsel %vm911, %v2933, %v2935
      %v2937 = vrot.slane %v2449, 2
      %v2938 = vrot.slane %v2450, 2
      %v2939 = vsel %vm911, %v2937, %v2938
      %v2940 = vrot.slane %v2451, 2
      %v2941 = vsel %vm911, %v2938, %v2940
      %v2942 = vrot.slane %v2452, 2
      %v2943 = vrot.slane %v2453, 2
      %v2944 = vsel %vm911, %v2942, %v2943
      %v2945 = vrot.slane %v2454, 2
      %v2946 = vsel %vm911, %v2943, %v2945
      %v2947 = vrot.slane %v2455, 2
      %v2948 = vrot.slane %v2456, 2
      %v2949 = vsel %vm911, %v2947, %v2948
      %v2950 = vrot.slane %v2457, 2
      %v2951 = vsel %vm911, %v2948, %v2950
      %v2952 = vrot.slane %v2458, 2
      %v2953 = vrot.slane %v2459, 2
      %v2954 = vsel %vm911, %v2952, %v2953
      %v2955 = vrot.slane %v2460, 2
      %v2956 = vsel %vm911, %v2953, %v2955
      %v2957 = vrot.slane %v2461, 2
      %v2958 = vrot.slane %v2462, 2
      %v2959 = vsel %vm911, %v2957, %v2958
      %v2960 = vrot.slane %v2463, 2
      %v2961 = vsel %vm911, %v2958, %v2960
      %v2962 = vrot.slane %v2464, 2
      %v2963 = vrot.slane %v2465, 2
      %v2964 = vsel %vm911, %v2962, %v2963
      %v2965 = vrot.slane %v2466, 2
      %v2966 = vsel %vm911, %v2963, %v2965
      %v2967 = vrot.slane %v2467, 2
      %v2968 = vrot.slane %v2468, 2
      %v2969 = vsel %vm911, %v2967, %v2968
      %v2970 = vrot.slane %v2469, 2
      %v2971 = vsel %vm911, %v2968, %v2970
      %v3004 = vpack.c.bf16 %v2894, %v2894
      %v3005 = vpack.c.bf16 %v2896, %v2896
      %v3006 = vpack.c.bf16 %v2899, %v2899
      %v3007 = vpack.c.bf16 %v2901, %v2901
      %v3008 = vpack.c.bf16 %v2904, %v2904
      %v3009 = vpack.c.bf16 %v2906, %v2906
      %v3010 = vpack.c.bf16 %v2909, %v2909
      %v3011 = vpack.c.bf16 %v2911, %v2911
      %v3012 = vpack.c.bf16 %v2914, %v2914
      %v3013 = vpack.c.bf16 %v2916, %v2916
      %v3014 = vpack.c.bf16 %v2919, %v2919
      %v3015 = vpack.c.bf16 %v2921, %v2921
      %v3016 = vpack.c.bf16 %v2924, %v2924
      %v3017 = vpack.c.bf16 %v2926, %v2926
      %v3018 = vpack.c.bf16 %v2929, %v2929
      %v3019 = vpack.c.bf16 %v2931, %v2931
      %v3020 = vpack.c.bf16 %v2934, %v2934
      %v3021 = vpack.c.bf16 %v2936, %v2936
      %v3022 = vpack.c.bf16 %v2939, %v2939
      %v3023 = vpack.c.bf16 %v2941, %v2941
      %v3024 = vpack.c.bf16 %v2944, %v2944
      %v3025 = vpack.c.bf16 %v2946, %v2946
      %v3026 = vpack.c.bf16 %v2949, %v2949
      %v3027 = vpack.c.bf16 %v2951, %v2951
      %v3028 = vpack.c.bf16 %v2954, %v2954
      %v3029 = vpack.c.bf16 %v2956, %v2956
      %v3030 = vpack.c.bf16 %v2959, %v2959
      %v3031 = vpack.c.bf16 %v2961, %v2961
      %v3032 = vpack.c.bf16 %v2964, %v2964
      %v3033 = vpack.c.bf16 %v2966, %v2966
      %v3034 = vpack.c.bf16 %v2969, %v2969
      %v3035 = vpack.c.bf16 %v2971, %v2971
      %3068 = vrot.lane.b32.xlu0 %v3004, 8
      %v3069 = vpop.permute.xlu0 %3068
      %3070 = vrot.lane.b32.xlu0 %v3005, 8
      %v3071 = vpop.permute.xlu0 %3070
      %3072 = vrot.lane.b32.xlu0 %v3006, 8
      %v3073 = vpop.permute.xlu0 %3072
      %3074 = vrot.lane.b32.xlu0 %v3007, 8
      %v3075 = vpop.permute.xlu0 %3074
      %3076 = vrot.lane.b32.xlu0 %v3008, 8
      %v3077 = vpop.permute.xlu0 %3076
      %3078 = vrot.lane.b32.xlu0 %v3009, 8
      %v3079 = vpop.permute.xlu0 %3078
      %3080 = vrot.lane.b32.xlu0 %v3010, 8
      %v3081 = vpop.permute.xlu0 %3080
      %3082 = vrot.lane.b32.xlu0 %v3011, 8
      %v3083 = vpop.permute.xlu0 %3082
      %3084 = vrot.lane.b32.xlu0 %v3012, 8
      %v3085 = vpop.permute.xlu0 %3084
      %3086 = vrot.lane.b32.xlu0 %v3013, 8
      %v3087 = vpop.permute.xlu0 %3086
      %3088 = vrot.lane.b32.xlu0 %v3014, 8
      %v3089 = vpop.permute.xlu0 %3088
      %3090 = vrot.lane.b32.xlu0 %v3015, 8
      %v3091 = vpop.permute.xlu0 %3090
      %3092 = vrot.lane.b32.xlu0 %v3016, 8
      %v3093 = vpop.permute.xlu0 %3092
      %3094 = vrot.lane.b32.xlu0 %v3017, 8
      %v3095 = vpop.permute.xlu0 %3094
      %3096 = vrot.lane.b32.xlu0 %v3018, 8
      %v3097 = vpop.permute.xlu0 %3096
      %3098 = vrot.lane.b32.xlu0 %v3019, 8
      %v3099 = vpop.permute.xlu0 %3098
      %3100 = vrot.lane.b32.xlu0 %v3020, 8
      %v3101 = vpop.permute.xlu0 %3100
      %3102 = vrot.lane.b32.xlu0 %v3021, 8
      %v3103 = vpop.permute.xlu0 %3102
      %3104 = vrot.lane.b32.xlu0 %v3022, 8
      %v3105 = vpop.permute.xlu0 %3104
      %3106 = vrot.lane.b32.xlu0 %v3023, 8
      %v3107 = vpop.permute.xlu0 %3106
      %3108 = vrot.lane.b32.xlu0 %v3024, 8
      %v3109 = vpop.permute.xlu0 %3108
      %3110 = vrot.lane.b32.xlu0 %v3025, 8
      %v3111 = vpop.permute.xlu0 %3110
      %3112 = vrot.lane.b32.xlu0 %v3026, 8
      %v3113 = vpop.permute.xlu0 %3112
      %3114 = vrot.lane.b32.xlu0 %v3027, 8
      %v3115 = vpop.permute.xlu0 %3114
      %3116 = vrot.lane.b32.xlu0 %v3028, 8
      %v3117 = vpop.permute.xlu0 %3116
      %3118 = vrot.lane.b32.xlu0 %v3029, 8
      %v3119 = vpop.permute.xlu0 %3118
      %3120 = vrot.lane.b32.xlu0 %v3030, 8
      %v3121 = vpop.permute.xlu0 %3120
      %3122 = vrot.lane.b32.xlu0 %v3031, 8
      %v3123 = vpop.permute.xlu0 %3122
      %3124 = vrot.lane.b32.xlu0 %v3032, 8
      %v3125 = vpop.permute.xlu0 %3124
      %3126 = vrot.lane.b32.xlu0 %v3033, 8
      %v3127 = vpop.permute.xlu0 %3126
      %3128 = vrot.lane.b32.xlu0 %v3034, 8
      %v3129 = vpop.permute.xlu0 %3128
      %3130 = vrot.lane.b32.xlu0 %v3035, 8
      %v3131 = vpop.permute.xlu0 %3130
      %3164 = vst.msk [vmem:[#allocation5] sm:$0xf] %vm1184, %v3069
      %3165 = vst.msk [vmem:[#allocation5 + $0x4] sm:$0xf] %vm1184, %v3071
      %3166 = vst.msk [vmem:[#allocation5 + $0x8] sm:$0xf] %vm1184, %v3073
      %3167 = vst.msk [vmem:[#allocation5 + $0xc] sm:$0xf] %vm1184, %v3075
      %3168 = vst.msk [vmem:[#allocation5 + $0x10] sm:$0xf] %vm1184, %v3077
      %3169 = vst.msk [vmem:[#allocation5 + $0x14] sm:$0xf] %vm1184, %v3079
      %3170 = vst.msk [vmem:[#allocation5 + $0x18] sm:$0xf] %vm1184, %v3081
      %3171 = vst.msk [vmem:[#allocation5 + $0x1c] sm:$0xf] %vm1184, %v3083
      %3172 = vst.msk [vmem:[#allocation5 + $0x20] sm:$0xf] %vm1184, %v3085
      %3173 = vst.msk [vmem:[#allocation5 + $0x24] sm:$0xf] %vm1184, %v3087
      %3174 = vst.msk [vmem:[#allocation5 + $0x28] sm:$0xf] %vm1184, %v3089
      %3175 = vst.msk [vmem:[#allocation5 + $0x2c] sm:$0xf] %vm1184, %v3091
      %3176 = vst.msk [vmem:[#allocation5 + $0x30] sm:$0xf] %vm1184, %v3093
      %3177 = vst.msk [vmem:[#allocation5 + $0x34] sm:$0xf] %vm1184, %v3095
      %3178 = vst.msk [vmem:[#allocation5 + $0x38] sm:$0xf] %vm1184, %v3097
      %3179 = vst.msk [vmem:[#allocation5 + $0x3c] sm:$0xf] %vm1184, %v3099
      %3180 = vst.msk [vmem:[#allocation5 + $0x40] sm:$0xf] %vm1184, %v3101
      %3181 = vst.msk [vmem:[#allocation5 + $0x44] sm:$0xf] %vm1184, %v3103
      %3182 = vst.msk [vmem:[#allocation5 + $0x48] sm:$0xf] %vm1184, %v3105
      %3183 = vst.msk [vmem:[#allocation5 + $0x4c] sm:$0xf] %vm1184, %v3107
      %3184 = vst.msk [vmem:[#allocation5 + $0x50] sm:$0xf] %vm1184, %v3109
      %3185 = vst.msk [vmem:[#allocation5 + $0x54] sm:$0xf] %vm1184, %v3111
      %3186 = vst.msk [vmem:[#allocation5 + $0x58] sm:$0xf] %vm1184, %v3113
      %3187 = vst.msk [vmem:[#allocation5 + $0x5c] sm:$0xf] %vm1184, %v3115
      %3188 = vst.msk [vmem:[#allocation5 + $0x60] sm:$0xf] %vm1184, %v3117
      %3189 = vst.msk [vmem:[#allocation5 + $0x64] sm:$0xf] %vm1184, %v3119
      %3190 = vst.msk [vmem:[#allocation5 + $0x68] sm:$0xf] %vm1184, %v3121
      %3191 = vst.msk [vmem:[#allocation5 + $0x6c] sm:$0xf] %vm1184, %v3123
      %3192 = vst.msk [vmem:[#allocation5 + $0x70] sm:$0xf] %vm1184, %v3125
      %3193 = vst.msk [vmem:[#allocation5 + $0x74] sm:$0xf] %vm1184, %v3127
      %3194 = vst.msk [vmem:[#allocation5 + $0x78] sm:$0xf] %vm1184, %v3129
      %3195 = vst.msk [vmem:[#allocation5 + $0x7c] sm:$0xf] %vm1184, %v3131
      %v3196 = vpack.c.bf16 %v2470, %v2470
      %v3197 = vpack.c.bf16 %v2471, %v2471
      %3230 = vrot.lane.b32.xlu0 %v2478, 12
      %v3231 = vpop.permute.xlu0 %3230
      %3232 = vrot.lane.b32.xlu0 %v2479, 12
      %v3233 = vpop.permute.xlu0 %3232
      %3234 = vrot.lane.b32.xlu0 %v2480, 12
      %v3235 = vpop.permute.xlu0 %3234
      %3236 = vrot.lane.b32.xlu0 %v2481, 12
      %v3237 = vpop.permute.xlu0 %3236
      %3238 = vrot.lane.b32.xlu0 %v2482, 12
      %v3239 = vpop.permute.xlu0 %3238
      %3240 = vrot.lane.b32.xlu0 %v2483, 12
      %v3241 = vpop.permute.xlu0 %3240
      %3242 = vrot.lane.b32.xlu0 %v2484, 12
      %v3243 = vpop.permute.xlu0 %3242
      %3244 = vrot.lane.b32.xlu0 %v2485, 12
      %v3245 = vpop.permute.xlu0 %3244
      %3246 = vrot.lane.b32.xlu0 %v2486, 12
      %v3247 = vpop.permute.xlu0 %3246
      %3248 = vrot.lane.b32.xlu0 %v2487, 12
      %v3249 = vpop.permute.xlu0 %3248
      %3250 = vrot.lane.b32.xlu0 %v2488, 12
      %v3251 = vpop.permute.xlu0 %3250
      %3252 = vrot.lane.b32.xlu0 %v2489, 12
      %v3253 = vpop.permute.xlu0 %3252
      %3254 = vrot.lane.b32.xlu0 %v2490, 12
      %v3255 = vpop.permute.xlu0 %3254
      %3256 = vrot.lane.b32.xlu0 %v2491, 12
      %v3257 = vpop.permute.xlu0 %3256
      %3258 = vrot.lane.b32.xlu0 %v2492, 12
      %v3259 = vpop.permute.xlu0 %3258
      %3260 = vrot.lane.b32.xlu0 %v2493, 12
      %v3261 = vpop.permute.xlu0 %3260
      %3262 = vrot.lane.b32.xlu0 %v2494, 12
      %v3263 = vpop.permute.xlu0 %3262
      %3264 = vrot.lane.b32.xlu0 %v2495, 12
      %v3265 = vpop.permute.xlu0 %3264
      %3266 = vrot.lane.b32.xlu0 %v2496, 12
      %v3267 = vpop.permute.xlu0 %3266
      %3268 = vrot.lane.b32.xlu0 %v2497, 12
      %v3269 = vpop.permute.xlu0 %3268
      %3270 = vrot.lane.b32.xlu0 %v2498, 12
      %v3271 = vpop.permute.xlu0 %3270
      %3272 = vrot.lane.b32.xlu0 %v2499, 12
      %v3273 = vpop.permute.xlu0 %3272
      %3274 = vrot.lane.b32.xlu0 %v2500, 12
      %v3275 = vpop.permute.xlu0 %3274
      %3276 = vrot.lane.b32.xlu0 %v2501, 12
      %v3277 = vpop.permute.xlu0 %3276
      %3278 = vrot.lane.b32.xlu0 %v2502, 12
      %v3279 = vpop.permute.xlu0 %3278
      %3280 = vrot.lane.b32.xlu0 %v2503, 12
      %v3281 = vpop.permute.xlu0 %3280
      %3282 = vrot.lane.b32.xlu0 %v2504, 12
      %v3283 = vpop.permute.xlu0 %3282
      %3284 = vrot.lane.b32.xlu0 %v2505, 12
      %v3285 = vpop.permute.xlu0 %3284
      %3286 = vrot.lane.b32.xlu0 %v2506, 12
      %v3287 = vpop.permute.xlu0 %3286
      %3288 = vrot.lane.b32.xlu0 %v2507, 12
      %v3289 = vpop.permute.xlu0 %3288
      %3290 = vrot.lane.b32.xlu0 %v3196, 12
      %v3291 = vpop.permute.xlu0 %3290
      %3292 = vrot.lane.b32.xlu0 %v3197, 12
      %v3293 = vpop.permute.xlu0 %3292
      %3326 = vst.msk [vmem:[#allocation5] sm:$0xf] %vm1347, %v3231
      %3327 = vst.msk [vmem:[#allocation5 + $0x4] sm:$0xf] %vm1347, %v3233
      %3328 = vst.msk [vmem:[#allocation5 + $0x8] sm:$0xf] %vm1347, %v3235
      %3329 = vst.msk [vmem:[#allocation5 + $0xc] sm:$0xf] %vm1347, %v3237
      %3330 = vst.msk [vmem:[#allocation5 + $0x10] sm:$0xf] %vm1347, %v3239
      %3331 = vst.msk [vmem:[#allocation5 + $0x14] sm:$0xf] %vm1347, %v3241
      %3332 = vst.msk [vmem:[#allocation5 + $0x18] sm:$0xf] %vm1347, %v3243
      %3333 = vst.msk [vmem:[#allocation5 + $0x1c] sm:$0xf] %vm1347, %v3245
      %3334 = vst.msk [vmem:[#allocation5 + $0x20] sm:$0xf] %vm1347, %v3247
      %3335 = vst.msk [vmem:[#allocation5 + $0x24] sm:$0xf] %vm1347, %v3249
      %3336 = vst.msk [vmem:[#allocation5 + $0x28] sm:$0xf] %vm1347, %v3251
      %3337 = vst.msk [vmem:[#allocation5 + $0x2c] sm:$0xf] %vm1347, %v3253
      %3338 = vst.msk [vmem:[#allocation5 + $0x30] sm:$0xf] %vm1347, %v3255
      %3339 = vst.msk [vmem:[#allocation5 + $0x34] sm:$0xf] %vm1347, %v3257
      %3340 = vst.msk [vmem:[#allocation5 + $0x38] sm:$0xf] %vm1347, %v3259
      %3341 = vst.msk [vmem:[#allocation5 + $0x3c] sm:$0xf] %vm1347, %v3261
      %3342 = vst.msk [vmem:[#allocation5 + $0x40] sm:$0xf] %vm1347, %v3263
      %3343 = vst.msk [vmem:[#allocation5 + $0x44] sm:$0xf] %vm1347, %v3265
      %3344 = vst.msk [vmem:[#allocation5 + $0x48] sm:$0xf] %vm1347, %v3267
      %3345 = vst.msk [vmem:[#allocation5 + $0x4c] sm:$0xf] %vm1347, %v3269
      %3346 = vst.msk [vmem:[#allocation5 + $0x50] sm:$0xf] %vm1347, %v3271
      %3347 = vst.msk [vmem:[#allocation5 + $0x54] sm:$0xf] %vm1347, %v3273
      %3348 = vst.msk [vmem:[#allocation5 + $0x58] sm:$0xf] %vm1347, %v3275
      %3349 = vst.msk [vmem:[#allocation5 + $0x5c] sm:$0xf] %vm1347, %v3277
      %3350 = vst.msk [vmem:[#allocation5 + $0x60] sm:$0xf] %vm1347, %v3279
      %3351 = vst.msk [vmem:[#allocation5 + $0x64] sm:$0xf] %vm1347, %v3281
      %3352 = vst.msk [vmem:[#allocation5 + $0x68] sm:$0xf] %vm1347, %v3283
      %3353 = vst.msk [vmem:[#allocation5 + $0x6c] sm:$0xf] %vm1347, %v3285
      %3354 = vst.msk [vmem:[#allocation5 + $0x70] sm:$0xf] %vm1347, %v3287
      %3355 = vst.msk [vmem:[#allocation5 + $0x74] sm:$0xf] %vm1347, %v3289
      %3356 = vst.msk [vmem:[#allocation5 + $0x78] sm:$0xf] %vm1347, %v3291
      %3357 = vst.msk [vmem:[#allocation5 + $0x7c] sm:$0xf] %vm1347, %v3293
      %v3361 = vrot.slane %v2470, 1
      %v3362 = vrot.slane %v2471, 1
      %v3363 = vsel %vm605, %v3361, %v3362
      %v3364 = vrot.slane %v2472, 1
      %v3365 = vsel %vm605, %v3362, %v3364
      %v3368 = vpack.c.bf16 %v3363, %v3363
      %v3369 = vpack.c.bf16 %v3365, %v3365
      %3372 = vrot.lane.b32.xlu0 %v2702, 16
      %v3373 = vpop.permute.xlu0 %3372
      %3374 = vrot.lane.b32.xlu0 %v2703, 16
      %v3375 = vpop.permute.xlu0 %3374
      %3376 = vrot.lane.b32.xlu0 %v2704, 16
      %v3377 = vpop.permute.xlu0 %3376
      %3378 = vrot.lane.b32.xlu0 %v2705, 16
      %v3379 = vpop.permute.xlu0 %3378
      %3380 = vrot.lane.b32.xlu0 %v2706, 16
      %v3381 = vpop.permute.xlu0 %3380
      %3382 = vrot.lane.b32.xlu0 %v2707, 16
      %v3383 = vpop.permute.xlu0 %3382
      %3384 = vrot.lane.b32.xlu0 %v2708, 16
      %v3385 = vpop.permute.xlu0 %3384
      %3386 = vrot.lane.b32.xlu0 %v2709, 16
      %v3387 = vpop.permute.xlu0 %3386
      %3388 = vrot.lane.b32.xlu0 %v2710, 16
      %v3389 = vpop.permute.xlu0 %3388
      %3390 = vrot.lane.b32.xlu0 %v2711, 16
      %v3391 = vpop.permute.xlu0 %3390
      %3392 = vrot.lane.b32.xlu0 %v2712, 16
      %v3393 = vpop.permute.xlu0 %3392
      %3394 = vrot.lane.b32.xlu0 %v2713, 16
      %v3395 = vpop.permute.xlu0 %3394
      %3396 = vrot.lane.b32.xlu0 %v2714, 16
      %v3397 = vpop.permute.xlu0 %3396
      %3398 = vrot.lane.b32.xlu0 %v2715, 16
      %v3399 = vpop.permute.xlu0 %3398
      %3400 = vrot.lane.b32.xlu0 %v2716, 16
      %v3401 = vpop.permute.xlu0 %3400
      %3402 = vrot.lane.b32.xlu0 %v2717, 16
      %v3403 = vpop.permute.xlu0 %3402
      %3404 = vrot.lane.b32.xlu0 %v2718, 16
      %v3405 = vpop.permute.xlu0 %3404
      %3406 = vrot.lane.b32.xlu0 %v2719, 16
      %v3407 = vpop.permute.xlu0 %3406
      %3408 = vrot.lane.b32.xlu0 %v2720, 16
      %v3409 = vpop.permute.xlu0 %3408
      %3410 = vrot.lane.b32.xlu0 %v2721, 16
      %v3411 = vpop.permute.xlu0 %3410
      %3412 = vrot.lane.b32.xlu0 %v2722, 16
      %v3413 = vpop.permute.xlu0 %3412
      %3414 = vrot.lane.b32.xlu0 %v2723, 16
      %v3415 = vpop.permute.xlu0 %3414
      %3416 = vrot.lane.b32.xlu0 %v2724, 16
      %v3417 = vpop.permute.xlu0 %3416
      %3418 = vrot.lane.b32.xlu0 %v2725, 16
      %v3419 = vpop.permute.xlu0 %3418
      %3420 = vrot.lane.b32.xlu0 %v2726, 16
      %v3421 = vpop.permute.xlu0 %3420
      %3422 = vrot.lane.b32.xlu0 %v2727, 16
      %v3423 = vpop.permute.xlu0 %3422
      %3424 = vrot.lane.b32.xlu0 %v2728, 16
      %v3425 = vpop.permute.xlu0 %3424
      %3426 = vrot.lane.b32.xlu0 %v2729, 16
      %v3427 = vpop.permute.xlu0 %3426
      %3428 = vrot.lane.b32.xlu0 %v2730, 16
      %v3429 = vpop.permute.xlu0 %3428
      %3430 = vrot.lane.b32.xlu0 %v2731, 16
      %v3431 = vpop.permute.xlu0 %3430
      %3432 = vrot.lane.b32.xlu0 %v3368, 16
      %v3433 = vpop.permute.xlu0 %3432
      %3434 = vrot.lane.b32.xlu0 %v3369, 16
      %v3435 = vpop.permute.xlu0 %3434
      %3468 = vst.msk [vmem:[#allocation5] sm:$0xf] %vm1490, %v3373
      %3469 = vst.msk [vmem:[#allocation5 + $0x4] sm:$0xf] %vm1490, %v3375
      %3470 = vst.msk [vmem:[#allocation5 + $0x8] sm:$0xf] %vm1490, %v3377
      %3471 = vst.msk [vmem:[#allocation5 + $0xc] sm:$0xf] %vm1490, %v3379
      %3472 = vst.msk [vmem:[#allocation5 + $0x10] sm:$0xf] %vm1490, %v3381
      %3473 = vst.msk [vmem:[#allocation5 + $0x14] sm:$0xf] %vm1490, %v3383
      %3474 = vst.msk [vmem:[#allocation5 + $0x18] sm:$0xf] %vm1490, %v3385
      %3475 = vst.msk [vmem:[#allocation5 + $0x1c] sm:$0xf] %vm1490, %v3387
      %3476 = vst.msk [vmem:[#allocation5 + $0x20] sm:$0xf] %vm1490, %v3389
      %3477 = vst.msk [vmem:[#allocation5 + $0x24] sm:$0xf] %vm1490, %v3391
      %3478 = vst.msk [vmem:[#allocation5 + $0x28] sm:$0xf] %vm1490, %v3393
      %3479 = vst.msk [vmem:[#allocation5 + $0x2c] sm:$0xf] %vm1490, %v3395
      %3480 = vst.msk [vmem:[#allocation5 + $0x30] sm:$0xf] %vm1490, %v3397
      %3481 = vst.msk [vmem:[#allocation5 + $0x34] sm:$0xf] %vm1490, %v3399
      %3482 = vst.msk [vmem:[#allocation5 + $0x38] sm:$0xf] %vm1490, %v3401
      %3483 = vst.msk [vmem:[#allocation5 + $0x3c] sm:$0xf] %vm1490, %v3403
      %3484 = vst.msk [vmem:[#allocation5 + $0x40] sm:$0xf] %vm1490, %v3405
      %3485 = vst.msk [vmem:[#allocation5 + $0x44] sm:$0xf] %vm1490, %v3407
      %3486 = vst.msk [vmem:[#allocation5 + $0x48] sm:$0xf] %vm1490, %v3409
      %3487 = vst.msk [vmem:[#allocation5 + $0x4c] sm:$0xf] %vm1490, %v3411
      %3488 = vst.msk [vmem:[#allocation5 + $0x50] sm:$0xf] %vm1490, %v3413
      %3489 = vst.msk [vmem:[#allocation5 + $0x54] sm:$0xf] %vm1490, %v3415
      %3490 = vst.msk [vmem:[#allocation5 + $0x58] sm:$0xf] %vm1490, %v3417
      %3491 = vst.msk [vmem:[#allocation5 + $0x5c] sm:$0xf] %vm1490, %v3419
      %3492 = vst.msk [vmem:[#allocation5 + $0x60] sm:$0xf] %vm1490, %v3421
      %3493 = vst.msk [vmem:[#allocation5 + $0x64] sm:$0xf] %vm1490, %v3423
      %3494 = vst.msk [vmem:[#allocation5 + $0x68] sm:$0xf] %vm1490, %v3425
      %3495 = vst.msk [vmem:[#allocation5 + $0x6c] sm:$0xf] %vm1490, %v3427
      %3496 = vst.msk [vmem:[#allocation5 + $0x70] sm:$0xf] %vm1490, %v3429
      %3497 = vst.msk [vmem:[#allocation5 + $0x74] sm:$0xf] %vm1490, %v3431
      %3498 = vst.msk [vmem:[#allocation5 + $0x78] sm:$0xf] %vm1490, %v3433
      %3499 = vst.msk [vmem:[#allocation5 + $0x7c] sm:$0xf] %vm1490, %v3435
      %v3500 = vrot.slane %v2470, 2
      %v3501 = vrot.slane %v2471, 2
      %v3502 = vsel %vm911, %v3500, %v3501
      %v3503 = vrot.slane %v2472, 2
      %v3504 = vsel %vm911, %v3501, %v3503
      %v3507 = vpack.c.bf16 %v3502, %v3502
      %v3508 = vpack.c.bf16 %v3504, %v3504
      %3511 = vrot.lane.b32.xlu0 %v3006, 20
      %v3512 = vpop.permute.xlu0 %3511
      %3513 = vrot.lane.b32.xlu0 %v3007, 20
      %v3514 = vpop.permute.xlu0 %3513
      %3515 = vrot.lane.b32.xlu0 %v3008, 20
      %v3516 = vpop.permute.xlu0 %3515
      %3517 = vrot.lane.b32.xlu0 %v3009, 20
      %v3518 = vpop.permute.xlu0 %3517
      %3519 = vrot.lane.b32.xlu0 %v3010, 20
      %v3520 = vpop.permute.xlu0 %3519
      %3521 = vrot.lane.b32.xlu0 %v3011, 20
      %v3522 = vpop.permute.xlu0 %3521
      %3523 = vrot.lane.b32.xlu0 %v3012, 20
      %v3524 = vpop.permute.xlu0 %3523
      %3525 = vrot.lane.b32.xlu0 %v3013, 20
      %v3526 = vpop.permute.xlu0 %3525
      %3527 = vrot.lane.b32.xlu0 %v3014, 20
      %v3528 = vpop.permute.xlu0 %3527
      %3529 = vrot.lane.b32.xlu0 %v3015, 20
      %v3530 = vpop.permute.xlu0 %3529
      %3531 = vrot.lane.b32.xlu0 %v3016, 20
      %v3532 = vpop.permute.xlu0 %3531
      %3533 = vrot.lane.b32.xlu0 %v3017, 20
      %v3534 = vpop.permute.xlu0 %3533
      %3535 = vrot.lane.b32.xlu0 %v3018, 20
      %v3536 = vpop.permute.xlu0 %3535
      %3537 = vrot.lane.b32.xlu0 %v3019, 20
      %v3538 = vpop.permute.xlu0 %3537
      %3539 = vrot.lane.b32.xlu0 %v3020, 20
      %v3540 = vpop.permute.xlu0 %3539
      %3541 = vrot.lane.b32.xlu0 %v3021, 20
      %v3542 = vpop.permute.xlu0 %3541
      %3543 = vrot.lane.b32.xlu0 %v3022, 20
      %v3544 = vpop.permute.xlu0 %3543
      %3545 = vrot.lane.b32.xlu0 %v3023, 20
      %v3546 = vpop.permute.xlu0 %3545
      %3547 = vrot.lane.b32.xlu0 %v3024, 20
      %v3548 = vpop.permute.xlu0 %3547
      %3549 = vrot.lane.b32.xlu0 %v3025, 20
      %v3550 = vpop.permute.xlu0 %3549
      %3551 = vrot.lane.b32.xlu0 %v3026, 20
      %v3552 = vpop.permute.xlu0 %3551
      %3553 = vrot.lane.b32.xlu0 %v3027, 20
      %v3554 = vpop.permute.xlu0 %3553
      %3555 = vrot.lane.b32.xlu0 %v3028, 20
      %v3556 = vpop.permute.xlu0 %3555
      %3557 = vrot.lane.b32.xlu0 %v3029, 20
      %v3558 = vpop.permute.xlu0 %3557
      %3559 = vrot.lane.b32.xlu0 %v3030, 20
      %v3560 = vpop.permute.xlu0 %3559
      %3561 = vrot.lane.b32.xlu0 %v3031, 20
      %v3562 = vpop.permute.xlu0 %3561
      %3563 = vrot.lane.b32.xlu0 %v3032, 20
      %v3564 = vpop.permute.xlu0 %3563
      %3565 = vrot.lane.b32.xlu0 %v3033, 20
      %v3566 = vpop.permute.xlu0 %3565
      %3567 = vrot.lane.b32.xlu0 %v3034, 20
      %v3568 = vpop.permute.xlu0 %3567
      %3569 = vrot.lane.b32.xlu0 %v3035, 20
      %v3570 = vpop.permute.xlu0 %3569
      %3571 = vrot.lane.b32.xlu0 %v3507, 20
      %v3572 = vpop.permute.xlu0 %3571
      %3573 = vrot.lane.b32.xlu0 %v3508, 20
      %v3574 = vpop.permute.xlu0 %3573
      %3607 = vst.msk [vmem:[#allocation5] sm:$0xf] %vm1630, %v3512
      %3608 = vst.msk [vmem:[#allocation5 + $0x4] sm:$0xf] %vm1630, %v3514
      %3609 = vst.msk [vmem:[#allocation5 + $0x8] sm:$0xf] %vm1630, %v3516
      %3610 = vst.msk [vmem:[#allocation5 + $0xc] sm:$0xf] %vm1630, %v3518
      %3611 = vst.msk [vmem:[#allocation5 + $0x10] sm:$0xf] %vm1630, %v3520
      %3612 = vst.msk [vmem:[#allocation5 + $0x14] sm:$0xf] %vm1630, %v3522
      %3613 = vst.msk [vmem:[#allocation5 + $0x18] sm:$0xf] %vm1630, %v3524
      %3614 = vst.msk [vmem:[#allocation5 + $0x1c] sm:$0xf] %vm1630, %v3526
      %3615 = vst.msk [vmem:[#allocation5 + $0x20] sm:$0xf] %vm1630, %v3528
      %3616 = vst.msk [vmem:[#allocation5 + $0x24] sm:$0xf] %vm1630, %v3530
      %3617 = vst.msk [vmem:[#allocation5 + $0x28] sm:$0xf] %vm1630, %v3532
      %3618 = vst.msk [vmem:[#allocation5 + $0x2c] sm:$0xf] %vm1630, %v3534
      %3619 = vst.msk [vmem:[#allocation5 + $0x30] sm:$0xf] %vm1630, %v3536
      %3620 = vst.msk [vmem:[#allocation5 + $0x34] sm:$0xf] %vm1630, %v3538
      %3621 = vst.msk [vmem:[#allocation5 + $0x38] sm:$0xf] %vm1630, %v3540
      %3622 = vst.msk [vmem:[#allocation5 + $0x3c] sm:$0xf] %vm1630, %v3542
      %3623 = vst.msk [vmem:[#allocation5 + $0x40] sm:$0xf] %vm1630, %v3544
      %3624 = vst.msk [vmem:[#allocation5 + $0x44] sm:$0xf] %vm1630, %v3546
      %3625 = vst.msk [vmem:[#allocation5 + $0x48] sm:$0xf] %vm1630, %v3548
      %3626 = vst.msk [vmem:[#allocation5 + $0x4c] sm:$0xf] %vm1630, %v3550
      %3627 = vst.msk [vmem:[#allocation5 + $0x50] sm:$0xf] %vm1630, %v3552
      %3628 = vst.msk [vmem:[#allocation5 + $0x54] sm:$0xf] %vm1630, %v3554
      %3629 = vst.msk [vmem:[#allocation5 + $0x58] sm:$0xf] %vm1630, %v3556
      %3630 = vst.msk [vmem:[#allocation5 + $0x5c] sm:$0xf] %vm1630, %v3558
      %3631 = vst.msk [vmem:[#allocation5 + $0x60] sm:$0xf] %vm1630, %v3560
      %3632 = vst.msk [vmem:[#allocation5 + $0x64] sm:$0xf] %vm1630, %v3562
      %3633 = vst.msk [vmem:[#allocation5 + $0x68] sm:$0xf] %vm1630, %v3564
      %3634 = vst.msk [vmem:[#allocation5 + $0x6c] sm:$0xf] %vm1630, %v3566
      %3635 = vst.msk [vmem:[#allocation5 + $0x70] sm:$0xf] %vm1630, %v3568
      %3636 = vst.msk [vmem:[#allocation5 + $0x74] sm:$0xf] %vm1630, %v3570
      %3637 = vst.msk [vmem:[#allocation5 + $0x78] sm:$0xf] %vm1630, %v3572
      %3638 = vst.msk [vmem:[#allocation5 + $0x7c] sm:$0xf] %vm1630, %v3574
      %v3639 = vpack.c.bf16 %v2473, %v2473
      %v3640 = vpack.c.bf16 %v2474, %v2474
      %3643 = vrot.lane.b32.xlu0 %v2480, 24
      %v3644 = vpop.permute.xlu0 %3643
      %3645 = vrot.lane.b32.xlu0 %v2481, 24
      %v3646 = vpop.permute.xlu0 %3645
      %3647 = vrot.lane.b32.xlu0 %v2482, 24
      %v3648 = vpop.permute.xlu0 %3647
      %3649 = vrot.lane.b32.xlu0 %v2483, 24
      %v3650 = vpop.permute.xlu0 %3649
      %3651 = vrot.lane.b32.xlu0 %v2484, 24
      %v3652 = vpop.permute.xlu0 %3651
      %3653 = vrot.lane.b32.xlu0 %v2485, 24
      %v3654 = vpop.permute.xlu0 %3653
      %3655 = vrot.lane.b32.xlu0 %v2486, 24
      %v3656 = vpop.permute.xlu0 %3655
      %3657 = vrot.lane.b32.xlu0 %v2487, 24
      %v3658 = vpop.permute.xlu0 %3657
      %3659 = vrot.lane.b32.xlu0 %v2488, 24
      %v3660 = vpop.permute.xlu0 %3659
      %3661 = vrot.lane.b32.xlu0 %v2489, 24
      %v3662 = vpop.permute.xlu0 %3661
      %3663 = vrot.lane.b32.xlu0 %v2490, 24
      %v3664 = vpop.permute.xlu0 %3663
      %3665 = vrot.lane.b32.xlu0 %v2491, 24
      %v3666 = vpop.permute.xlu0 %3665
      %3667 = vrot.lane.b32.xlu0 %v2492, 24
      %v3668 = vpop.permute.xlu0 %3667
      %3669 = vrot.lane.b32.xlu0 %v2493, 24
      %v3670 = vpop.permute.xlu0 %3669
      %3671 = vrot.lane.b32.xlu0 %v2494, 24
      %v3672 = vpop.permute.xlu0 %3671
      %3673 = vrot.lane.b32.xlu0 %v2495, 24
      %v3674 = vpop.permute.xlu0 %3673
      %3675 = vrot.lane.b32.xlu0 %v2496, 24
      %v3676 = vpop.permute.xlu0 %3675
      %3677 = vrot.lane.b32.xlu0 %v2497, 24
      %v3678 = vpop.permute.xlu0 %3677
      %3679 = vrot.lane.b32.xlu0 %v2498, 24
      %v3680 = vpop.permute.xlu0 %3679
      %3681 = vrot.lane.b32.xlu0 %v2499, 24
      %v3682 = vpop.permute.xlu0 %3681
      %3683 = vrot.lane.b32.xlu0 %v2500, 24
      %v3684 = vpop.permute.xlu0 %3683
      %3685 = vrot.lane.b32.xlu0 %v2501, 24
      %v3686 = vpop.permute.xlu0 %3685
      %3687 = vrot.lane.b32.xlu0 %v2502, 24
      %v3688 = vpop.permute.xlu0 %3687
      %3689 = vrot.lane.b32.xlu0 %v2503, 24
      %v3690 = vpop.permute.xlu0 %3689
      %3691 = vrot.lane.b32.xlu0 %v2504, 24
      %v3692 = vpop.permute.xlu0 %3691
      %3693 = vrot.lane.b32.xlu0 %v2505, 24
      %v3694 = vpop.permute.xlu0 %3693
      %3695 = vrot.lane.b32.xlu0 %v2506, 24
      %v3696 = vpop.permute.xlu0 %3695
      %3697 = vrot.lane.b32.xlu0 %v2507, 24
      %v3698 = vpop.permute.xlu0 %3697
      %3699 = vrot.lane.b32.xlu0 %v3196, 24
      %v3700 = vpop.permute.xlu0 %3699
      %3701 = vrot.lane.b32.xlu0 %v3197, 24
      %v3702 = vpop.permute.xlu0 %3701
      %3703 = vrot.lane.b32.xlu0 %v3639, 24
      %v3704 = vpop.permute.xlu0 %3703
      %3705 = vrot.lane.b32.xlu0 %v3640, 24
      %v3706 = vpop.permute.xlu0 %3705
      %3739 = vst.msk [vmem:[#allocation5] sm:$0xf] %vm1763, %v3644
      %3740 = vst.msk [vmem:[#allocation5 + $0x4] sm:$0xf] %vm1763, %v3646
      %3741 = vst.msk [vmem:[#allocation5 + $0x8] sm:$0xf] %vm1763, %v3648
      %3742 = vst.msk [vmem:[#allocation5 + $0xc] sm:$0xf] %vm1763, %v3650
      %3743 = vst.msk [vmem:[#allocation5 + $0x10] sm:$0xf] %vm1763, %v3652
      %3744 = vst.msk [vmem:[#allocation5 + $0x14] sm:$0xf] %vm1763, %v3654
      %3745 = vst.msk [vmem:[#allocation5 + $0x18] sm:$0xf] %vm1763, %v3656
      %3746 = vst.msk [vmem:[#allocation5 + $0x1c] sm:$0xf] %vm1763, %v3658
      %3747 = vst.msk [vmem:[#allocation5 + $0x20] sm:$0xf] %vm1763, %v3660
      %3748 = vst.msk [vmem:[#allocation5 + $0x24] sm:$0xf] %vm1763, %v3662
      %3749 = vst.msk [vmem:[#allocation5 + $0x28] sm:$0xf] %vm1763, %v3664
      %3750 = vst.msk [vmem:[#allocation5 + $0x2c] sm:$0xf] %vm1763, %v3666
      %3751 = vst.msk [vmem:[#allocation5 + $0x30] sm:$0xf] %vm1763, %v3668
      %3752 = vst.msk [vmem:[#allocation5 + $0x34] sm:$0xf] %vm1763, %v3670
      %3753 = vst.msk [vmem:[#allocation5 + $0x38] sm:$0xf] %vm1763, %v3672
      %3754 = vst.msk [vmem:[#allocation5 + $0x3c] sm:$0xf] %vm1763, %v3674
      %3755 = vst.msk [vmem:[#allocation5 + $0x40] sm:$0xf] %vm1763, %v3676
      %3756 = vst.msk [vmem:[#allocation5 + $0x44] sm:$0xf] %vm1763, %v3678
      %3757 = vst.msk [vmem:[#allocation5 + $0x48] sm:$0xf] %vm1763, %v3680
      %3758 = vst.msk [vmem:[#allocation5 + $0x4c] sm:$0xf] %vm1763, %v3682
      %3759 = vst.msk [vmem:[#allocation5 + $0x50] sm:$0xf] %vm1763, %v3684
      %3760 = vst.msk [vmem:[#allocation5 + $0x54] sm:$0xf] %vm1763, %v3686
      %3761 = vst.msk [vmem:[#allocation5 + $0x58] sm:$0xf] %vm1763, %v3688
      %3762 = vst.msk [vmem:[#allocation5 + $0x5c] sm:$0xf] %vm1763, %v3690
      %3763 = vst.msk [vmem:[#allocation5 + $0x60] sm:$0xf] %vm1763, %v3692
      %3764 = vst.msk [vmem:[#allocation5 + $0x64] sm:$0xf] %vm1763, %v3694
      %3765 = vst.msk [vmem:[#allocation5 + $0x68] sm:$0xf] %vm1763, %v3696
      %3766 = vst.msk [vmem:[#allocation5 + $0x6c] sm:$0xf] %vm1763, %v3698
      %3767 = vst.msk [vmem:[#allocation5 + $0x70] sm:$0xf] %vm1763, %v3700
      %3768 = vst.msk [vmem:[#allocation5 + $0x74] sm:$0xf] %vm1763, %v3702
      %3769 = vst.msk [vmem:[#allocation5 + $0x78] sm:$0xf] %vm1763, %v3704
      %3770 = vst.msk [vmem:[#allocation5 + $0x7c] sm:$0xf] %vm1763, %v3706
      %v3774 = vrot.slane %v2473, 1
      %v3775 = vrot.slane %v2474, 1
      %v3776 = vsel %vm605, %v3774, %v3775
      %v3777 = vrot.slane %v2475, 1
      %v3778 = vsel %vm605, %v3775, %v3777
      %v3781 = vpack.c.bf16 %v3776, %v3776
      %v3782 = vpack.c.bf16 %v3778, %v3778
      %3785 = vrot.lane.b32.xlu0 %v2704, 28
      %v3786 = vpop.permute.xlu0 %3785
      %3787 = vrot.lane.b32.xlu0 %v2705, 28
      %v3788 = vpop.permute.xlu0 %3787
      %3789 = vrot.lane.b32.xlu0 %v2706, 28
      %v3790 = vpop.permute.xlu0 %3789
      %3791 = vrot.lane.b32.xlu0 %v2707, 28
      %v3792 = vpop.permute.xlu0 %3791
      %3793 = vrot.lane.b32.xlu0 %v2708, 28
      %v3794 = vpop.permute.xlu0 %3793
      %3795 = vrot.lane.b32.xlu0 %v2709, 28
      %v3796 = vpop.permute.xlu0 %3795
      %3797 = vrot.lane.b32.xlu0 %v2710, 28
      %v3798 = vpop.permute.xlu0 %3797
      %3799 = vrot.lane.b32.xlu0 %v2711, 28
      %v3800 = vpop.permute.xlu0 %3799
      %3801 = vrot.lane.b32.xlu0 %v2712, 28
      %v3802 = vpop.permute.xlu0 %3801
      %3803 = vrot.lane.b32.xlu0 %v2713, 28
      %v3804 = vpop.permute.xlu0 %3803
      %3805 = vrot.lane.b32.xlu0 %v2714, 28
      %v3806 = vpop.permute.xlu0 %3805
      %3807 = vrot.lane.b32.xlu0 %v2715, 28
      %v3808 = vpop.permute.xlu0 %3807
      %3809 = vrot.lane.b32.xlu0 %v2716, 28
      %v3810 = vpop.permute.xlu0 %3809
      %3811 = vrot.lane.b32.xlu0 %v2717, 28
      %v3812 = vpop.permute.xlu0 %3811
      %3813 = vrot.lane.b32.xlu0 %v2718, 28
      %v3814 = vpop.permute.xlu0 %3813
      %3815 = vrot.lane.b32.xlu0 %v2719, 28
      %v3816 = vpop.permute.xlu0 %3815
      %3817 = vrot.lane.b32.xlu0 %v2720, 28
      %v3818 = vpop.permute.xlu0 %3817
      %3819 = vrot.lane.b32.xlu0 %v2721, 28
      %v3820 = vpop.permute.xlu0 %3819
      %3821 = vrot.lane.b32.xlu0 %v2722, 28
      %v3822 = vpop.permute.xlu0 %3821
      %3823 = vrot.lane.b32.xlu0 %v2723, 28
      %v3824 = vpop.permute.xlu0 %3823
      %3825 = vrot.lane.b32.xlu0 %v2724, 28
      %v3826 = vpop.permute.xlu0 %3825
      %3827 = vrot.lane.b32.xlu0 %v2725, 28
      %v3828 = vpop.permute.xlu0 %3827
      %3829 = vrot.lane.b32.xlu0 %v2726, 28
      %v3830 = vpop.permute.xlu0 %3829
      %3831 = vrot.lane.b32.xlu0 %v2727, 28
      %v3832 = vpop.permute.xlu0 %3831
      %3833 = vrot.lane.b32.xlu0 %v2728, 28
      %v3834 = vpop.permute.xlu0 %3833
      %3835 = vrot.lane.b32.xlu0 %v2729, 28
      %v3836 = vpop.permute.xlu0 %3835
      %3837 = vrot.lane.b32.xlu0 %v2730, 28
      %v3838 = vpop.permute.xlu0 %3837
      %3839 = vrot.lane.b32.xlu0 %v2731, 28
      %v3840 = vpop.permute.xlu0 %3839
      %3841 = vrot.lane.b32.xlu0 %v3368, 28
      %v3842 = vpop.permute.xlu0 %3841
      %3843 = vrot.lane.b32.xlu0 %v3369, 28
      %v3844 = vpop.permute.xlu0 %3843
      %3845 = vrot.lane.b32.xlu0 %v3781, 28
      %v3846 = vpop.permute.xlu0 %3845
      %3847 = vrot.lane.b32.xlu0 %v3782, 28
      %v3848 = vpop.permute.xlu0 %3847
      %3881 = vst.msk [vmem:[#allocation5] sm:$0xf] %vm1906, %v3786
      %3882 = vst.msk [vmem:[#allocation5 + $0x4] sm:$0xf] %vm1906, %v3788
      %3883 = vst.msk [vmem:[#allocation5 + $0x8] sm:$0xf] %vm1906, %v3790
      %3884 = vst.msk [vmem:[#allocation5 + $0xc] sm:$0xf] %vm1906, %v3792
      %3885 = vst.msk [vmem:[#allocation5 + $0x10] sm:$0xf] %vm1906, %v3794
      %3886 = vst.msk [vmem:[#allocation5 + $0x14] sm:$0xf] %vm1906, %v3796
      %3887 = vst.msk [vmem:[#allocation5 + $0x18] sm:$0xf] %vm1906, %v3798
      %3888 = vst.msk [vmem:[#allocation5 + $0x1c] sm:$0xf] %vm1906, %v3800
      %3889 = vst.msk [vmem:[#allocation5 + $0x20] sm:$0xf] %vm1906, %v3802
      %3890 = vst.msk [vmem:[#allocation5 + $0x24] sm:$0xf] %vm1906, %v3804
      %3891 = vst.msk [vmem:[#allocation5 + $0x28] sm:$0xf] %vm1906, %v3806
      %3892 = vst.msk [vmem:[#allocation5 + $0x2c] sm:$0xf] %vm1906, %v3808
      %3893 = vst.msk [vmem:[#allocation5 + $0x30] sm:$0xf] %vm1906, %v3810
      %3894 = vst.msk [vmem:[#allocation5 + $0x34] sm:$0xf] %vm1906, %v3812
      %3895 = vst.msk [vmem:[#allocation5 + $0x38] sm:$0xf] %vm1906, %v3814
      %3896 = vst.msk [vmem:[#allocation5 + $0x3c] sm:$0xf] %vm1906, %v3816
      %3897 = vst.msk [vmem:[#allocation5 + $0x40] sm:$0xf] %vm1906, %v3818
      %3898 = vst.msk [vmem:[#allocation5 + $0x44] sm:$0xf] %vm1906, %v3820
      %3899 = vst.msk [vmem:[#allocation5 + $0x48] sm:$0xf] %vm1906, %v3822
      %3900 = vst.msk [vmem:[#allocation5 + $0x4c] sm:$0xf] %vm1906, %v3824
      %3901 = vst.msk [vmem:[#allocation5 + $0x50] sm:$0xf] %vm1906, %v3826
      %3902 = vst.msk [vmem:[#allocation5 + $0x54] sm:$0xf] %vm1906, %v3828
      %3903 = vst.msk [vmem:[#allocation5 + $0x58] sm:$0xf] %vm1906, %v3830
      %3904 = vst.msk [vmem:[#allocation5 + $0x5c] sm:$0xf] %vm1906, %v3832
      %3905 = vst.msk [vmem:[#allocation5 + $0x60] sm:$0xf] %vm1906, %v3834
      %3906 = vst.msk [vmem:[#allocation5 + $0x64] sm:$0xf] %vm1906, %v3836
      %3907 = vst.msk [vmem:[#allocation5 + $0x68] sm:$0xf] %vm1906, %v3838
      %3908 = vst.msk [vmem:[#allocation5 + $0x6c] sm:$0xf] %vm1906, %v3840
      %3909 = vst.msk [vmem:[#allocation5 + $0x70] sm:$0xf] %vm1906, %v3842
      %3910 = vst.msk [vmem:[#allocation5 + $0x74] sm:$0xf] %vm1906, %v3844
      %3911 = vst.msk [vmem:[#allocation5 + $0x78] sm:$0xf] %vm1906, %v3846
      %3912 = vst.msk [vmem:[#allocation5 + $0x7c] sm:$0xf] %vm1906, %v3848
      %v3913 = vrot.slane %v2473, 2
      %v3914 = vrot.slane %v2474, 2
      %v3915 = vsel %vm911, %v3913, %v3914
      %v3916 = vrot.slane %v2475, 2
      %v3917 = vsel %vm911, %v3914, %v3916
      %v3920 = vpack.c.bf16 %v3915, %v3915
      %v3921 = vpack.c.bf16 %v3917, %v3917
      %3924 = vrot.lane.b32.xlu0 %v3008, 32
      %v3925 = vpop.permute.xlu0 %3924
      %3926 = vrot.lane.b32.xlu0 %v3009, 32
      %v3927 = vpop.permute.xlu0 %3926
      %3928 = vrot.lane.b32.xlu0 %v3010, 32
      %v3929 = vpop.permute.xlu0 %3928
      %3930 = vrot.lane.b32.xlu0 %v3011, 32
      %v3931 = vpop.permute.xlu0 %3930
      %3932 = vrot.lane.b32.xlu0 %v3012, 32
      %v3933 = vpop.permute.xlu0 %3932
      %3934 = vrot.lane.b32.xlu0 %v3013, 32
      %v3935 = vpop.permute.xlu0 %3934
      %3936 = vrot.lane.b32.xlu0 %v3014, 32
      %v3937 = vpop.permute.xlu0 %3936
      %3938 = vrot.lane.b32.xlu0 %v3015, 32
      %v3939 = vpop.permute.xlu0 %3938
      %3940 = vrot.lane.b32.xlu0 %v3016, 32
      %v3941 = vpop.permute.xlu0 %3940
      %3942 = vrot.lane.b32.xlu0 %v3017, 32
      %v3943 = vpop.permute.xlu0 %3942
      %3944 = vrot.lane.b32.xlu0 %v3018, 32
      %v3945 = vpop.permute.xlu0 %3944
      %3946 = vrot.lane.b32.xlu0 %v3019, 32
      %v3947 = vpop.permute.xlu0 %3946
      %3948 = vrot.lane.b32.xlu0 %v3020, 32
      %v3949 = vpop.permute.xlu0 %3948
      %3950 = vrot.lane.b32.xlu0 %v3021, 32
      %v3951 = vpop.permute.xlu0 %3950
      %3952 = vrot.lane.b32.xlu0 %v3022, 32
      %v3953 = vpop.permute.xlu0 %3952
      %3954 = vrot.lane.b32.xlu0 %v3023, 32
      %v3955 = vpop.permute.xlu0 %3954
      %3956 = vrot.lane.b32.xlu0 %v3024, 32
      %v3957 = vpop.permute.xlu0 %3956
      %3958 = vrot.lane.b32.xlu0 %v3025, 32
      %v3959 = vpop.permute.xlu0 %3958
      %3960 = vrot.lane.b32.xlu0 %v3026, 32
      %v3961 = vpop.permute.xlu0 %3960
      %3962 = vrot.lane.b32.xlu0 %v3027, 32
      %v3963 = vpop.permute.xlu0 %3962
      %3964 = vrot.lane.b32.xlu0 %v3028, 32
      %v3965 = vpop.permute.xlu0 %3964
      %3966 = vrot.lane.b32.xlu0 %v3029, 32
      %v3967 = vpop.permute.xlu0 %3966
      %3968 = vrot.lane.b32.xlu0 %v3030, 32
      %v3969 = vpop.permute.xlu0 %3968
      %3970 = vrot.lane.b32.xlu0 %v3031, 32
      %v3971 = vpop.permute.xlu0 %3970
      %3972 = vrot.lane.b32.xlu0 %v3032, 32
      %v3973 = vpop.permute.xlu0 %3972
      %3974 = vrot.lane.b32.xlu0 %v3033, 32
      %v3975 = vpop.permute.xlu0 %3974
      %3976 = vrot.lane.b32.xlu0 %v3034, 32
      %v3977 = vpop.permute.xlu0 %3976
      %3978 = vrot.lane.b32.xlu0 %v3035, 32
      %v3979 = vpop.permute.xlu0 %3978
      %3980 = vrot.lane.b32.xlu0 %v3507, 32
      %v3981 = vpop.permute.xlu0 %3980
      %3982 = vrot.lane.b32.xlu0 %v3508, 32
      %v3983 = vpop.permute.xlu0 %3982
      %3984 = vrot.lane.b32.xlu0 %v3920, 32
      %v3985 = vpop.permute.xlu0 %3984
      %3986 = vrot.lane.b32.xlu0 %v3921, 32
      %v3987 = vpop.permute.xlu0 %3986
      %4020 = vst.msk [vmem:[#allocation5] sm:$0xf] %vm2046, %v3925
      %4021 = vst.msk [vmem:[#allocation5 + $0x4] sm:$0xf] %vm2046, %v3927
      %4022 = vst.msk [vmem:[#allocation5 + $0x8] sm:$0xf] %vm2046, %v3929
      %4023 = vst.msk [vmem:[#allocation5 + $0xc] sm:$0xf] %vm2046, %v3931
      %4024 = vst.msk [vmem:[#allocation5 + $0x10] sm:$0xf] %vm2046, %v3933
      %4025 = vst.msk [vmem:[#allocation5 + $0x14] sm:$0xf] %vm2046, %v3935
      %4026 = vst.msk [vmem:[#allocation5 + $0x18] sm:$0xf] %vm2046, %v3937
      %4027 = vst.msk [vmem:[#allocation5 + $0x1c] sm:$0xf] %vm2046, %v3939
      %4028 = vst.msk [vmem:[#allocation5 + $0x20] sm:$0xf] %vm2046, %v3941
      %4029 = vst.msk [vmem:[#allocation5 + $0x24] sm:$0xf] %vm2046, %v3943
      %4030 = vst.msk [vmem:[#allocation5 + $0x28] sm:$0xf] %vm2046, %v3945
      %4031 = vst.msk [vmem:[#allocation5 + $0x2c] sm:$0xf] %vm2046, %v3947
      %4032 = vst.msk [vmem:[#allocation5 + $0x30] sm:$0xf] %vm2046, %v3949
      %4033 = vst.msk [vmem:[#allocation5 + $0x34] sm:$0xf] %vm2046, %v3951
      %4034 = vst.msk [vmem:[#allocation5 + $0x38] sm:$0xf] %vm2046, %v3953
      %4035 = vst.msk [vmem:[#allocation5 + $0x3c] sm:$0xf] %vm2046, %v3955
      %4036 = vst.msk [vmem:[#allocation5 + $0x40] sm:$0xf] %vm2046, %v3957
      %4037 = vst.msk [vmem:[#allocation5 + $0x44] sm:$0xf] %vm2046, %v3959
      %4038 = vst.msk [vmem:[#allocation5 + $0x48] sm:$0xf] %vm2046, %v3961
      %4039 = vst.msk [vmem:[#allocation5 + $0x4c] sm:$0xf] %vm2046, %v3963
      %4040 = vst.msk [vmem:[#allocation5 + $0x50] sm:$0xf] %vm2046, %v3965
      %4041 = vst.msk [vmem:[#allocation5 + $0x54] sm:$0xf] %vm2046, %v3967
      %4042 = vst.msk [vmem:[#allocation5 + $0x58] sm:$0xf] %vm2046, %v3969
      %4043 = vst.msk [vmem:[#allocation5 + $0x5c] sm:$0xf] %vm2046, %v3971
      %4044 = vst.msk [vmem:[#allocation5 + $0x60] sm:$0xf] %vm2046, %v3973
      %4045 = vst.msk [vmem:[#allocation5 + $0x64] sm:$0xf] %vm2046, %v3975
      %4046 = vst.msk [vmem:[#allocation5 + $0x68] sm:$0xf] %vm2046, %v3977
      %4047 = vst.msk [vmem:[#allocation5 + $0x6c] sm:$0xf] %vm2046, %v3979
      %4048 = vst.msk [vmem:[#allocation5 + $0x70] sm:$0xf] %vm2046, %v3981
      %4049 = vst.msk [vmem:[#allocation5 + $0x74] sm:$0xf] %vm2046, %v3983
      %4050 = vst.msk [vmem:[#allocation5 + $0x78] sm:$0xf] %vm2046, %v3985
      %4051 = vst.msk [vmem:[#allocation5 + $0x7c] sm:$0xf] %vm2046, %v3987
      %4084 = vrot.lane.b32.xlu0 %v340, 36
      %v4085 = vpop.permute.xlu0 %4084
      %4086 = vrot.lane.b32.xlu0 %v341, 36
      %v4087 = vpop.permute.xlu0 %4086
      %4088 = vrot.lane.b32.xlu0 %v342, 36
      %v4089 = vpop.permute.xlu0 %4088
      %4090 = vrot.lane.b32.xlu0 %v343, 36
      %v4091 = vpop.permute.xlu0 %4090
      %4092 = vrot.lane.b32.xlu0 %v344, 36
      %v4093 = vpop.permute.xlu0 %4092
      %4094 = vrot.lane.b32.xlu0 %v345, 36
      %v4095 = vpop.permute.xlu0 %4094
      %4096 = vrot.lane.b32.xlu0 %v346, 36
      %v4097 = vpop.permute.xlu0 %4096
      %4098 = vrot.lane.b32.xlu0 %v347, 36
      %v4099 = vpop.permute.xlu0 %4098
      %4100 = vrot.lane.b32.xlu0 %v348, 36
      %v4101 = vpop.permute.xlu0 %4100
      %4102 = vrot.lane.b32.xlu0 %v349, 36
      %v4103 = vpop.permute.xlu0 %4102
      %4104 = vrot.lane.b32.xlu0 %v350, 36
      %v4105 = vpop.permute.xlu0 %4104
      %4106 = vrot.lane.b32.xlu0 %v351, 36
      %v4107 = vpop.permute.xlu0 %4106
      %4108 = vrot.lane.b32.xlu0 %v352, 36
      %v4109 = vpop.permute.xlu0 %4108
      %4110 = vrot.lane.b32.xlu0 %v353, 36
      %v4111 = vpop.permute.xlu0 %4110
      %4112 = vrot.lane.b32.xlu0 %v354, 36
      %v4113 = vpop.permute.xlu0 %4112
      %4114 = vrot.lane.b32.xlu0 %v355, 36
      %v4115 = vpop.permute.xlu0 %4114
      %4116 = vrot.lane.b32.xlu0 %v356, 36
      %v4117 = vpop.permute.xlu0 %4116
      %4118 = vrot.lane.b32.xlu0 %v357, 36
      %v4119 = vpop.permute.xlu0 %4118
      %4120 = vrot.lane.b32.xlu0 %v358, 36
      %v4121 = vpop.permute.xlu0 %4120
      %4122 = vrot.lane.b32.xlu0 %v359, 36
      %v4123 = vpop.permute.xlu0 %4122
      %4124 = vrot.lane.b32.xlu0 %v360, 36
      %v4125 = vpop.permute.xlu0 %4124
      %4126 = vrot.lane.b32.xlu0 %v361, 36
      %v4127 = vpop.permute.xlu0 %4126
      %4128 = vrot.lane.b32.xlu0 %v362, 36
      %v4129 = vpop.permute.xlu0 %4128
      %4130 = vrot.lane.b32.xlu0 %v363, 36
      %v4131 = vpop.permute.xlu0 %4130
      %4132 = vrot.lane.b32.xlu0 %v364, 36
      %v4133 = vpop.permute.xlu0 %4132
      %4134 = vrot.lane.b32.xlu0 %v365, 36
      %v4135 = vpop.permute.xlu0 %4134
      %4136 = vrot.lane.b32.xlu0 %v366, 36
      %v4137 = vpop.permute.xlu0 %4136
      %4138 = vrot.lane.b32.xlu0 %v367, 36
      %v4139 = vpop.permute.xlu0 %4138
      %4140 = vrot.lane.b32.xlu0 %v368, 36
      %v4141 = vpop.permute.xlu0 %4140
      %4142 = vrot.lane.b32.xlu0 %v369, 36
      %v4143 = vpop.permute.xlu0 %4142
      %4144 = vrot.lane.b32.xlu0 %v370, 36
      %v4145 = vpop.permute.xlu0 %4144
      %4146 = vrot.lane.b32.xlu0 %v371, 36
      %v4147 = vpop.permute.xlu0 %4146
      %vm4180 = vcmask 322848
      %4181 = vst.msk [vmem:[#allocation5] sm:$0xf] %vm4180, %v4085
      %4182 = vst.msk [vmem:[#allocation5 + $0x4] sm:$0xf] %vm4180, %v4087
      %4183 = vst.msk [vmem:[#allocation5 + $0x8] sm:$0xf] %vm4180, %v4089
      %4184 = vst.msk [vmem:[#allocation5 + $0xc] sm:$0xf] %vm4180, %v4091
      %4185 = vst.msk [vmem:[#allocation5 + $0x10] sm:$0xf] %vm4180, %v4093
      %4186 = vst.msk [vmem:[#allocation5 + $0x14] sm:$0xf] %vm4180, %v4095
      %4187 = vst.msk [vmem:[#allocation5 + $0x18] sm:$0xf] %vm4180, %v4097
      %4188 = vst.msk [vmem:[#allocation5 + $0x1c] sm:$0xf] %vm4180, %v4099
      %4189 = vst.msk [vmem:[#allocation5 + $0x20] sm:$0xf] %vm4180, %v4101
      %4190 = vst.msk [vmem:[#allocation5 + $0x24] sm:$0xf] %vm4180, %v4103
      %4191 = vst.msk [vmem:[#allocation5 + $0x28] sm:$0xf] %vm4180, %v4105
      %4192 = vst.msk [vmem:[#allocation5 + $0x2c] sm:$0xf] %vm4180, %v4107
      %4193 = vst.msk [vmem:[#allocation5 + $0x30] sm:$0xf] %vm4180, %v4109
      %4194 = vst.msk [vmem:[#allocation5 + $0x34] sm:$0xf] %vm4180, %v4111
      %4195 = vst.msk [vmem:[#allocation5 + $0x38] sm:$0xf] %vm4180, %v4113
      %4196 = vst.msk [vmem:[#allocation5 + $0x3c] sm:$0xf] %vm4180, %v4115
      %4197 = vst.msk [vmem:[#allocation5 + $0x40] sm:$0xf] %vm4180, %v4117
      %4198 = vst.msk [vmem:[#allocation5 + $0x44] sm:$0xf] %vm4180, %v4119
      %4199 = vst.msk [vmem:[#allocation5 + $0x48] sm:$0xf] %vm4180, %v4121
      %4200 = vst.msk [vmem:[#allocation5 + $0x4c] sm:$0xf] %vm4180, %v4123
      %4201 = vst.msk [vmem:[#allocation5 + $0x50] sm:$0xf] %vm4180, %v4125
      %4202 = vst.msk [vmem:[#allocation5 + $0x54] sm:$0xf] %vm4180, %v4127
      %4203 = vst.msk [vmem:[#allocation5 + $0x58] sm:$0xf] %vm4180, %v4129
      %4204 = vst.msk [vmem:[#allocation5 + $0x5c] sm:$0xf] %vm4180, %v4131
      %4205 = vst.msk [vmem:[#allocation5 + $0x60] sm:$0xf] %vm4180, %v4133
      %4206 = vst.msk [vmem:[#allocation5 + $0x64] sm:$0xf] %vm4180, %v4135
      %4207 = vst.msk [vmem:[#allocation5 + $0x68] sm:$0xf] %vm4180, %v4137
      %4208 = vst.msk [vmem:[#allocation5 + $0x6c] sm:$0xf] %vm4180, %v4139
      %4209 = vst.msk [vmem:[#allocation5 + $0x70] sm:$0xf] %vm4180, %v4141
      %4210 = vst.msk [vmem:[#allocation5 + $0x74] sm:$0xf] %vm4180, %v4143
      %4211 = vst.msk [vmem:[#allocation5 + $0x78] sm:$0xf] %vm4180, %v4145
      %4212 = vst.msk [vmem:[#allocation5 + $0x7c] sm:$0xf] %vm4180, %v4147
      %v4213 = vld [vmem:[%s2] sm:$0x3]
      %v4214 = vld [vmem:[#allocation5] sm:$0xf]
      %v4215 = vld [vmem:[#allocation5 + $0x4] sm:$0xf]
      %v4216 = vld [vmem:[#allocation5 + $0x8] sm:$0xf]
      %v4217 = vld [vmem:[#allocation5 + $0xc] sm:$0xf]
      %v4218 = vld [vmem:[#allocation5 + $0x10] sm:$0xf]
      %v4219 = vld [vmem:[#allocation5 + $0x14] sm:$0xf]
      %v4220 = vld [vmem:[#allocation5 + $0x18] sm:$0xf]
      %v4221 = vld [vmem:[#allocation5 + $0x1c] sm:$0xf]
      %v4222 = vld [vmem:[#allocation5 + $0x20] sm:$0xf]
      %v4223 = vld [vmem:[#allocation5 + $0x24] sm:$0xf]
      %v4224 = vld [vmem:[#allocation5 + $0x28] sm:$0xf]
      %v4225 = vld [vmem:[#allocation5 + $0x2c] sm:$0xf]
      %v4226 = vld [vmem:[#allocation5 + $0x30] sm:$0xf]
      %v4227 = vld [vmem:[#allocation5 + $0x34] sm:$0xf]
      %v4228 = vld [vmem:[#allocation5 + $0x38] sm:$0xf]
      %v4229 = vld [vmem:[#allocation5 + $0x3c] sm:$0xf]
      %v4230 = vld [vmem:[#allocation5 + $0x40] sm:$0xf]
      %v4231 = vld [vmem:[#allocation5 + $0x44] sm:$0xf]
      %v4232 = vld [vmem:[#allocation5 + $0x48] sm:$0xf]
      %v4233 = vld [vmem:[#allocation5 + $0x4c] sm:$0xf]
      %v4234 = vld [vmem:[#allocation5 + $0x50] sm:$0xf]
      %v4235 = vld [vmem:[#allocation5 + $0x54] sm:$0xf]
      %v4236 = vld [vmem:[#allocation5 + $0x58] sm:$0xf]
      %v4237 = vld [vmem:[#allocation5 + $0x5c] sm:$0xf]
      %v4238 = vld [vmem:[#allocation5 + $0x60] sm:$0xf]
      %v4239 = vld [vmem:[#allocation5 + $0x64] sm:$0xf]
      %v4240 = vld [vmem:[#allocation5 + $0x68] sm:$0xf]
      %v4241 = vld [vmem:[#allocation5 + $0x6c] sm:$0xf]
      %v4242 = vld [vmem:[#allocation5 + $0x70] sm:$0xf]
      %v4243 = vld [vmem:[#allocation5 + $0x74] sm:$0xf]
      %v4244 = vld [vmem:[#allocation5 + $0x78] sm:$0xf]
      %v4245 = vld [vmem:[#allocation5 + $0x7c] sm:$0xf]
      %v4246 = vld [vmem:[%s4] sm:$0xf]
      %4248 = vset.pattern.permute.xlu0 0
      %4249 = vperm.xlu0 %4248, %v4246
      %v4250 = vpop.permute.xlu0 %4249
      %v4284 = vunpack.c.l.b16 %v4214
      %v4285 = vunpack.c.l.b16 %v4215
      %v4286 = vunpack.c.l.b16 %v4216
      %v4287 = vunpack.c.l.b16 %v4217
      %v4288 = vunpack.c.l.b16 %v4218
      %v4289 = vunpack.c.l.b16 %v4219
      %v4290 = vunpack.c.l.b16 %v4220
      %v4291 = vunpack.c.l.b16 %v4221
      %v4292 = vunpack.c.l.b16 %v4222
      %v4293 = vunpack.c.l.b16 %v4223
      %v4294 = vunpack.c.l.b16 %v4224
      %v4295 = vunpack.c.l.b16 %v4225
      %v4296 = vunpack.c.l.b16 %v4226
      %v4297 = vunpack.c.l.b16 %v4227
      %v4298 = vunpack.c.l.b16 %v4228
      %v4299 = vunpack.c.l.b16 %v4229
      %v4300 = vunpack.c.l.b16 %v4230
      %v4301 = vunpack.c.l.b16 %v4231
      %v4302 = vunpack.c.l.b16 %v4232
      %v4303 = vunpack.c.l.b16 %v4233
      %v4304 = vunpack.c.l.b16 %v4234
      %v4305 = vunpack.c.l.b16 %v4235
      %v4306 = vunpack.c.l.b16 %v4236
      %v4307 = vunpack.c.l.b16 %v4237
      %v4308 = vunpack.c.l.b16 %v4238
      %v4309 = vunpack.c.l.b16 %v4239
      %v4310 = vunpack.c.l.b16 %v4240
      %v4311 = vunpack.c.l.b16 %v4241
      %v4312 = vunpack.c.l.b16 %v4242
      %v4313 = vunpack.c.l.b16 %v4243
      %v4314 = vunpack.c.l.b16 %v4244
      %v4315 = vunpack.c.l.b16 %v4245
      %v4316 = vpack.c.b16 %v4285, %v4284
      %v4317 = vpack.c.b16 %v4287, %v4286
      %v4318 = vpack.c.b16 %v4289, %v4288
      %v4319 = vpack.c.b16 %v4291, %v4290
      %v4320 = vpack.c.b16 %v4293, %v4292
      %v4321 = vpack.c.b16 %v4295, %v4294
      %v4322 = vpack.c.b16 %v4297, %v4296
      %v4323 = vpack.c.b16 %v4299, %v4298
      %v4324 = vpack.c.b16 %v4301, %v4300
      %v4325 = vpack.c.b16 %v4303, %v4302
      %v4326 = vpack.c.b16 %v4305, %v4304
      %v4327 = vpack.c.b16 %v4307, %v4306
      %v4328 = vpack.c.b16 %v4309, %v4308
      %v4329 = vpack.c.b16 %v4311, %v4310
      %v4330 = vpack.c.b16 %v4313, %v4312
      %v4331 = vpack.c.b16 %v4315, %v4314
      %vm4332 = vcmask 326656
      %v4334 = vsel %vm4332, %v4213, 0
      %v4337 = vsel %vm4332, %v4316, 0
      %v4340 = vsel %vm4332, %v4317, 0
      %v4343 = vsel %vm4332, %v4318, 0
      %v4346 = vsel %vm4332, %v4319, 0
      %v4349 = vsel %vm4332, %v4320, 0
      %v4352 = vsel %vm4332, %v4321, 0
      %v4355 = vsel %vm4332, %v4322, 0
      %v4358 = vsel %vm4332, %v4323, 0
      %v4361 = vsel %vm4332, %v4324, 0
      %v4364 = vsel %vm4332, %v4325, 0
      %v4367 = vsel %vm4332, %v4326, 0
      %v4370 = vsel %vm4332, %v4327, 0
      %v4373 = vsel %vm4332, %v4328, 0
      %v4376 = vsel %vm4332, %v4329, 0
      %v4379 = vsel %vm4332, %v4330, 0
      %v4382 = vsel %vm4332, %v4331, 0
      %4384 = vmatpush.bf16.xpose.msra.mxu0 %v4358
      %4385 = vmatpush.bf16.xpose.msra.mxu0 %v4355
      %4386 = vmatpush.bf16.xpose.msra.mxu0 %v4352
      %4387 = vmatpush.bf16.xpose.msra.mxu0 %v4349
      %4388 = vmatpush.bf16.xpose.msra.mxu0 %v4346
      %4389 = vmatpush.bf16.xpose.msra.mxu0 %v4343
      %4390 = vmatpush.bf16.xpose.msra.mxu0 %v4340
      %4391 = vmatpush.bf16.xpose.msra.mxu0 %v4337
      %4392 = vmatmul.bf16.gmra.mxu0 %v4334
      %v4393 = vpop.f32.mrf.mxu0
      %v4394 = vadd.f32 %v4250, %v4393
      %v4395 = vpop.f32.mrf.mxu0
      %4396 = vdwg.mxu0
      %4397 = vmatpush.bf16.xpose.msra.mxu0 %v4382
      %4398 = vmatpush.bf16.xpose.msra.mxu0 %v4379
      %4399 = vmatpush.bf16.xpose.msra.mxu0 %v4376
      %4400 = vmatpush.bf16.xpose.msra.mxu0 %v4373
      %4401 = vmatpush.bf16.xpose.msra.mxu0 %v4370
      %4402 = vmatpush.bf16.xpose.msra.mxu0 %v4367
      %4403 = vmatpush.bf16.xpose.msra.mxu0 %v4364
      %4404 = vmatpush.bf16.xpose.msra.mxu0 %v4361
      %4405 = vmatmul.bf16.gmra.mxu0 %v4334
      %v4406 = vpop.f32.mrf.mxu0
      %v4407 = vadd.f32 %v4250, %v4406
      %v4408 = vpop.f32.mrf.mxu0
      %4409 = vdwg.mxu0
      %v4410 = vmax.f32 %v4394, 0.0
      %v4411 = vmax.f32 %v4407, 0.0
      %v4414 = vrot.slane %v4411, 4
      %vm4415 = vcmask 1043456
      %v4416 = vsel %vm4415, %v4410, %v4414
      %4418 = vst [vmem:[%s224] sm:$0xff] %v4416
      %p4419 = scmp.lt.s32.totalorder %s16, 1
      %s4420 = scalar_select %p4419, %s16, 1
      %s4421 = smul.addr %s4420, 2
      %s4422 = smul.addr %s4421, 4
      %s4423 = scalar_lea.vmem %s5, %s4422
      // Predicated region
      $region45: #{basic_block_forward.1} parent=39 // pred_check
        %p4424 = pneg %p144
      $region46: #{basic_block_forward.1} parent=39 // pred_check_branch
        %4426 = sbr.rel (%p4424) target = $region48
      $region47: #{basic_block_forward.1} parent=39 // pred_region
        _
      $region48: #{basic_block_forward.1} parent=39 // pred_fallthru
        _
    $region40: #{basic_block_forward.1} parent=5 // pred_fallthru
      _
    %p4427 = scmp.le.s32.totalorder 2, %s11
    // Predicated region
    $region49: #{basic_block_forward.1} parent=5 // pred_check
      %p4428 = pneg %p4427
    $region50: #{basic_block_forward.1} parent=5 // pred_check_branch
      %4430 = sbr.rel (%p4428) target = $region52
    $region51: #{basic_block_forward.1} parent=5 // pred_region
      %s4431 = ssub.s32 %s11, 2
      // Predicated region
      $region53: #{basic_block_forward.1} parent=51 // pred_check
        %p4432 = pneg %p150
      $region54: #{basic_block_forward.1} parent=51 // pred_check_branch
        %4434 = sbr.rel (%p4432) target = $region56
      $region55: #{basic_block_forward.1} parent=51 // pred_region
        %p4435 = scmp.lt.s32.totalorder %s17, 1
        %s4436 = scalar_select %p4435, %s17, 1
        %s4437 = smul.addr %s4436, 2
        %s4438 = smul.addr %s4437, 4
        %s4439 = scalar_lea.vmem %s5, %s4438
      $region56: #{basic_block_forward.1} parent=51 // pred_fallthru
        _
    $region52: #{basic_block_forward.1} parent=5 // pred_fallthru
      _
  $region6: #{basic_block_forward.1} parent=0 // loop_footer
    %s15 = sadd.s32 1, %s11
  $region7: #{basic_block_forward.1} parent=0 // loop_footer_branch
    %10 = sbr.rel target = $region3
  $region8: #{basic_block_forward.1} parent=0 // loop_exit
    _

</llo_original>
